<compile_context>
chip_gen: v6e
topology: v6e:2x2x1
jax: 0.10.0
libtpu: 0.0.40
codegen_flags: <defaults>
</compile_context>

<pallas_src>
import math

import jax
import jax.numpy as jnp
from jax.experimental import pallas as pl
from jax.experimental.pallas import tpu as pltpu

BN_EPS = 1e-5
BN_SCALE = 1.0 / math.sqrt(1.0 + BN_EPS)   # eval-mode BatchNorm1d, default stats

ROW_TILE = 512                       # (512, 2048) f32 v-tile = 4 MiB, dbl-buffered 8 MiB
VMEM_LIMIT_BYTES = 48 * 1024 * 1024  # fits v7x (64 MiB phys) and v5e/v6e (128 MiB)


# ----------------------------------------------------------------------------
# Fused kernel: one row tile, all three branches (v / a / neg_a)
# ----------------------------------------------------------------------------
def _fused_kernel(v_ref, a_ref, n_ref,
                  vw1_ref, vb1_ref, vw2_ref, vb2_ref,
                  aw1_ref, ab1_ref, aw2_ref, ab2_ref,
                  dw_ref, db_ref,
                  vo_ref, ao_ref, no_ref):
    def branch(x_ref, w1_ref, b1_ref, w2_ref, b2_ref):
        # x_ref: (TM, 2*Din) -- [frame 2h feats | frame 2h+1 feats] per row.
        # Frame-pair sum; the 0.5 (and all BN / feature-pool scales) are folded
        # into w1/b1 at parameter-prep time.
        d = x_ref.shape[-1] // 2
        xs = x_ref[:, :d] + x_ref[:, d:]                       # lane-aligned VPU add
        h1 = jnp.maximum(
            jnp.dot(xs, w1_ref[...], preferred_element_type=jnp.float32)
            + b1_ref[...], 0.0)
        h2 = jnp.maximum(
            jnp.dot(h1, w2_ref[...], preferred_element_type=jnp.float32)
            + b2_ref[...], 0.0)
        return (jnp.dot(h2, dw_ref[...], preferred_element_type=jnp.float32)
                + db_ref[...])

    vo_ref[...] = branch(v_ref, vw1_ref, vb1_ref, vw2_ref, vb2_ref).astype(vo_ref.dtype)
    ao_ref[...] = branch(a_ref, aw1_ref, ab1_ref, aw2_ref, ab2_ref).astype(ao_ref.dtype)
    no_ref[...] = branch(n_ref, aw1_ref, ab1_ref, aw2_ref, ab2_ref).astype(no_ref.dtype)


# ----------------------------------------------------------------------------
# Parameter init (mirrors init_params(): xavier_uniform weights, zero biases)
# ----------------------------------------------------------------------------
def xavier_uniform(key, fan_in, fan_out):
    bound = math.sqrt(6.0 / (fan_in + fan_out))
    # stored as (in, out) so the kernel computes x @ W  (== torch x @ W.T)
    return jax.random.uniform(key, (fan_in, fan_out), jnp.float32, -bound, bound)


def init_params(key):
    ks = jax.random.split(key, 5)
    return dict(
        vw1=xavier_uniform(ks[0], 512, 96), vb1=jnp.zeros((1, 96), jnp.float32),
        vw2=xavier_uniform(ks[1], 96, 32),  vb2=jnp.zeros((1, 32), jnp.float32),
        aw1=xavier_uniform(ks[2], 128, 96), ab1=jnp.zeros((1, 96), jnp.float32),
        aw2=xavier_uniform(ks[3], 96, 32),  ab2=jnp.zeros((1, 32), jnp.float32),
        dw=xavier_uniform(ks[4], 32, 1),    db=jnp.zeros((1, 1), jnp.float32),
    )


def fold_params(p):
    """Fold BN scales, the frame-pair 0.5 and the v-branch feature pooling
    (AdaptiveAvgPool1d 1024->512, exact pair mean) into the Linear params."""
    s = BN_SCALE
    return dict(
        # v branch acts on the raw 1024-feature frame-sum: repeat each 512-row
        # to 2 rows (adjacent-feature pair) and fold 0.25 (= 0.5 frame-avg *
        # 0.5 feature-avg) plus both BN scales.
        vw1=jnp.repeat(p["vw1"], 2, axis=0) * (0.25 * s * s),
        vb1=p["vb1"] * s,
        vw2=p["vw2"] * s, vb2=p["vb2"] * s,
        # a branch: 0.5 frame-avg plus both BN scales.
        aw1=p["aw1"] * (0.5 * s * s), ab1=p["ab1"] * s,
        aw2=p["aw2"] * s, ab2=p["ab2"] * s,
        dw=p["dw"], db=p["db"],
    )


# ----------------------------------------------------------------------------
# Forward: flatten to lane-aligned (M, 2*Din) rows, one fused pallas_call
# ----------------------------------------------------------------------------
def image_based_fc_forward(vfeat, afeat, neg_afeat, params):
    B, F, DV = vfeat.shape
    DA = afeat.shape[-1]
    assert F % 2 == 0 and DV % 512 == 0 and DA == 128
    half = F // 2
    M = B * half

    fp = fold_params(params)

    # zero-copy views: row m = (batch b, half-frame h) = [frame 2h | frame 2h+1]
    v2 = vfeat.reshape(M, 2 * DV)
    a2 = afeat.reshape(M, 2 * DA)
    n2 = neg_afeat.reshape(M, 2 * DA)

    tm = M if M <= ROW_TILE else ROW_TILE      # full dim if small, else mult-of-8 tile
    grid = (pl.cdiv(M, tm),)

    def row_spec(width):
        return pl.BlockSpec((tm, width), lambda i: (i, 0))

    def full_spec(arr):
        # whole array, constant block index -> stays resident in VMEM
        return pl.BlockSpec(arr.shape, lambda i: (0, 0))

    weights = (fp["vw1"], fp["vb1"], fp["vw2"], fp["vb2"],
               fp["aw1"], fp["ab1"], fp["aw2"], fp["ab2"],
               fp["dw"], fp["db"])

    out_shape = tuple(jax.ShapeDtypeStruct((M, 1), jnp.float32) for _ in range(3))
    out_specs = tuple(pl.BlockSpec((tm, 1), lambda i: (i, 0)) for _ in range(3))

    vo, ao, no = pl.pallas_call(
        _fused_kernel,
        grid=grid,
        in_specs=[row_spec(2 * DV), row_spec(2 * DA), row_spec(2 * DA)]
                 + [full_spec(w) for w in weights],
        out_specs=out_specs,
        out_shape=out_shape,
        compiler_params=pltpu.CompilerParams(
            dimension_semantics=("parallel",),
            vmem_limit_bytes=VMEM_LIMIT_BYTES),
    )(v2, a2, n2, *weights)

    # torch: (B, 60, 1).view(-1, 60)
    return vo.reshape(B, half), ao.reshape(B, half), no.reshape(B, half)


# ----------------------------------------------------------------------------
# Pure-JAX reference (unfolded eval-mode PyTorch semantics)
# ----------------------------------------------------------------------------
def reference_forward(vfeat, afeat, neg_afeat, p):
    s = BN_SCALE

    def pool_frames(x):
        B, F, D = x.shape
        return x.reshape(B, F // 2, 2, D).mean(axis=2)

    def branch(x, w1, b1, w2, b2):
        x = x * s
        h1 = jnp.maximum((x @ w1 + b1) * s, 0.0)
        h2 = jnp.maximum((h1 @ w2 + b2) * s, 0.0)
        return h2 @ p["dw"] + p["db"]

    v = pool_frames(vfeat)
    B, H, DV = v.shape
    v = v.reshape(B, H, 512, DV // 512).mean(axis=-1)
    a = pool_frames(afeat)
    n = pool_frames(neg_afeat)

    vo = branch(v, p["vw1"], p["vb1"], p["vw2"], p["vb2"]).reshape(-1, H)
    ao = branch(a, p["aw1"], p["ab1"], p["aw2"], p["ab2"]).reshape(-1, H)
    no = branch(n, p["aw1"], p["ab1"], p["aw2"], p["ab2"]).reshape(-1, H)
    return vo, ao, no


if __name__ == "__main__":
    B, F, DV, DA = 2, 120, 1024, 128   # framenum=120 is required by the module
    key = jax.random.PRNGKey(0)
    kv, ka, kn, kw = jax.random.split(key, 4)

    vfeat = jax.random.normal(kv, (B, F, DV), jnp.float32)
    afeat = jax.random.normal(ka, (B, F, DA), jnp.float32)
    neg_afeat = jax.random.normal(kn, (B, F, DA), jnp.float32)

    params = init_params(kw)

    v_out, a_out, n_out = image_based_fc_forward(vfeat, afeat, neg_afeat, params)
    jax.block_until_ready((v_out, a_out, n_out))

    rv, ra, rn = reference_forward(vfeat, afeat, neg_afeat, params)
    assert v_out.shape == (B, 60) and a_out.shape == (B, 60) and n_out.shape == (B, 60)
    assert jnp.allclose(v_out, rv, atol=1e-4, rtol=1e-4)
    assert jnp.allclose(a_out, ra, atol=1e-4, rtol=1e-4)
    assert jnp.allclose(n_out, rn, atol=1e-4, rtol=1e-4)

    print("KERNEL_OK")
</pallas_src>

<mosaic_0001>
module attributes {stable_mosaic.version = 11 : i64} {
  func.func @_fused_kernel(%arg0: i32, %arg1: memref<120x2048xf32, #tpu.memory_space<vmem>>, %arg2: memref<120x256xf32, #tpu.memory_space<vmem>>, %arg3: memref<120x256xf32, #tpu.memory_space<vmem>>, %arg4: memref<1024x96xf32, #tpu.memory_space<vmem>>, %arg5: memref<1x96xf32, #tpu.memory_space<vmem>>, %arg6: memref<96x32xf32, #tpu.memory_space<vmem>>, %arg7: memref<1x32xf32, #tpu.memory_space<vmem>>, %arg8: memref<128x96xf32, #tpu.memory_space<vmem>>, %arg9: memref<1x96xf32, #tpu.memory_space<vmem>>, %arg10: memref<96x32xf32, #tpu.memory_space<vmem>>, %arg11: memref<1x32xf32, #tpu.memory_space<vmem>>, %arg12: memref<32x1xf32, #tpu.memory_space<vmem>>, %arg13: memref<1x1xf32, #tpu.memory_space<vmem>>, %arg14: memref<120x1xf32, #tpu.memory_space<vmem>>, %arg15: memref<120x1xf32, #tpu.memory_space<vmem>>, %arg16: memref<120x1xf32, #tpu.memory_space<vmem>>) attributes {dimension_semantics = [#tpu.dimension_semantics<parallel>], iteration_bounds = array<i64: 1>, scalar_prefetch = 0 : i64, scratch_operands = 0 : i64, tpu.core_type = #tpu.core_type<tc>, window_params = [{transform_indices = @transform_0, window_bounds = array<i64: 120, 2048>}, {transform_indices = @transform_1, window_bounds = array<i64: 120, 256>}, {transform_indices = @transform_2, window_bounds = array<i64: 120, 256>}, {pipeline_mode = #tpu.pipeline_mode<synchronous>, transform_indices = @transform_3, window_bounds = array<i64: 1024, 96>}, {pipeline_mode = #tpu.pipeline_mode<synchronous>, transform_indices = @transform_4, window_bounds = array<i64: 1, 96>}, {pipeline_mode = #tpu.pipeline_mode<synchronous>, transform_indices = @transform_5, window_bounds = array<i64: 96, 32>}, {pipeline_mode = #tpu.pipeline_mode<synchronous>, transform_indices = @transform_6, window_bounds = array<i64: 1, 32>}, {pipeline_mode = #tpu.pipeline_mode<synchronous>, transform_indices = @transform_7, window_bounds = array<i64: 128, 96>}, {pipeline_mode = #tpu.pipeline_mode<synchronous>, transform_indices = @transform_8, window_bounds = array<i64: 1, 96>}, {pipeline_mode = #tpu.pipeline_mode<synchronous>, transform_indices = @transform_9, window_bounds = array<i64: 96, 32>}, {pipeline_mode = #tpu.pipeline_mode<synchronous>, transform_indices = @transform_10, window_bounds = array<i64: 1, 32>}, {pipeline_mode = #tpu.pipeline_mode<synchronous>, transform_indices = @transform_11, window_bounds = array<i64: 32, 1>}, {pipeline_mode = #tpu.pipeline_mode<synchronous>, transform_indices = @transform_12, window_bounds = array<i64: 1, 1>}, {transform_indices = @transform_13, window_bounds = array<i64: 120, 1>}, {transform_indices = @transform_14, window_bounds = array<i64: 120, 1>}, {transform_indices = @transform_15, window_bounds = array<i64: 120, 1>}]} {
    %c0 = arith.constant 0 : index
    %c0_0 = arith.constant 0 : index
    %0 = vector.load %arg1[%c0, %c0_0] : memref<120x2048xf32, #tpu.memory_space<vmem>>, vector<120x1024xf32>
    %c0_1 = arith.constant 0 : index
    %c1024 = arith.constant 1024 : index
    %1 = vector.load %arg1[%c0_1, %c1024] : memref<120x2048xf32, #tpu.memory_space<vmem>>, vector<120x1024xf32>
    %2 = arith.addf %0, %1 : vector<120x1024xf32>
    %c0_2 = arith.constant 0 : index
    %c0_3 = arith.constant 0 : index
    %3 = vector.load %arg4[%c0_2, %c0_3] : memref<1024x96xf32, #tpu.memory_space<vmem>>, vector<1024x96xf32>
    %cst = arith.constant dense<0.000000e+00> : vector<120x96xf32>
    %4 = tpu.matmul %2, %3, %cst {dimension_numbers = #tpu.dot_dimension_numbers<[1], [0], [0], [1], [0, 0, 1, 1], [], []>} : vector<120x1024xf32>, vector<1024x96xf32>, vector<120x96xf32> -> vector<120x96xf32>
    %c0_4 = arith.constant 0 : index
    %c0_5 = arith.constant 0 : index
    %5 = vector.load %arg5[%c0_4, %c0_5] : memref<1x96xf32, #tpu.memory_space<vmem>>, vector<1x96xf32>
    %6 = vector.broadcast %5 : vector<1x96xf32> to vector<120x96xf32>
    %7 = arith.addf %4, %6 : vector<120x96xf32>
    %cst_6 = arith.constant 0.000000e+00 : f32
    %8 = vector.broadcast %cst_6 : f32 to vector<120x96xf32>
    %9 = arith.maximumf %7, %8 : vector<120x96xf32>
    %c0_7 = arith.constant 0 : index
    %c0_8 = arith.constant 0 : index
    %10 = vector.load %arg6[%c0_7, %c0_8] : memref<96x32xf32, #tpu.memory_space<vmem>>, vector<96x32xf32>
    %cst_9 = arith.constant dense<0.000000e+00> : vector<120x32xf32>
    %11 = tpu.matmul %9, %10, %cst_9 {dimension_numbers = #tpu.dot_dimension_numbers<[1], [0], [0], [1], [0, 0, 1, 1], [], []>} : vector<120x96xf32>, vector<96x32xf32>, vector<120x32xf32> -> vector<120x32xf32>
    %c0_10 = arith.constant 0 : index
    %c0_11 = arith.constant 0 : index
    %12 = vector.load %arg7[%c0_10, %c0_11] : memref<1x32xf32, #tpu.memory_space<vmem>>, vector<1x32xf32>
    %13 = vector.broadcast %12 : vector<1x32xf32> to vector<120x32xf32>
    %14 = arith.addf %11, %13 : vector<120x32xf32>
    %cst_12 = arith.constant 0.000000e+00 : f32
    %15 = vector.broadcast %cst_12 : f32 to vector<120x32xf32>
    %16 = arith.maximumf %14, %15 : vector<120x32xf32>
    %c0_13 = arith.constant 0 : index
    %c0_14 = arith.constant 0 : index
    %17 = vector.load %arg12[%c0_13, %c0_14] : memref<32x1xf32, #tpu.memory_space<vmem>>, vector<32x1xf32>
    %cst_15 = arith.constant dense<0.000000e+00> : vector<120x1xf32>
    %18 = tpu.matmul %16, %17, %cst_15 {dimension_numbers = #tpu.dot_dimension_numbers<[1], [0], [0], [1], [0, 0, 1, 1], [], []>} : vector<120x32xf32>, vector<32x1xf32>, vector<120x1xf32> -> vector<120x1xf32>
    %c0_16 = arith.constant 0 : index
    %c0_17 = arith.constant 0 : index
    %19 = vector.load %arg13[%c0_16, %c0_17] : memref<1x1xf32, #tpu.memory_space<vmem>>, vector<1x1xf32>
    %20 = vector.broadcast %19 : vector<1x1xf32> to vector<120x1xf32>
    %21 = arith.addf %18, %20 : vector<120x1xf32>
    %c0_18 = arith.constant 0 : index
    %c0_19 = arith.constant 0 : index
    %22 = vector.load %arg14[%c0_18, %c0_19] : memref<120x1xf32, #tpu.memory_space<vmem>>, vector<120x1xf32>
    tpu.vector_store %arg14[%c0_18, %c0_19], %21 {strides = array<i32>} : memref<120x1xf32, #tpu.memory_space<vmem>>, vector<120x1xf32>,
    %c0_20 = arith.constant 0 : index
    %c0_21 = arith.constant 0 : index
    %23 = vector.load %arg2[%c0_20, %c0_21] : memref<120x256xf32, #tpu.memory_space<vmem>>, vector<120x128xf32>
    %c0_22 = arith.constant 0 : index
    %c128 = arith.constant 128 : index
    %24 = vector.load %arg2[%c0_22, %c128] : memref<120x256xf32, #tpu.memory_space<vmem>>, vector<120x128xf32>
    %25 = arith.addf %23, %24 : vector<120x128xf32>
    %c0_23 = arith.constant 0 : index
    %c0_24 = arith.constant 0 : index
    %26 = vector.load %arg8[%c0_23, %c0_24] : memref<128x96xf32, #tpu.memory_space<vmem>>, vector<128x96xf32>
    %cst_25 = arith.constant dense<0.000000e+00> : vector<120x96xf32>
    %27 = tpu.matmul %25, %26, %cst_25 {dimension_numbers = #tpu.dot_dimension_numbers<[1], [0], [0], [1], [0, 0, 1, 1], [], []>} : vector<120x128xf32>, vector<128x96xf32>, vector<120x96xf32> -> vector<120x96xf32>
    %c0_26 = arith.constant 0 : index
    %c0_27 = arith.constant 0 : index
    %28 = vector.load %arg9[%c0_26, %c0_27] : memref<1x96xf32, #tpu.memory_space<vmem>>, vector<1x96xf32>
    %29 = vector.broadcast %28 : vector<1x96xf32> to vector<120x96xf32>
    %30 = arith.addf %27, %29 : vector<120x96xf32>
    %cst_28 = arith.constant 0.000000e+00 : f32
    %31 = vector.broadcast %cst_28 : f32 to vector<120x96xf32>
    %32 = arith.maximumf %30, %31 : vector<120x96xf32>
    %c0_29 = arith.constant 0 : index
    %c0_30 = arith.constant 0 : index
    %33 = vector.load %arg10[%c0_29, %c0_30] : memref<96x32xf32, #tpu.memory_space<vmem>>, vector<96x32xf32>
    %cst_31 = arith.constant dense<0.000000e+00> : vector<120x32xf32>
    %34 = tpu.matmul %32, %33, %cst_31 {dimension_numbers = #tpu.dot_dimension_numbers<[1], [0], [0], [1], [0, 0, 1, 1], [], []>} : vector<120x96xf32>, vector<96x32xf32>, vector<120x32xf32> -> vector<120x32xf32>
    %c0_32 = arith.constant 0 : index
    %c0_33 = arith.constant 0 : index
    %35 = vector.load %arg11[%c0_32, %c0_33] : memref<1x32xf32, #tpu.memory_space<vmem>>, vector<1x32xf32>
    %36 = vector.broadcast %35 : vector<1x32xf32> to vector<120x32xf32>
    %37 = arith.addf %34, %36 : vector<120x32xf32>
    %cst_34 = arith.constant 0.000000e+00 : f32
    %38 = vector.broadcast %cst_34 : f32 to vector<120x32xf32>
    %39 = arith.maximumf %37, %38 : vector<120x32xf32>
    %c0_35 = arith.constant 0 : index
    %c0_36 = arith.constant 0 : index
    %40 = vector.load %arg12[%c0_35, %c0_36] : memref<32x1xf32, #tpu.memory_space<vmem>>, vector<32x1xf32>
    %cst_37 = arith.constant dense<0.000000e+00> : vector<120x1xf32>
    %41 = tpu.matmul %39, %40, %cst_37 {dimension_numbers = #tpu.dot_dimension_numbers<[1], [0], [0], [1], [0, 0, 1, 1], [], []>} : vector<120x32xf32>, vector<32x1xf32>, vector<120x1xf32> -> vector<120x1xf32>
    %c0_38 = arith.constant 0 : index
    %c0_39 = arith.constant 0 : index
    %42 = vector.load %arg13[%c0_38, %c0_39] : memref<1x1xf32, #tpu.memory_space<vmem>>, vector<1x1xf32>
    %43 = vector.broadcast %42 : vector<1x1xf32> to vector<120x1xf32>
    %44 = arith.addf %41, %43 : vector<120x1xf32>
    %c0_40 = arith.constant 0 : index
    %c0_41 = arith.constant 0 : index
    %45 = vector.load %arg15[%c0_40, %c0_41] : memref<120x1xf32, #tpu.memory_space<vmem>>, vector<120x1xf32>
    tpu.vector_store %arg15[%c0_40, %c0_41], %44 {strides = array<i32>} : memref<120x1xf32, #tpu.memory_space<vmem>>, vector<120x1xf32>,
    %c0_42 = arith.constant 0 : index
    %c0_43 = arith.constant 0 : index
    %46 = vector.load %arg3[%c0_42, %c0_43] : memref<120x256xf32, #tpu.memory_space<vmem>>, vector<120x128xf32>
    %c0_44 = arith.constant 0 : index
    %c128_45 = arith.constant 128 : index
    %47 = vector.load %arg3[%c0_44, %c128_45] : memref<120x256xf32, #tpu.memory_space<vmem>>, vector<120x128xf32>
    %48 = arith.addf %46, %47 : vector<120x128xf32>
    %c0_46 = arith.constant 0 : index
    %c0_47 = arith.constant 0 : index
    %49 = vector.load %arg8[%c0_46, %c0_47] : memref<128x96xf32, #tpu.memory_space<vmem>>, vector<128x96xf32>
    %cst_48 = arith.constant dense<0.000000e+00> : vector<120x96xf32>
    %50 = tpu.matmul %48, %49, %cst_48 {dimension_numbers = #tpu.dot_dimension_numbers<[1], [0], [0], [1], [0, 0, 1, 1], [], []>} : vector<120x128xf32>, vector<128x96xf32>, vector<120x96xf32> -> vector<120x96xf32>
    %c0_49 = arith.constant 0 : index
    %c0_50 = arith.constant 0 : index
    %51 = vector.load %arg9[%c0_49, %c0_50] : memref<1x96xf32, #tpu.memory_space<vmem>>, vector<1x96xf32>
    %52 = vector.broadcast %51 : vector<1x96xf32> to vector<120x96xf32>
    %53 = arith.addf %50, %52 : vector<120x96xf32>
    %cst_51 = arith.constant 0.000000e+00 : f32
    %54 = vector.broadcast %cst_51 : f32 to vector<120x96xf32>
    %55 = arith.maximumf %53, %54 : vector<120x96xf32>
    %c0_52 = arith.constant 0 : index
    %c0_53 = arith.constant 0 : index
    %56 = vector.load %arg10[%c0_52, %c0_53] : memref<96x32xf32, #tpu.memory_space<vmem>>, vector<96x32xf32>
    %cst_54 = arith.constant dense<0.000000e+00> : vector<120x32xf32>
    %57 = tpu.matmul %55, %56, %cst_54 {dimension_numbers = #tpu.dot_dimension_numbers<[1], [0], [0], [1], [0, 0, 1, 1], [], []>} : vector<120x96xf32>, vector<96x32xf32>, vector<120x32xf32> -> vector<120x32xf32>
    %c0_55 = arith.constant 0 : index
    %c0_56 = arith.constant 0 : index
    %58 = vector.load %arg11[%c0_55, %c0_56] : memref<1x32xf32, #tpu.memory_space<vmem>>, vector<1x32xf32>
    %59 = vector.broadcast %58 : vector<1x32xf32> to vector<120x32xf32>
    %60 = arith.addf %57, %59 : vector<120x32xf32>
    %cst_57 = arith.constant 0.000000e+00 : f32
    %61 = vector.broadcast %cst_57 : f32 to vector<120x32xf32>
    %62 = arith.maximumf %60, %61 : vector<120x32xf32>
    %c0_58 = arith.constant 0 : index
    %c0_59 = arith.constant 0 : index
    %63 = vector.load %arg12[%c0_58, %c0_59] : memref<32x1xf32, #tpu.memory_space<vmem>>, vector<32x1xf32>
    %cst_60 = arith.constant dense<0.000000e+00> : vector<120x1xf32>
    %64 = tpu.matmul %62, %63, %cst_60 {dimension_numbers = #tpu.dot_dimension_numbers<[1], [0], [0], [1], [0, 0, 1, 1], [], []>} : vector<120x32xf32>, vector<32x1xf32>, vector<120x1xf32> -> vector<120x1xf32>
    %c0_61 = arith.constant 0 : index
    %c0_62 = arith.constant 0 : index
    %65 = vector.load %arg13[%c0_61, %c0_62] : memref<1x1xf32, #tpu.memory_space<vmem>>, vector<1x1xf32>
    %66 = vector.broadcast %65 : vector<1x1xf32> to vector<120x1xf32>
    %67 = arith.addf %64, %66 : vector<120x1xf32>
    %c0_63 = arith.constant 0 : index
    %c0_64 = arith.constant 0 : index
    %68 = vector.load %arg16[%c0_63, %c0_64] : memref<120x1xf32, #tpu.memory_space<vmem>>, vector<120x1xf32>
    tpu.vector_store %arg16[%c0_63, %c0_64], %67 {strides = array<i32>} : memref<120x1xf32, #tpu.memory_space<vmem>>, vector<120x1xf32>,
    return
  }
  func.func @transform_0(%arg0: i32) -> (i32, i32) {
    %c0_i32 = arith.constant 0 : i32
    %c0_i32_0 = arith.constant 0 : i32
    return %arg0, %c0_i32 : i32, i32
  }
  func.func @transform_1(%arg0: i32) -> (i32, i32) {
    %c0_i32 = arith.constant 0 : i32
    %c0_i32_0 = arith.constant 0 : i32
    return %arg0, %c0_i32 : i32, i32
  }
  func.func @transform_2(%arg0: i32) -> (i32, i32) {
    %c0_i32 = arith.constant 0 : i32
    %c0_i32_0 = arith.constant 0 : i32
    return %arg0, %c0_i32 : i32, i32
  }
  func.func @transform_3(%arg0: i32) -> (i32, i32) {
    %c0_i32 = arith.constant 0 : i32
    %c0_i32_0 = arith.constant 0 : i32
    %c0_i32_1 = arith.constant 0 : i32
    return %c0_i32, %c0_i32_0 : i32, i32
  }
  func.func @transform_4(%arg0: i32) -> (i32, i32) {
    %c0_i32 = arith.constant 0 : i32
    %c0_i32_0 = arith.constant 0 : i32
    %c0_i32_1 = arith.constant 0 : i32
    return %c0_i32, %c0_i32_0 : i32, i32
  }
  func.func @transform_5(%arg0: i32) -> (i32, i32) {
    %c0_i32 = arith.constant 0 : i32
    %c0_i32_0 = arith.constant 0 : i32
    %c0_i32_1 = arith.constant 0 : i32
    return %c0_i32, %c0_i32_0 : i32, i32
  }
  func.func @transform_6(%arg0: i32) -> (i32, i32) {
    %c0_i32 = arith.constant 0 : i32
    %c0_i32_0 = arith.constant 0 : i32
    %c0_i32_1 = arith.constant 0 : i32
    return %c0_i32, %c0_i32_0 : i32, i32
  }
  func.func @transform_7(%arg0: i32) -> (i32, i32) {
    %c0_i32 = arith.constant 0 : i32
    %c0_i32_0 = arith.constant 0 : i32
    %c0_i32_1 = arith.constant 0 : i32
    return %c0_i32, %c0_i32_0 : i32, i32
  }
  func.func @transform_8(%arg0: i32) -> (i32, i32) {
    %c0_i32 = arith.constant 0 : i32
    %c0_i32_0 = arith.constant 0 : i32
    %c0_i32_1 = arith.constant 0 : i32
    return %c0_i32, %c0_i32_0 : i32, i32
  }
  func.func @transform_9(%arg0: i32) -> (i32, i32) {
    %c0_i32 = arith.constant 0 : i32
    %c0_i32_0 = arith.constant 0 : i32
    %c0_i32_1 = arith.constant 0 : i32
    return %c0_i32, %c0_i32_0 : i32, i32
  }
  func.func @transform_10(%arg0: i32) -> (i32, i32) {
    %c0_i32 = arith.constant 0 : i32
    %c0_i32_0 = arith.constant 0 : i32
    %c0_i32_1 = arith.constant 0 : i32
    return %c0_i32, %c0_i32_0 : i32, i32
  }
  func.func @transform_11(%arg0: i32) -> (i32, i32) {
    %c0_i32 = arith.constant 0 : i32
    %c0_i32_0 = arith.constant 0 : i32
    %c0_i32_1 = arith.constant 0 : i32
    return %c0_i32, %c0_i32_0 : i32, i32
  }
  func.func @transform_12(%arg0: i32) -> (i32, i32) {
    %c0_i32 = arith.constant 0 : i32
    %c0_i32_0 = arith.constant 0 : i32
    %c0_i32_1 = arith.constant 0 : i32
    return %c0_i32, %c0_i32_0 : i32, i32
  }
  func.func @transform_13(%arg0: i32) -> (i32, i32) {
    %c0_i32 = arith.constant 0 : i32
    %c0_i32_0 = arith.constant 0 : i32
    return %arg0, %c0_i32 : i32, i32
  }
  func.func @transform_14(%arg0: i32) -> (i32, i32) {
    %c0_i32 = arith.constant 0 : i32
    %c0_i32_0 = arith.constant 0 : i32
    return %arg0, %c0_i32 : i32, i32
  }
  func.func @transform_15(%arg0: i32) -> (i32, i32) {
    %c0_i32 = arith.constant 0 : i32
    %c0_i32_0 = arith.constant 0 : i32
    return %arg0, %c0_i32 : i32, i32
  }
}

</mosaic_0001>

<llo_original>
// kernel: tpu_custom_call.1
$region0: #{tpu_custom_call.1}
  #allocation0 [shape = 'u32[]', space=smem, size = 0x4, offset = 0x4, fixed_abs, tag = 'smem constant byte address 0x4 - core index']
  #allocation1 [shape = 'u32[144,128]{1,0:T(1,128)}', space=vmem, size = 0x12000, scoped, tag = 'internal scratch']
  #allocation2 [shape = 'f32[1,1]{1,0:T(1,128)S(1)}', space=vmem, size = 0x200, scoped, tag = 'scoped memory for tpu_custom_call.1']
  %s0 = inlined_call_operand.vmem [shape: f32[120,2048], index: 0, kind: input, shape index: {}]
  %s1 = inlined_call_operand.vmem [shape: f32[120,256], index: 1, kind: input, shape index: {}]
  %s2 = inlined_call_operand.hbm [shape: f32[120,256], index: 2, kind: input, shape index: {}]
  %s3 = inlined_call_operand.vmem [shape: f32[1024,96], index: 3, kind: input, shape index: {}]
  %s4 = inlined_call_operand.vmem [shape: f32[1,96], index: 4, kind: input, shape index: {}]
  %s5 = inlined_call_operand.vmem [shape: f32[96,32], index: 5, kind: input, shape index: {}]
  %s6 = inlined_call_operand.vmem [shape: f32[1,32], index: 6, kind: input, shape index: {}]
  %s7 = inlined_call_operand.vmem [shape: f32[128,96], index: 7, kind: input, shape index: {}]
  %s8 = inlined_call_operand.vmem [shape: f32[1,96], index: 8, kind: input, shape index: {}]
  %s9 = inlined_call_operand.vmem [shape: f32[96,32], index: 9, kind: input, shape index: {}]
  %s10 = inlined_call_operand.vmem [shape: f32[1,32], index: 10, kind: input, shape index: {}]
  %s11 = inlined_call_operand.vmem [shape: f32[32,1], index: 11, kind: input, shape index: {}]
  %s12 = inlined_call_operand.<no memory space> [shape: f32[1,1], index: 12, kind: input, shape index: {}]
  %s13 = inlined_call_operand.vmem [shape: f32[120,1], index: 13, kind: output, shape index: {0}]
  %s14 = inlined_call_operand.vmem [shape: f32[120,1], index: 14, kind: output, shape index: {1}]
  %s15 = inlined_call_operand.vmem [shape: f32[120,1], index: 15, kind: output, shape index: {2}]
  %16 = xla_tuple %s13, %s14, %s15
  %s17 = sld [smem:[#allocation0]]
  $region82: #{tpu_custom_call.1} parent=0
    _
  %s19 = ssub.s32 1, %s17
  %s20 = scalar_select 0, %s19, %s17
  %v21 = vstv %s12
  %22 = vst [vmem:[#allocation2] sm:$0x1] %v21
  $region1: #{tpu_custom_call.1} parent=0
    #allocation3 [shape = 'u8[122880]{0}', space=vmem, size = 0x1e000, scoped, tag = 'input window, operand 2, single buffered']
    #allocation4 [shape = 's32[1]{0}', space=sflag, size = 0x4, scoped, tag = 'scoped memory for tpu_custom_call.1']
    %23 = vsyncpa [#allocation4], 0
    // Predicated region
    $region2: #{tpu_custom_call.1} parent=1 // pred_check
      _
    $region3: #{tpu_custom_call.1} parent=1 // pred_check_branch
      %25 = sbr.rel (0) target = $region5
    $region4: #{tpu_custom_call.1} parent=1 // pred_region
      _
    $region5: #{tpu_custom_call.1} parent=1 // pred_fallthru
      _
    // Predicated region
    $region6: #{tpu_custom_call.1} parent=1 // pred_check
      _
    $region7: #{tpu_custom_call.1} parent=1 // pred_check_branch
      %27 = sbr.rel (0) target = $region9
    $region8: #{tpu_custom_call.1} parent=1 // pred_region
      _
    $region9: #{tpu_custom_call.1} parent=1 // pred_fallthru
      _
    // Predicated region
    $region10: #{tpu_custom_call.1} parent=1 // pred_check
      _
    $region11: #{tpu_custom_call.1} parent=1 // pred_check_branch
      %29 = sbr.rel (0) target = $region13
    $region12: #{tpu_custom_call.1} parent=1 // pred_region
      %s31 = ssub.s32 3840, 3840
      %32 = vsyncadd [#allocation4], %s31
      %s33 = sshll.u32 [#allocation3], 4
      %s34 = int_to_ptr.vmem [resolvable:$true] %s33
      %39 = dma.hbm_to_vmem [thread:$0]  %s2, 3840, %s34, [#allocation4], 256, 256, 16
    $region13: #{tpu_custom_call.1} parent=1 // pred_fallthru
      _
    // Predicated region
    $region14: #{tpu_custom_call.1} parent=1 // pred_check
      _
    $region15: #{tpu_custom_call.1} parent=1 // pred_check_branch
      %41 = sbr.rel (0) target = $region17
    $region16: #{tpu_custom_call.1} parent=1 // pred_region
      _
    $region17: #{tpu_custom_call.1} parent=1 // pred_fallthru
      _
    // Predicated region
    $region18: #{tpu_custom_call.1} parent=1 // pred_check
      _
    $region19: #{tpu_custom_call.1} parent=1 // pred_check_branch
      %43 = sbr.rel (0) target = $region21
    $region20: #{tpu_custom_call.1} parent=1 // pred_region
      _
    $region21: #{tpu_custom_call.1} parent=1 // pred_fallthru
      _
    // Predicated region
    $region22: #{tpu_custom_call.1} parent=1 // pred_check
      _
    $region23: #{tpu_custom_call.1} parent=1 // pred_check_branch
      %45 = sbr.rel (0) target = $region25
    $region24: #{tpu_custom_call.1} parent=1 // pred_region
      _
    $region25: #{tpu_custom_call.1} parent=1 // pred_fallthru
      _
    // Predicated region
    $region26: #{tpu_custom_call.1} parent=1 // pred_check
      _
    $region27: #{tpu_custom_call.1} parent=1 // pred_check_branch
      %47 = sbr.rel (0) target = $region29
    $region28: #{tpu_custom_call.1} parent=1 // pred_region
      _
    $region29: #{tpu_custom_call.1} parent=1 // pred_fallthru
      _
    // Predicated region
    $region30: #{tpu_custom_call.1} parent=1 // pred_check
      _
    $region31: #{tpu_custom_call.1} parent=1 // pred_check_branch
      %49 = sbr.rel (0) target = $region33
    $region32: #{tpu_custom_call.1} parent=1 // pred_region
      _
    $region33: #{tpu_custom_call.1} parent=1 // pred_fallthru
      _
    // Predicated region
    $region34: #{tpu_custom_call.1} parent=1 // pred_check
      _
    $region35: #{tpu_custom_call.1} parent=1 // pred_check_branch
      %51 = sbr.rel (0) target = $region37
    $region36: #{tpu_custom_call.1} parent=1 // pred_region
      _
    $region37: #{tpu_custom_call.1} parent=1 // pred_fallthru
      _
    // Predicated region
    $region38: #{tpu_custom_call.1} parent=1 // pred_check
      _
    $region39: #{tpu_custom_call.1} parent=1 // pred_check_branch
      %53 = sbr.rel (0) target = $region41
    $region40: #{tpu_custom_call.1} parent=1 // pred_region
      _
    $region41: #{tpu_custom_call.1} parent=1 // pred_fallthru
      _
    // Predicated region
    $region42: #{tpu_custom_call.1} parent=1 // pred_check
      _
    $region43: #{tpu_custom_call.1} parent=1 // pred_check_branch
      %55 = sbr.rel (0) target = $region45
    $region44: #{tpu_custom_call.1} parent=1 // pred_region
      _
    $region45: #{tpu_custom_call.1} parent=1 // pred_fallthru
      _
    // Predicated region
    $region46: #{tpu_custom_call.1} parent=1 // pred_check
      _
    $region47: #{tpu_custom_call.1} parent=1 // pred_check_branch
      %57 = sbr.rel (0) target = $region49
    $region48: #{tpu_custom_call.1} parent=1 // pred_region
      _
    $region49: #{tpu_custom_call.1} parent=1 // pred_fallthru
      _
    // Predicated region
    $region50: #{tpu_custom_call.1} parent=1 // pred_check
      _
    $region51: #{tpu_custom_call.1} parent=1 // pred_check_branch
      %59 = sbr.rel (0) target = $region53
    $region52: #{tpu_custom_call.1} parent=1 // pred_region
      _
    $region53: #{tpu_custom_call.1} parent=1 // pred_fallthru
      _
    // Predicated region
    $region54: #{tpu_custom_call.1} parent=1 // pred_check
      _
    $region55: #{tpu_custom_call.1} parent=1 // pred_check_branch
      %61 = sbr.rel (0) target = $region57
    $region56: #{tpu_custom_call.1} parent=1 // pred_region
      %62 = dma.done [#allocation4], 3840
    $region57: #{tpu_custom_call.1} parent=1 // pred_fallthru
      _
    %v63 = vld [vmem:[%s0] sm:$0xff]
    %v64 = vld [vmem:[%s0 + $0x8] sm:$0xff]
    %v65 = vld [vmem:[%s0 + $0x10] sm:$0xff]
    %v66 = vld [vmem:[%s0 + $0x18] sm:$0xff]
    %v67 = vld [vmem:[%s0 + $0x20] sm:$0xff]
    %v68 = vld [vmem:[%s0 + $0x28] sm:$0xff]
    %v69 = vld [vmem:[%s0 + $0x30] sm:$0xff]
    %v70 = vld [vmem:[%s0 + $0x38] sm:$0xff]
    %v71 = vld [vmem:[%s0 + $0x80] sm:$0xff]
    %v72 = vld [vmem:[%s0 + $0x88] sm:$0xff]
    %v73 = vld [vmem:[%s0 + $0x90] sm:$0xff]
    %v74 = vld [vmem:[%s0 + $0x98] sm:$0xff]
    %v75 = vld [vmem:[%s0 + $0xa0] sm:$0xff]
    %v76 = vld [vmem:[%s0 + $0xa8] sm:$0xff]
    %v77 = vld [vmem:[%s0 + $0xb0] sm:$0xff]
    %v78 = vld [vmem:[%s0 + $0xb8] sm:$0xff]
    %v79 = vld [vmem:[%s0 + $0x100] sm:$0xff]
    %v80 = vld [vmem:[%s0 + $0x108] sm:$0xff]
    %v81 = vld [vmem:[%s0 + $0x110] sm:$0xff]
    %v82 = vld [vmem:[%s0 + $0x118] sm:$0xff]
    %v83 = vld [vmem:[%s0 + $0x120] sm:$0xff]
    %v84 = vld [vmem:[%s0 + $0x128] sm:$0xff]
    %v85 = vld [vmem:[%s0 + $0x130] sm:$0xff]
    %v86 = vld [vmem:[%s0 + $0x138] sm:$0xff]
    %v87 = vld [vmem:[%s0 + $0x180] sm:$0xff]
    %v88 = vld [vmem:[%s0 + $0x188] sm:$0xff]
    %v89 = vld [vmem:[%s0 + $0x190] sm:$0xff]
    %v90 = vld [vmem:[%s0 + $0x198] sm:$0xff]
    %v91 = vld [vmem:[%s0 + $0x1a0] sm:$0xff]
    %v92 = vld [vmem:[%s0 + $0x1a8] sm:$0xff]
    %v93 = vld [vmem:[%s0 + $0x1b0] sm:$0xff]
    %v94 = vld [vmem:[%s0 + $0x1b8] sm:$0xff]
    %v95 = vld [vmem:[%s0 + $0x200] sm:$0xff]
    %v96 = vld [vmem:[%s0 + $0x208] sm:$0xff]
    %v97 = vld [vmem:[%s0 + $0x210] sm:$0xff]
    %v98 = vld [vmem:[%s0 + $0x218] sm:$0xff]
    %v99 = vld [vmem:[%s0 + $0x220] sm:$0xff]
    %v100 = vld [vmem:[%s0 + $0x228] sm:$0xff]
    %v101 = vld [vmem:[%s0 + $0x230] sm:$0xff]
    %v102 = vld [vmem:[%s0 + $0x238] sm:$0xff]
    %v103 = vld [vmem:[%s0 + $0x280] sm:$0xff]
    %v104 = vld [vmem:[%s0 + $0x288] sm:$0xff]
    %v105 = vld [vmem:[%s0 + $0x290] sm:$0xff]
    %v106 = vld [vmem:[%s0 + $0x298] sm:$0xff]
    %v107 = vld [vmem:[%s0 + $0x2a0] sm:$0xff]
    %v108 = vld [vmem:[%s0 + $0x2a8] sm:$0xff]
    %v109 = vld [vmem:[%s0 + $0x2b0] sm:$0xff]
    %v110 = vld [vmem:[%s0 + $0x2b8] sm:$0xff]
    %v111 = vld [vmem:[%s0 + $0x300] sm:$0xff]
    %v112 = vld [vmem:[%s0 + $0x308] sm:$0xff]
    %v113 = vld [vmem:[%s0 + $0x310] sm:$0xff]
    %v114 = vld [vmem:[%s0 + $0x318] sm:$0xff]
    %v115 = vld [vmem:[%s0 + $0x320] sm:$0xff]
    %v116 = vld [vmem:[%s0 + $0x328] sm:$0xff]
    %v117 = vld [vmem:[%s0 + $0x330] sm:$0xff]
    %v118 = vld [vmem:[%s0 + $0x338] sm:$0xff]
    %v119 = vld [vmem:[%s0 + $0x380] sm:$0xff]
    %v120 = vld [vmem:[%s0 + $0x388] sm:$0xff]
    %v121 = vld [vmem:[%s0 + $0x390] sm:$0xff]
    %v122 = vld [vmem:[%s0 + $0x398] sm:$0xff]
    %v123 = vld [vmem:[%s0 + $0x3a0] sm:$0xff]
    %v124 = vld [vmem:[%s0 + $0x3a8] sm:$0xff]
    %v125 = vld [vmem:[%s0 + $0x3b0] sm:$0xff]
    %v126 = vld [vmem:[%s0 + $0x3b8] sm:$0xff]
    %v127 = vld [vmem:[%s0 + $0x400] sm:$0xff]
    %v128 = vld [vmem:[%s0 + $0x408] sm:$0xff]
    %v129 = vld [vmem:[%s0 + $0x410] sm:$0xff]
    %v130 = vld [vmem:[%s0 + $0x418] sm:$0xff]
    %v131 = vld [vmem:[%s0 + $0x420] sm:$0xff]
    %v132 = vld [vmem:[%s0 + $0x428] sm:$0xff]
    %v133 = vld [vmem:[%s0 + $0x430] sm:$0xff]
    %v134 = vld [vmem:[%s0 + $0x438] sm:$0xff]
    %v135 = vld [vmem:[%s0 + $0x480] sm:$0xff]
    %v136 = vld [vmem:[%s0 + $0x488] sm:$0xff]
    %v137 = vld [vmem:[%s0 + $0x490] sm:$0xff]
    %v138 = vld [vmem:[%s0 + $0x498] sm:$0xff]
    %v139 = vld [vmem:[%s0 + $0x4a0] sm:$0xff]
    %v140 = vld [vmem:[%s0 + $0x4a8] sm:$0xff]
    %v141 = vld [vmem:[%s0 + $0x4b0] sm:$0xff]
    %v142 = vld [vmem:[%s0 + $0x4b8] sm:$0xff]
    %v143 = vld [vmem:[%s0 + $0x500] sm:$0xff]
    %v144 = vld [vmem:[%s0 + $0x508] sm:$0xff]
    %v145 = vld [vmem:[%s0 + $0x510] sm:$0xff]
    %v146 = vld [vmem:[%s0 + $0x518] sm:$0xff]
    %v147 = vld [vmem:[%s0 + $0x520] sm:$0xff]
    %v148 = vld [vmem:[%s0 + $0x528] sm:$0xff]
    %v149 = vld [vmem:[%s0 + $0x530] sm:$0xff]
    %v150 = vld [vmem:[%s0 + $0x538] sm:$0xff]
    %v151 = vld [vmem:[%s0 + $0x580] sm:$0xff]
    %v152 = vld [vmem:[%s0 + $0x588] sm:$0xff]
    %v153 = vld [vmem:[%s0 + $0x590] sm:$0xff]
    %v154 = vld [vmem:[%s0 + $0x598] sm:$0xff]
    %v155 = vld [vmem:[%s0 + $0x5a0] sm:$0xff]
    %v156 = vld [vmem:[%s0 + $0x5a8] sm:$0xff]
    %v157 = vld [vmem:[%s0 + $0x5b0] sm:$0xff]
    %v158 = vld [vmem:[%s0 + $0x5b8] sm:$0xff]
    %v159 = vld [vmem:[%s0 + $0x600] sm:$0xff]
    %v160 = vld [vmem:[%s0 + $0x608] sm:$0xff]
    %v161 = vld [vmem:[%s0 + $0x610] sm:$0xff]
    %v162 = vld [vmem:[%s0 + $0x618] sm:$0xff]
    %v163 = vld [vmem:[%s0 + $0x620] sm:$0xff]
    %v164 = vld [vmem:[%s0 + $0x628] sm:$0xff]
    %v165 = vld [vmem:[%s0 + $0x630] sm:$0xff]
    %v166 = vld [vmem:[%s0 + $0x638] sm:$0xff]
    %v167 = vld [vmem:[%s0 + $0x680] sm:$0xff]
    %v168 = vld [vmem:[%s0 + $0x688] sm:$0xff]
    %v169 = vld [vmem:[%s0 + $0x690] sm:$0xff]
    %v170 = vld [vmem:[%s0 + $0x698] sm:$0xff]
    %v171 = vld [vmem:[%s0 + $0x6a0] sm:$0xff]
    %v172 = vld [vmem:[%s0 + $0x6a8] sm:$0xff]
    %v173 = vld [vmem:[%s0 + $0x6b0] sm:$0xff]
    %v174 = vld [vmem:[%s0 + $0x6b8] sm:$0xff]
    %v175 = vld [vmem:[%s0 + $0x700] sm:$0xff]
    %v176 = vld [vmem:[%s0 + $0x708] sm:$0xff]
    %v177 = vld [vmem:[%s0 + $0x710] sm:$0xff]
    %v178 = vld [vmem:[%s0 + $0x718] sm:$0xff]
    %v179 = vld [vmem:[%s0 + $0x720] sm:$0xff]
    %v180 = vld [vmem:[%s0 + $0x728] sm:$0xff]
    %v181 = vld [vmem:[%s0 + $0x730] sm:$0xff]
    %v182 = vld [vmem:[%s0 + $0x738] sm:$0xff]
    %v183 = vld [vmem:[%s0 + $0x40] sm:$0xff]
    %v184 = vld [vmem:[%s0 + $0x48] sm:$0xff]
    %v185 = vld [vmem:[%s0 + $0x50] sm:$0xff]
    %v186 = vld [vmem:[%s0 + $0x58] sm:$0xff]
    %v187 = vld [vmem:[%s0 + $0x60] sm:$0xff]
    %v188 = vld [vmem:[%s0 + $0x68] sm:$0xff]
    %v189 = vld [vmem:[%s0 + $0x70] sm:$0xff]
    %v190 = vld [vmem:[%s0 + $0x78] sm:$0xff]
    %v191 = vld [vmem:[%s0 + $0xc0] sm:$0xff]
    %v192 = vld [vmem:[%s0 + $0xc8] sm:$0xff]
    %v193 = vld [vmem:[%s0 + $0xd0] sm:$0xff]
    %v194 = vld [vmem:[%s0 + $0xd8] sm:$0xff]
    %v195 = vld [vmem:[%s0 + $0xe0] sm:$0xff]
    %v196 = vld [vmem:[%s0 + $0xe8] sm:$0xff]
    %v197 = vld [vmem:[%s0 + $0xf0] sm:$0xff]
    %v198 = vld [vmem:[%s0 + $0xf8] sm:$0xff]
    %v199 = vld [vmem:[%s0 + $0x140] sm:$0xff]
    %v200 = vld [vmem:[%s0 + $0x148] sm:$0xff]
    %v201 = vld [vmem:[%s0 + $0x150] sm:$0xff]
    %v202 = vld [vmem:[%s0 + $0x158] sm:$0xff]
    %v203 = vld [vmem:[%s0 + $0x160] sm:$0xff]
    %v204 = vld [vmem:[%s0 + $0x168] sm:$0xff]
    %v205 = vld [vmem:[%s0 + $0x170] sm:$0xff]
    %v206 = vld [vmem:[%s0 + $0x178] sm:$0xff]
    %v207 = vld [vmem:[%s0 + $0x1c0] sm:$0xff]
    %v208 = vld [vmem:[%s0 + $0x1c8] sm:$0xff]
    %v209 = vld [vmem:[%s0 + $0x1d0] sm:$0xff]
    %v210 = vld [vmem:[%s0 + $0x1d8] sm:$0xff]
    %v211 = vld [vmem:[%s0 + $0x1e0] sm:$0xff]
    %v212 = vld [vmem:[%s0 + $0x1e8] sm:$0xff]
    %v213 = vld [vmem:[%s0 + $0x1f0] sm:$0xff]
    %v214 = vld [vmem:[%s0 + $0x1f8] sm:$0xff]
    %v215 = vld [vmem:[%s0 + $0x240] sm:$0xff]
    %v216 = vld [vmem:[%s0 + $0x248] sm:$0xff]
    %v217 = vld [vmem:[%s0 + $0x250] sm:$0xff]
    %v218 = vld [vmem:[%s0 + $0x258] sm:$0xff]
    %v219 = vld [vmem:[%s0 + $0x260] sm:$0xff]
    %v220 = vld [vmem:[%s0 + $0x268] sm:$0xff]
    %v221 = vld [vmem:[%s0 + $0x270] sm:$0xff]
    %v222 = vld [vmem:[%s0 + $0x278] sm:$0xff]
    %v223 = vld [vmem:[%s0 + $0x2c0] sm:$0xff]
    %v224 = vld [vmem:[%s0 + $0x2c8] sm:$0xff]
    %v225 = vld [vmem:[%s0 + $0x2d0] sm:$0xff]
    %v226 = vld [vmem:[%s0 + $0x2d8] sm:$0xff]
    %v227 = vld [vmem:[%s0 + $0x2e0] sm:$0xff]
    %v228 = vld [vmem:[%s0 + $0x2e8] sm:$0xff]
    %v229 = vld [vmem:[%s0 + $0x2f0] sm:$0xff]
    %v230 = vld [vmem:[%s0 + $0x2f8] sm:$0xff]
    %v231 = vld [vmem:[%s0 + $0x340] sm:$0xff]
    %v232 = vld [vmem:[%s0 + $0x348] sm:$0xff]
    %v233 = vld [vmem:[%s0 + $0x350] sm:$0xff]
    %v234 = vld [vmem:[%s0 + $0x358] sm:$0xff]
    %v235 = vld [vmem:[%s0 + $0x360] sm:$0xff]
    %v236 = vld [vmem:[%s0 + $0x368] sm:$0xff]
    %v237 = vld [vmem:[%s0 + $0x370] sm:$0xff]
    %v238 = vld [vmem:[%s0 + $0x378] sm:$0xff]
    %v239 = vld [vmem:[%s0 + $0x3c0] sm:$0xff]
    %v240 = vld [vmem:[%s0 + $0x3c8] sm:$0xff]
    %v241 = vld [vmem:[%s0 + $0x3d0] sm:$0xff]
    %v242 = vld [vmem:[%s0 + $0x3d8] sm:$0xff]
    %v243 = vld [vmem:[%s0 + $0x3e0] sm:$0xff]
    %v244 = vld [vmem:[%s0 + $0x3e8] sm:$0xff]
    %v245 = vld [vmem:[%s0 + $0x3f0] sm:$0xff]
    %v246 = vld [vmem:[%s0 + $0x3f8] sm:$0xff]
    %v247 = vld [vmem:[%s0 + $0x440] sm:$0xff]
    %v248 = vld [vmem:[%s0 + $0x448] sm:$0xff]
    %v249 = vld [vmem:[%s0 + $0x450] sm:$0xff]
    %v250 = vld [vmem:[%s0 + $0x458] sm:$0xff]
    %v251 = vld [vmem:[%s0 + $0x460] sm:$0xff]
    %v252 = vld [vmem:[%s0 + $0x468] sm:$0xff]
    %v253 = vld [vmem:[%s0 + $0x470] sm:$0xff]
    %v254 = vld [vmem:[%s0 + $0x478] sm:$0xff]
    %v255 = vld [vmem:[%s0 + $0x4c0] sm:$0xff]
    %v256 = vld [vmem:[%s0 + $0x4c8] sm:$0xff]
    %v257 = vld [vmem:[%s0 + $0x4d0] sm:$0xff]
    %v258 = vld [vmem:[%s0 + $0x4d8] sm:$0xff]
    %v259 = vld [vmem:[%s0 + $0x4e0] sm:$0xff]
    %v260 = vld [vmem:[%s0 + $0x4e8] sm:$0xff]
    %v261 = vld [vmem:[%s0 + $0x4f0] sm:$0xff]
    %v262 = vld [vmem:[%s0 + $0x4f8] sm:$0xff]
    %v263 = vld [vmem:[%s0 + $0x540] sm:$0xff]
    %v264 = vld [vmem:[%s0 + $0x548] sm:$0xff]
    %v265 = vld [vmem:[%s0 + $0x550] sm:$0xff]
    %v266 = vld [vmem:[%s0 + $0x558] sm:$0xff]
    %v267 = vld [vmem:[%s0 + $0x560] sm:$0xff]
    %v268 = vld [vmem:[%s0 + $0x568] sm:$0xff]
    %v269 = vld [vmem:[%s0 + $0x570] sm:$0xff]
    %v270 = vld [vmem:[%s0 + $0x578] sm:$0xff]
    %v271 = vld [vmem:[%s0 + $0x5c0] sm:$0xff]
    %v272 = vld [vmem:[%s0 + $0x5c8] sm:$0xff]
    %v273 = vld [vmem:[%s0 + $0x5d0] sm:$0xff]
    %v274 = vld [vmem:[%s0 + $0x5d8] sm:$0xff]
    %v275 = vld [vmem:[%s0 + $0x5e0] sm:$0xff]
    %v276 = vld [vmem:[%s0 + $0x5e8] sm:$0xff]
    %v277 = vld [vmem:[%s0 + $0x5f0] sm:$0xff]
    %v278 = vld [vmem:[%s0 + $0x5f8] sm:$0xff]
    %v279 = vld [vmem:[%s0 + $0x640] sm:$0xff]
    %v280 = vld [vmem:[%s0 + $0x648] sm:$0xff]
    %v281 = vld [vmem:[%s0 + $0x650] sm:$0xff]
    %v282 = vld [vmem:[%s0 + $0x658] sm:$0xff]
    %v283 = vld [vmem:[%s0 + $0x660] sm:$0xff]
    %v284 = vld [vmem:[%s0 + $0x668] sm:$0xff]
    %v285 = vld [vmem:[%s0 + $0x670] sm:$0xff]
    %v286 = vld [vmem:[%s0 + $0x678] sm:$0xff]
    %v287 = vld [vmem:[%s0 + $0x6c0] sm:$0xff]
    %v288 = vld [vmem:[%s0 + $0x6c8] sm:$0xff]
    %v289 = vld [vmem:[%s0 + $0x6d0] sm:$0xff]
    %v290 = vld [vmem:[%s0 + $0x6d8] sm:$0xff]
    %v291 = vld [vmem:[%s0 + $0x6e0] sm:$0xff]
    %v292 = vld [vmem:[%s0 + $0x6e8] sm:$0xff]
    %v293 = vld [vmem:[%s0 + $0x6f0] sm:$0xff]
    %v294 = vld [vmem:[%s0 + $0x6f8] sm:$0xff]
    %v295 = vld [vmem:[%s0 + $0x740] sm:$0xff]
    %v296 = vld [vmem:[%s0 + $0x748] sm:$0xff]
    %v297 = vld [vmem:[%s0 + $0x750] sm:$0xff]
    %v298 = vld [vmem:[%s0 + $0x758] sm:$0xff]
    %v299 = vld [vmem:[%s0 + $0x760] sm:$0xff]
    %v300 = vld [vmem:[%s0 + $0x768] sm:$0xff]
    %v301 = vld [vmem:[%s0 + $0x770] sm:$0xff]
    %v302 = vld [vmem:[%s0 + $0x778] sm:$0xff]
    %v303 = vadd.f32 %v63, %v183
    %v304 = vadd.f32 %v64, %v184
    %v305 = vadd.f32 %v65, %v185
    %v306 = vadd.f32 %v66, %v186
    %v307 = vadd.f32 %v67, %v187
    %v308 = vadd.f32 %v68, %v188
    %v309 = vadd.f32 %v69, %v189
    %v310 = vadd.f32 %v70, %v190
    %v311 = vadd.f32 %v71, %v191
    %v312 = vadd.f32 %v72, %v192
    %v313 = vadd.f32 %v73, %v193
    %v314 = vadd.f32 %v74, %v194
    %v315 = vadd.f32 %v75, %v195
    %v316 = vadd.f32 %v76, %v196
    %v317 = vadd.f32 %v77, %v197
    %v318 = vadd.f32 %v78, %v198
    %v319 = vadd.f32 %v79, %v199
    %v320 = vadd.f32 %v80, %v200
    %v321 = vadd.f32 %v81, %v201
    %v322 = vadd.f32 %v82, %v202
    %v323 = vadd.f32 %v83, %v203
    %v324 = vadd.f32 %v84, %v204
    %v325 = vadd.f32 %v85, %v205
    %v326 = vadd.f32 %v86, %v206
    %v327 = vadd.f32 %v87, %v207
    %v328 = vadd.f32 %v88, %v208
    %v329 = vadd.f32 %v89, %v209
    %v330 = vadd.f32 %v90, %v210
    %v331 = vadd.f32 %v91, %v211
    %v332 = vadd.f32 %v92, %v212
    %v333 = vadd.f32 %v93, %v213
    %v334 = vadd.f32 %v94, %v214
    %v335 = vadd.f32 %v95, %v215
    %v336 = vadd.f32 %v96, %v216
    %v337 = vadd.f32 %v97, %v217
    %v338 = vadd.f32 %v98, %v218
    %v339 = vadd.f32 %v99, %v219
    %v340 = vadd.f32 %v100, %v220
    %v341 = vadd.f32 %v101, %v221
    %v342 = vadd.f32 %v102, %v222
    %v343 = vadd.f32 %v103, %v223
    %v344 = vadd.f32 %v104, %v224
    %v345 = vadd.f32 %v105, %v225
    %v346 = vadd.f32 %v106, %v226
    %v347 = vadd.f32 %v107, %v227
    %v348 = vadd.f32 %v108, %v228
    %v349 = vadd.f32 %v109, %v229
    %v350 = vadd.f32 %v110, %v230
    %v351 = vadd.f32 %v111, %v231
    %v352 = vadd.f32 %v112, %v232
    %v353 = vadd.f32 %v113, %v233
    %v354 = vadd.f32 %v114, %v234
    %v355 = vadd.f32 %v115, %v235
    %v356 = vadd.f32 %v116, %v236
    %v357 = vadd.f32 %v117, %v237
    %v358 = vadd.f32 %v118, %v238
    %v359 = vadd.f32 %v119, %v239
    %v360 = vadd.f32 %v120, %v240
    %v361 = vadd.f32 %v121, %v241
    %v362 = vadd.f32 %v122, %v242
    %v363 = vadd.f32 %v123, %v243
    %v364 = vadd.f32 %v124, %v244
    %v365 = vadd.f32 %v125, %v245
    %v366 = vadd.f32 %v126, %v246
    %v367 = vadd.f32 %v127, %v247
    %v368 = vadd.f32 %v128, %v248
    %v369 = vadd.f32 %v129, %v249
    %v370 = vadd.f32 %v130, %v250
    %v371 = vadd.f32 %v131, %v251
    %v372 = vadd.f32 %v132, %v252
    %v373 = vadd.f32 %v133, %v253
    %v374 = vadd.f32 %v134, %v254
    %v375 = vadd.f32 %v135, %v255
    %v376 = vadd.f32 %v136, %v256
    %v377 = vadd.f32 %v137, %v257
    %v378 = vadd.f32 %v138, %v258
    %v379 = vadd.f32 %v139, %v259
    %v380 = vadd.f32 %v140, %v260
    %v381 = vadd.f32 %v141, %v261
    %v382 = vadd.f32 %v142, %v262
    %v383 = vadd.f32 %v143, %v263
    %v384 = vadd.f32 %v144, %v264
    %v385 = vadd.f32 %v145, %v265
    %v386 = vadd.f32 %v146, %v266
    %v387 = vadd.f32 %v147, %v267
    %v388 = vadd.f32 %v148, %v268
    %v389 = vadd.f32 %v149, %v269
    %v390 = vadd.f32 %v150, %v270
    %v391 = vadd.f32 %v151, %v271
    %v392 = vadd.f32 %v152, %v272
    %v393 = vadd.f32 %v153, %v273
    %v394 = vadd.f32 %v154, %v274
    %v395 = vadd.f32 %v155, %v275
    %v396 = vadd.f32 %v156, %v276
    %v397 = vadd.f32 %v157, %v277
    %v398 = vadd.f32 %v158, %v278
    %v399 = vadd.f32 %v159, %v279
    %v400 = vadd.f32 %v160, %v280
    %v401 = vadd.f32 %v161, %v281
    %v402 = vadd.f32 %v162, %v282
    %v403 = vadd.f32 %v163, %v283
    %v404 = vadd.f32 %v164, %v284
    %v405 = vadd.f32 %v165, %v285
    %v406 = vadd.f32 %v166, %v286
    %v407 = vadd.f32 %v167, %v287
    %v408 = vadd.f32 %v168, %v288
    %v409 = vadd.f32 %v169, %v289
    %v410 = vadd.f32 %v170, %v290
    %v411 = vadd.f32 %v171, %v291
    %v412 = vadd.f32 %v172, %v292
    %v413 = vadd.f32 %v173, %v293
    %v414 = vadd.f32 %v174, %v294
    %v415 = vadd.f32 %v175, %v295
    %v416 = vadd.f32 %v176, %v296
    %v417 = vadd.f32 %v177, %v297
    %v418 = vadd.f32 %v178, %v298
    %v419 = vadd.f32 %v179, %v299
    %v420 = vadd.f32 %v180, %v300
    %v421 = vadd.f32 %v181, %v301
    %v422 = vadd.f32 %v182, %v302
    %v423 = vld [vmem:[%s3] sm:$0xff]
    %v424 = vld [vmem:[%s3 + $0x8] sm:$0xff]
    %v425 = vld [vmem:[%s3 + $0x10] sm:$0xff]
    %v426 = vld [vmem:[%s3 + $0x18] sm:$0xff]
    %v427 = vld [vmem:[%s3 + $0x20] sm:$0xff]
    %v428 = vld [vmem:[%s3 + $0x28] sm:$0xff]
    %v429 = vld [vmem:[%s3 + $0x30] sm:$0xff]
    %v430 = vld [vmem:[%s3 + $0x38] sm:$0xff]
    %v431 = vld [vmem:[%s3 + $0x40] sm:$0xff]
    %v432 = vld [vmem:[%s3 + $0x48] sm:$0xff]
    %v433 = vld [vmem:[%s3 + $0x50] sm:$0xff]
    %v434 = vld [vmem:[%s3 + $0x58] sm:$0xff]
    %v435 = vld [vmem:[%s3 + $0x60] sm:$0xff]
    %v436 = vld [vmem:[%s3 + $0x68] sm:$0xff]
    %v437 = vld [vmem:[%s3 + $0x70] sm:$0xff]
    %v438 = vld [vmem:[%s3 + $0x78] sm:$0xff]
    %v439 = vld [vmem:[%s3 + $0x80] sm:$0xff]
    %v440 = vld [vmem:[%s3 + $0x88] sm:$0xff]
    %v441 = vld [vmem:[%s3 + $0x90] sm:$0xff]
    %v442 = vld [vmem:[%s3 + $0x98] sm:$0xff]
    %v443 = vld [vmem:[%s3 + $0xa0] sm:$0xff]
    %v444 = vld [vmem:[%s3 + $0xa8] sm:$0xff]
    %v445 = vld [vmem:[%s3 + $0xb0] sm:$0xff]
    %v446 = vld [vmem:[%s3 + $0xb8] sm:$0xff]
    %v447 = vld [vmem:[%s3 + $0xc0] sm:$0xff]
    %v448 = vld [vmem:[%s3 + $0xc8] sm:$0xff]
    %v449 = vld [vmem:[%s3 + $0xd0] sm:$0xff]
    %v450 = vld [vmem:[%s3 + $0xd8] sm:$0xff]
    %v451 = vld [vmem:[%s3 + $0xe0] sm:$0xff]
    %v452 = vld [vmem:[%s3 + $0xe8] sm:$0xff]
    %v453 = vld [vmem:[%s3 + $0xf0] sm:$0xff]
    %v454 = vld [vmem:[%s3 + $0xf8] sm:$0xff]
    %v455 = vld [vmem:[%s3 + $0x100] sm:$0xff]
    %v456 = vld [vmem:[%s3 + $0x108] sm:$0xff]
    %v457 = vld [vmem:[%s3 + $0x110] sm:$0xff]
    %v458 = vld [vmem:[%s3 + $0x118] sm:$0xff]
    %v459 = vld [vmem:[%s3 + $0x120] sm:$0xff]
    %v460 = vld [vmem:[%s3 + $0x128] sm:$0xff]
    %v461 = vld [vmem:[%s3 + $0x130] sm:$0xff]
    %v462 = vld [vmem:[%s3 + $0x138] sm:$0xff]
    %v463 = vld [vmem:[%s3 + $0x140] sm:$0xff]
    %v464 = vld [vmem:[%s3 + $0x148] sm:$0xff]
    %v465 = vld [vmem:[%s3 + $0x150] sm:$0xff]
    %v466 = vld [vmem:[%s3 + $0x158] sm:$0xff]
    %v467 = vld [vmem:[%s3 + $0x160] sm:$0xff]
    %v468 = vld [vmem:[%s3 + $0x168] sm:$0xff]
    %v469 = vld [vmem:[%s3 + $0x170] sm:$0xff]
    %v470 = vld [vmem:[%s3 + $0x178] sm:$0xff]
    %v471 = vld [vmem:[%s3 + $0x180] sm:$0xff]
    %v472 = vld [vmem:[%s3 + $0x188] sm:$0xff]
    %v473 = vld [vmem:[%s3 + $0x190] sm:$0xff]
    %v474 = vld [vmem:[%s3 + $0x198] sm:$0xff]
    %v475 = vld [vmem:[%s3 + $0x1a0] sm:$0xff]
    %v476 = vld [vmem:[%s3 + $0x1a8] sm:$0xff]
    %v477 = vld [vmem:[%s3 + $0x1b0] sm:$0xff]
    %v478 = vld [vmem:[%s3 + $0x1b8] sm:$0xff]
    %v479 = vld [vmem:[%s3 + $0x1c0] sm:$0xff]
    %v480 = vld [vmem:[%s3 + $0x1c8] sm:$0xff]
    %v481 = vld [vmem:[%s3 + $0x1d0] sm:$0xff]
    %v482 = vld [vmem:[%s3 + $0x1d8] sm:$0xff]
    %v483 = vld [vmem:[%s3 + $0x1e0] sm:$0xff]
    %v484 = vld [vmem:[%s3 + $0x1e8] sm:$0xff]
    %v485 = vld [vmem:[%s3 + $0x1f0] sm:$0xff]
    %v486 = vld [vmem:[%s3 + $0x1f8] sm:$0xff]
    %v487 = vld [vmem:[%s3 + $0x200] sm:$0xff]
    %v488 = vld [vmem:[%s3 + $0x208] sm:$0xff]
    %v489 = vld [vmem:[%s3 + $0x210] sm:$0xff]
    %v490 = vld [vmem:[%s3 + $0x218] sm:$0xff]
    %v491 = vld [vmem:[%s3 + $0x220] sm:$0xff]
    %v492 = vld [vmem:[%s3 + $0x228] sm:$0xff]
    %v493 = vld [vmem:[%s3 + $0x230] sm:$0xff]
    %v494 = vld [vmem:[%s3 + $0x238] sm:$0xff]
    %v495 = vld [vmem:[%s3 + $0x240] sm:$0xff]
    %v496 = vld [vmem:[%s3 + $0x248] sm:$0xff]
    %v497 = vld [vmem:[%s3 + $0x250] sm:$0xff]
    %v498 = vld [vmem:[%s3 + $0x258] sm:$0xff]
    %v499 = vld [vmem:[%s3 + $0x260] sm:$0xff]
    %v500 = vld [vmem:[%s3 + $0x268] sm:$0xff]
    %v501 = vld [vmem:[%s3 + $0x270] sm:$0xff]
    %v502 = vld [vmem:[%s3 + $0x278] sm:$0xff]
    %v503 = vld [vmem:[%s3 + $0x280] sm:$0xff]
    %v504 = vld [vmem:[%s3 + $0x288] sm:$0xff]
    %v505 = vld [vmem:[%s3 + $0x290] sm:$0xff]
    %v506 = vld [vmem:[%s3 + $0x298] sm:$0xff]
    %v507 = vld [vmem:[%s3 + $0x2a0] sm:$0xff]
    %v508 = vld [vmem:[%s3 + $0x2a8] sm:$0xff]
    %v509 = vld [vmem:[%s3 + $0x2b0] sm:$0xff]
    %v510 = vld [vmem:[%s3 + $0x2b8] sm:$0xff]
    %v511 = vld [vmem:[%s3 + $0x2c0] sm:$0xff]
    %v512 = vld [vmem:[%s3 + $0x2c8] sm:$0xff]
    %v513 = vld [vmem:[%s3 + $0x2d0] sm:$0xff]
    %v514 = vld [vmem:[%s3 + $0x2d8] sm:$0xff]
    %v515 = vld [vmem:[%s3 + $0x2e0] sm:$0xff]
    %v516 = vld [vmem:[%s3 + $0x2e8] sm:$0xff]
    %v517 = vld [vmem:[%s3 + $0x2f0] sm:$0xff]
    %v518 = vld [vmem:[%s3 + $0x2f8] sm:$0xff]
    %v519 = vld [vmem:[%s3 + $0x300] sm:$0xff]
    %v520 = vld [vmem:[%s3 + $0x308] sm:$0xff]
    %v521 = vld [vmem:[%s3 + $0x310] sm:$0xff]
    %v522 = vld [vmem:[%s3 + $0x318] sm:$0xff]
    %v523 = vld [vmem:[%s3 + $0x320] sm:$0xff]
    %v524 = vld [vmem:[%s3 + $0x328] sm:$0xff]
    %v525 = vld [vmem:[%s3 + $0x330] sm:$0xff]
    %v526 = vld [vmem:[%s3 + $0x338] sm:$0xff]
    %v527 = vld [vmem:[%s3 + $0x340] sm:$0xff]
    %v528 = vld [vmem:[%s3 + $0x348] sm:$0xff]
    %v529 = vld [vmem:[%s3 + $0x350] sm:$0xff]
    %v530 = vld [vmem:[%s3 + $0x358] sm:$0xff]
    %v531 = vld [vmem:[%s3 + $0x360] sm:$0xff]
    %v532 = vld [vmem:[%s3 + $0x368] sm:$0xff]
    %v533 = vld [vmem:[%s3 + $0x370] sm:$0xff]
    %v534 = vld [vmem:[%s3 + $0x378] sm:$0xff]
    %v535 = vld [vmem:[%s3 + $0x380] sm:$0xff]
    %v536 = vld [vmem:[%s3 + $0x388] sm:$0xff]
    %v537 = vld [vmem:[%s3 + $0x390] sm:$0xff]
    %v538 = vld [vmem:[%s3 + $0x398] sm:$0xff]
    %v539 = vld [vmem:[%s3 + $0x3a0] sm:$0xff]
    %v540 = vld [vmem:[%s3 + $0x3a8] sm:$0xff]
    %v541 = vld [vmem:[%s3 + $0x3b0] sm:$0xff]
    %v542 = vld [vmem:[%s3 + $0x3b8] sm:$0xff]
    %v543 = vld [vmem:[%s3 + $0x3c0] sm:$0xff]
    %v544 = vld [vmem:[%s3 + $0x3c8] sm:$0xff]
    %v545 = vld [vmem:[%s3 + $0x3d0] sm:$0xff]
    %v546 = vld [vmem:[%s3 + $0x3d8] sm:$0xff]
    %v547 = vld [vmem:[%s3 + $0x3e0] sm:$0xff]
    %v548 = vld [vmem:[%s3 + $0x3e8] sm:$0xff]
    %v549 = vld [vmem:[%s3 + $0x3f0] sm:$0xff]
    %v550 = vld [vmem:[%s3 + $0x3f8] sm:$0xff]
    %v551 = vld [vmem:[%s4] sm:$0x1]
    %v553 = vlaneseq
    %v554 = vshrl.u32 %v553, 7
    %v555 = vsub.s32 0, %v554
    %v556 = vrot.slane %v551, %v555
    %558 = vmatprep.subr.mxu0 0.0
    %559 = vmatpush1.msra.mxu0 %v438
    %560 = vmatprep.subr.mxu0 0.0
    %561 = vmatpush1.msra.mxu0 %v437
    %562 = vmatprep.subr.mxu0 0.0
    %563 = vmatpush1.msra.mxu0 %v436
    %564 = vmatprep.subr.mxu0 0.0
    %565 = vmatpush1.msra.mxu0 %v435
    %566 = vmatprep.subr.mxu0 0.0
    %567 = vmatpush1.msra.mxu0 %v434
    %568 = vmatprep.subr.mxu0 0.0
    %569 = vmatpush1.msra.mxu0 %v433
    %570 = vmatprep.subr.mxu0 0.0
    %571 = vmatpush1.msra.mxu0 %v432
    %572 = vmatprep.subr.mxu0 0.0
    %573 = vmatpush1.msra.mxu0 %v431
    %574 = vmatprep.subr.mxu0 0.0
    %575 = vmatpush1.msra.mxu0 %v430
    %576 = vmatprep.subr.mxu0 0.0
    %577 = vmatpush1.msra.mxu0 %v429
    %578 = vmatprep.subr.mxu0 0.0
    %579 = vmatpush1.msra.mxu0 %v428
    %580 = vmatprep.subr.mxu0 0.0
    %581 = vmatpush1.msra.mxu0 %v427
    %582 = vmatprep.subr.mxu0 0.0
    %583 = vmatpush1.msra.mxu0 %v426
    %584 = vmatprep.subr.mxu0 0.0
    %585 = vmatpush1.msra.mxu0 %v425
    %586 = vmatprep.subr.mxu0 0.0
    %587 = vmatpush1.msra.mxu0 %v424
    %588 = vmatprep.subr.mxu0 0.0
    %589 = vmatpush1.msra.mxu0 %v423
    %590 = vmatprep.subr.mxu0 0.0
    %591 = vmatpush2.msra.mxu0 %v454
    %592 = vmatprep.subr.mxu0 0.0
    %593 = vmatpush2.msra.mxu0 %v453
    %594 = vmatprep.subr.mxu0 0.0
    %595 = vmatpush2.msra.mxu0 %v452
    %596 = vmatprep.subr.mxu0 0.0
    %597 = vmatpush2.msra.mxu0 %v451
    %598 = vmatprep.subr.mxu0 0.0
    %599 = vmatpush2.msra.mxu0 %v450
    %600 = vmatprep.subr.mxu0 0.0
    %601 = vmatpush2.msra.mxu0 %v449
    %602 = vmatprep.subr.mxu0 0.0
    %603 = vmatpush2.msra.mxu0 %v448
    %604 = vmatprep.subr.mxu0 0.0
    %605 = vmatpush2.msra.mxu0 %v447
    %606 = vmatprep.subr.mxu0 0.0
    %607 = vmatpush2.msra.mxu0 %v446
    %608 = vmatprep.subr.mxu0 0.0
    %609 = vmatpush2.msra.mxu0 %v445
    %610 = vmatprep.subr.mxu0 0.0
    %611 = vmatpush2.msra.mxu0 %v444
    %612 = vmatprep.subr.mxu0 0.0
    %613 = vmatpush2.msra.mxu0 %v443
    %614 = vmatprep.subr.mxu0 0.0
    %615 = vmatpush2.msra.mxu0 %v442
    %616 = vmatprep.subr.mxu0 0.0
    %617 = vmatpush2.msra.mxu0 %v441
    %618 = vmatprep.subr.mxu0 0.0
    %619 = vmatpush2.msra.mxu0 %v440
    %620 = vmatprep.subr.mxu0 0.0
    %621 = vmatpush2.msra.mxu0 %v439
    %622 = vmatprep.mubr.f32.mxu0 %v304
    %623 = vmatmul.mubr.f32.gmra.mxu0 %v303
    %v624 = vpop.f32.mrf.mxu0
    %v625 = vadd.f32 %v556, %v624
    %v626 = vpop.f32.mrf.mxu0
    %627 = vmatprep.mubr.f32.mxu0 %v312
    %628 = vmatmul.mubr.f32.gmra.mxu0 %v311
    %v629 = vpop.f32.mrf.mxu0
    %v630 = vadd.f32 %v556, %v629
    %v631 = vpop.f32.mrf.mxu0
    %632 = vmatprep.mubr.f32.mxu0 %v320
    %633 = vmatmul.mubr.f32.gmra.mxu0 %v319
    %v634 = vpop.f32.mrf.mxu0
    %v635 = vadd.f32 %v556, %v634
    %v636 = vpop.f32.mrf.mxu0
    %637 = vmatprep.mubr.f32.mxu0 %v328
    %638 = vmatmul.mubr.f32.gmra.mxu0 %v327
    %v639 = vpop.f32.mrf.mxu0
    %v640 = vadd.f32 %v556, %v639
    %v641 = vpop.f32.mrf.mxu0
    %642 = vmatprep.mubr.f32.mxu0 %v336
    %643 = vmatmul.mubr.f32.gmra.mxu0 %v335
    %v644 = vpop.f32.mrf.mxu0
    %v645 = vadd.f32 %v556, %v644
    %v646 = vpop.f32.mrf.mxu0
    %647 = vmatprep.mubr.f32.mxu0 %v344
    %648 = vmatmul.mubr.f32.gmra.mxu0 %v343
    %v649 = vpop.f32.mrf.mxu0
    %v650 = vadd.f32 %v556, %v649
    %v651 = vpop.f32.mrf.mxu0
    %652 = vmatprep.mubr.f32.mxu0 %v352
    %653 = vmatmul.mubr.f32.gmra.mxu0 %v351
    %v654 = vpop.f32.mrf.mxu0
    %v655 = vadd.f32 %v556, %v654
    %v656 = vpop.f32.mrf.mxu0
    %657 = vmatprep.mubr.f32.mxu0 %v360
    %658 = vmatmul.mubr.f32.gmra.mxu0 %v359
    %v659 = vpop.f32.mrf.mxu0
    %v660 = vadd.f32 %v556, %v659
    %v661 = vpop.f32.mrf.mxu0
    %662 = vmatprep.mubr.f32.mxu0 %v368
    %663 = vmatmul.mubr.f32.gmra.mxu0 %v367
    %v664 = vpop.f32.mrf.mxu0
    %v665 = vadd.f32 %v556, %v664
    %v666 = vpop.f32.mrf.mxu0
    %667 = vmatprep.mubr.f32.mxu0 %v376
    %668 = vmatmul.mubr.f32.gmra.mxu0 %v375
    %v669 = vpop.f32.mrf.mxu0
    %v670 = vadd.f32 %v556, %v669
    %v671 = vpop.f32.mrf.mxu0
    %672 = vmatprep.mubr.f32.mxu0 %v384
    %673 = vmatmul.mubr.f32.gmra.mxu0 %v383
    %v674 = vpop.f32.mrf.mxu0
    %v675 = vadd.f32 %v556, %v674
    %v676 = vpop.f32.mrf.mxu0
    %677 = vmatprep.mubr.f32.mxu0 %v392
    %678 = vmatmul.mubr.f32.gmra.mxu0 %v391
    %v679 = vpop.f32.mrf.mxu0
    %v680 = vadd.f32 %v556, %v679
    %v681 = vpop.f32.mrf.mxu0
    %682 = vmatprep.mubr.f32.mxu0 %v400
    %683 = vmatmul.mubr.f32.gmra.mxu0 %v399
    %v684 = vpop.f32.mrf.mxu0
    %v685 = vadd.f32 %v556, %v684
    %v686 = vpop.f32.mrf.mxu0
    %687 = vmatprep.mubr.f32.mxu0 %v408
    %688 = vmatmul.mubr.f32.gmra.mxu0 %v407
    %v689 = vpop.f32.mrf.mxu0
    %v690 = vadd.f32 %v556, %v689
    %v691 = vpop.f32.mrf.mxu0
    %692 = vmatprep.mubr.f32.mxu0 %v416
    %693 = vmatmul.mubr.f32.gmra.mxu0 %v415
    %v694 = vpop.f32.mrf.mxu0
    %v695 = vadd.f32 %v556, %v694
    %v696 = vpop.f32.mrf.mxu0
    %697 = vdwg.mxu0
    %698 = vmatprep.subr.mxu0 0.0
    %699 = vmatpush1.msra.mxu0 %v470
    %700 = vmatprep.subr.mxu0 0.0
    %701 = vmatpush1.msra.mxu0 %v469
    %702 = vmatprep.subr.mxu0 0.0
    %703 = vmatpush1.msra.mxu0 %v468
    %704 = vmatprep.subr.mxu0 0.0
    %705 = vmatpush1.msra.mxu0 %v467
    %706 = vmatprep.subr.mxu0 0.0
    %707 = vmatpush1.msra.mxu0 %v466
    %708 = vmatprep.subr.mxu0 0.0
    %709 = vmatpush1.msra.mxu0 %v465
    %710 = vmatprep.subr.mxu0 0.0
    %711 = vmatpush1.msra.mxu0 %v464
    %712 = vmatprep.subr.mxu0 0.0
    %713 = vmatpush1.msra.mxu0 %v463
    %714 = vmatprep.subr.mxu0 0.0
    %715 = vmatpush1.msra.mxu0 %v462
    %716 = vmatprep.subr.mxu0 0.0
    %717 = vmatpush1.msra.mxu0 %v461
    %718 = vmatprep.subr.mxu0 0.0
    %719 = vmatpush1.msra.mxu0 %v460
    %720 = vmatprep.subr.mxu0 0.0
    %721 = vmatpush1.msra.mxu0 %v459
    %722 = vmatprep.subr.mxu0 0.0
    %723 = vmatpush1.msra.mxu0 %v458
    %724 = vmatprep.subr.mxu0 0.0
    %725 = vmatpush1.msra.mxu0 %v457
    %726 = vmatprep.subr.mxu0 0.0
    %727 = vmatpush1.msra.mxu0 %v456
    %728 = vmatprep.subr.mxu0 0.0
    %729 = vmatpush1.msra.mxu0 %v455
    %730 = vmatprep.subr.mxu0 0.0
    %731 = vmatpush2.msra.mxu0 %v486
    %732 = vmatprep.subr.mxu0 0.0
    %733 = vmatpush2.msra.mxu0 %v485
    %734 = vmatprep.subr.mxu0 0.0
    %735 = vmatpush2.msra.mxu0 %v484
    %736 = vmatprep.subr.mxu0 0.0
    %737 = vmatpush2.msra.mxu0 %v483
    %738 = vmatprep.subr.mxu0 0.0
    %739 = vmatpush2.msra.mxu0 %v482
    %740 = vmatprep.subr.mxu0 0.0
    %741 = vmatpush2.msra.mxu0 %v481
    %742 = vmatprep.subr.mxu0 0.0
    %743 = vmatpush2.msra.mxu0 %v480
    %744 = vmatprep.subr.mxu0 0.0
    %745 = vmatpush2.msra.mxu0 %v479
    %746 = vmatprep.subr.mxu0 0.0
    %747 = vmatpush2.msra.mxu0 %v478
    %748 = vmatprep.subr.mxu0 0.0
    %749 = vmatpush2.msra.mxu0 %v477
    %750 = vmatprep.subr.mxu0 0.0
    %751 = vmatpush2.msra.mxu0 %v476
    %752 = vmatprep.subr.mxu0 0.0
    %753 = vmatpush2.msra.mxu0 %v475
    %754 = vmatprep.subr.mxu0 0.0
    %755 = vmatpush2.msra.mxu0 %v474
    %756 = vmatprep.subr.mxu0 0.0
    %757 = vmatpush2.msra.mxu0 %v473
    %758 = vmatprep.subr.mxu0 0.0
    %759 = vmatpush2.msra.mxu0 %v472
    %760 = vmatprep.subr.mxu0 0.0
    %761 = vmatpush2.msra.mxu0 %v471
    %762 = vmatprep.mubr.f32.mxu0 %v306
    %763 = vmatmul.mubr.f32.gmra.mxu0 %v305
    %v764 = vpop.f32.mrf.mxu0
    %v765 = vadd.f32 %v625, %v764
    %v766 = vpop.f32.mrf.mxu0
    %767 = vmatprep.mubr.f32.mxu0 %v314
    %768 = vmatmul.mubr.f32.gmra.mxu0 %v313
    %v769 = vpop.f32.mrf.mxu0
    %v770 = vadd.f32 %v630, %v769
    %v771 = vpop.f32.mrf.mxu0
    %772 = vmatprep.mubr.f32.mxu0 %v322
    %773 = vmatmul.mubr.f32.gmra.mxu0 %v321
    %v774 = vpop.f32.mrf.mxu0
    %v775 = vadd.f32 %v635, %v774
    %v776 = vpop.f32.mrf.mxu0
    %777 = vmatprep.mubr.f32.mxu0 %v330
    %778 = vmatmul.mubr.f32.gmra.mxu0 %v329
    %v779 = vpop.f32.mrf.mxu0
    %v780 = vadd.f32 %v640, %v779
    %v781 = vpop.f32.mrf.mxu0
    %782 = vmatprep.mubr.f32.mxu0 %v338
    %783 = vmatmul.mubr.f32.gmra.mxu0 %v337
    %v784 = vpop.f32.mrf.mxu0
    %v785 = vadd.f32 %v645, %v784
    %v786 = vpop.f32.mrf.mxu0
    %787 = vmatprep.mubr.f32.mxu0 %v346
    %788 = vmatmul.mubr.f32.gmra.mxu0 %v345
    %v789 = vpop.f32.mrf.mxu0
    %v790 = vadd.f32 %v650, %v789
    %v791 = vpop.f32.mrf.mxu0
    %792 = vmatprep.mubr.f32.mxu0 %v354
    %793 = vmatmul.mubr.f32.gmra.mxu0 %v353
    %v794 = vpop.f32.mrf.mxu0
    %v795 = vadd.f32 %v655, %v794
    %v796 = vpop.f32.mrf.mxu0
    %797 = vmatprep.mubr.f32.mxu0 %v362
    %798 = vmatmul.mubr.f32.gmra.mxu0 %v361
    %v799 = vpop.f32.mrf.mxu0
    %v800 = vadd.f32 %v660, %v799
    %v801 = vpop.f32.mrf.mxu0
    %802 = vmatprep.mubr.f32.mxu0 %v370
    %803 = vmatmul.mubr.f32.gmra.mxu0 %v369
    %v804 = vpop.f32.mrf.mxu0
    %v805 = vadd.f32 %v665, %v804
    %v806 = vpop.f32.mrf.mxu0
    %807 = vmatprep.mubr.f32.mxu0 %v378
    %808 = vmatmul.mubr.f32.gmra.mxu0 %v377
    %v809 = vpop.f32.mrf.mxu0
    %v810 = vadd.f32 %v670, %v809
    %v811 = vpop.f32.mrf.mxu0
    %812 = vmatprep.mubr.f32.mxu0 %v386
    %813 = vmatmul.mubr.f32.gmra.mxu0 %v385
    %v814 = vpop.f32.mrf.mxu0
    %v815 = vadd.f32 %v675, %v814
    %v816 = vpop.f32.mrf.mxu0
    %817 = vmatprep.mubr.f32.mxu0 %v394
    %818 = vmatmul.mubr.f32.gmra.mxu0 %v393
    %v819 = vpop.f32.mrf.mxu0
    %v820 = vadd.f32 %v680, %v819
    %v821 = vpop.f32.mrf.mxu0
    %822 = vmatprep.mubr.f32.mxu0 %v402
    %823 = vmatmul.mubr.f32.gmra.mxu0 %v401
    %v824 = vpop.f32.mrf.mxu0
    %v825 = vadd.f32 %v685, %v824
    %v826 = vpop.f32.mrf.mxu0
    %827 = vmatprep.mubr.f32.mxu0 %v410
    %828 = vmatmul.mubr.f32.gmra.mxu0 %v409
    %v829 = vpop.f32.mrf.mxu0
    %v830 = vadd.f32 %v690, %v829
    %v831 = vpop.f32.mrf.mxu0
    %832 = vmatprep.mubr.f32.mxu0 %v418
    %833 = vmatmul.mubr.f32.gmra.mxu0 %v417
    %v834 = vpop.f32.mrf.mxu0
    %v835 = vadd.f32 %v695, %v834
    %v836 = vpop.f32.mrf.mxu0
    %837 = vdwg.mxu0
    %838 = vmatprep.subr.mxu0 0.0
    %839 = vmatpush1.msra.mxu0 %v502
    %840 = vmatprep.subr.mxu0 0.0
    %841 = vmatpush1.msra.mxu0 %v501
    %842 = vmatprep.subr.mxu0 0.0
    %843 = vmatpush1.msra.mxu0 %v500
    %844 = vmatprep.subr.mxu0 0.0
    %845 = vmatpush1.msra.mxu0 %v499
    %846 = vmatprep.subr.mxu0 0.0
    %847 = vmatpush1.msra.mxu0 %v498
    %848 = vmatprep.subr.mxu0 0.0
    %849 = vmatpush1.msra.mxu0 %v497
    %850 = vmatprep.subr.mxu0 0.0
    %851 = vmatpush1.msra.mxu0 %v496
    %852 = vmatprep.subr.mxu0 0.0
    %853 = vmatpush1.msra.mxu0 %v495
    %854 = vmatprep.subr.mxu0 0.0
    %855 = vmatpush1.msra.mxu0 %v494
    %856 = vmatprep.subr.mxu0 0.0
    %857 = vmatpush1.msra.mxu0 %v493
    %858 = vmatprep.subr.mxu0 0.0
    %859 = vmatpush1.msra.mxu0 %v492
    %860 = vmatprep.subr.mxu0 0.0
    %861 = vmatpush1.msra.mxu0 %v491
    %862 = vmatprep.subr.mxu0 0.0
    %863 = vmatpush1.msra.mxu0 %v490
    %864 = vmatprep.subr.mxu0 0.0
    %865 = vmatpush1.msra.mxu0 %v489
    %866 = vmatprep.subr.mxu0 0.0
    %867 = vmatpush1.msra.mxu0 %v488
    %868 = vmatprep.subr.mxu0 0.0
    %869 = vmatpush1.msra.mxu0 %v487
    %870 = vmatprep.subr.mxu0 0.0
    %871 = vmatpush2.msra.mxu0 %v518
    %872 = vmatprep.subr.mxu0 0.0
    %873 = vmatpush2.msra.mxu0 %v517
    %874 = vmatprep.subr.mxu0 0.0
    %875 = vmatpush2.msra.mxu0 %v516
    %876 = vmatprep.subr.mxu0 0.0
    %877 = vmatpush2.msra.mxu0 %v515
    %878 = vmatprep.subr.mxu0 0.0
    %879 = vmatpush2.msra.mxu0 %v514
    %880 = vmatprep.subr.mxu0 0.0
    %881 = vmatpush2.msra.mxu0 %v513
    %882 = vmatprep.subr.mxu0 0.0
    %883 = vmatpush2.msra.mxu0 %v512
    %884 = vmatprep.subr.mxu0 0.0
    %885 = vmatpush2.msra.mxu0 %v511
    %886 = vmatprep.subr.mxu0 0.0
    %887 = vmatpush2.msra.mxu0 %v510
    %888 = vmatprep.subr.mxu0 0.0
    %889 = vmatpush2.msra.mxu0 %v509
    %890 = vmatprep.subr.mxu0 0.0
    %891 = vmatpush2.msra.mxu0 %v508
    %892 = vmatprep.subr.mxu0 0.0
    %893 = vmatpush2.msra.mxu0 %v507
    %894 = vmatprep.subr.mxu0 0.0
    %895 = vmatpush2.msra.mxu0 %v506
    %896 = vmatprep.subr.mxu0 0.0
    %897 = vmatpush2.msra.mxu0 %v505
    %898 = vmatprep.subr.mxu0 0.0
    %899 = vmatpush2.msra.mxu0 %v504
    %900 = vmatprep.subr.mxu0 0.0
    %901 = vmatpush2.msra.mxu0 %v503
    %902 = vmatprep.mubr.f32.mxu0 %v308
    %903 = vmatmul.mubr.f32.gmra.mxu0 %v307
    %v904 = vpop.f32.mrf.mxu0
    %v905 = vadd.f32 %v765, %v904
    %v906 = vpop.f32.mrf.mxu0
    %907 = vmatprep.mubr.f32.mxu0 %v316
    %908 = vmatmul.mubr.f32.gmra.mxu0 %v315
    %v909 = vpop.f32.mrf.mxu0
    %v910 = vadd.f32 %v770, %v909
    %v911 = vpop.f32.mrf.mxu0
    %912 = vmatprep.mubr.f32.mxu0 %v324
    %913 = vmatmul.mubr.f32.gmra.mxu0 %v323
    %v914 = vpop.f32.mrf.mxu0
    %v915 = vadd.f32 %v775, %v914
    %v916 = vpop.f32.mrf.mxu0
    %917 = vmatprep.mubr.f32.mxu0 %v332
    %918 = vmatmul.mubr.f32.gmra.mxu0 %v331
    %v919 = vpop.f32.mrf.mxu0
    %v920 = vadd.f32 %v780, %v919
    %v921 = vpop.f32.mrf.mxu0
    %922 = vmatprep.mubr.f32.mxu0 %v340
    %923 = vmatmul.mubr.f32.gmra.mxu0 %v339
    %v924 = vpop.f32.mrf.mxu0
    %v925 = vadd.f32 %v785, %v924
    %v926 = vpop.f32.mrf.mxu0
    %927 = vmatprep.mubr.f32.mxu0 %v348
    %928 = vmatmul.mubr.f32.gmra.mxu0 %v347
    %v929 = vpop.f32.mrf.mxu0
    %v930 = vadd.f32 %v790, %v929
    %v931 = vpop.f32.mrf.mxu0
    %932 = vmatprep.mubr.f32.mxu0 %v356
    %933 = vmatmul.mubr.f32.gmra.mxu0 %v355
    %v934 = vpop.f32.mrf.mxu0
    %v935 = vadd.f32 %v795, %v934
    %v936 = vpop.f32.mrf.mxu0
    %937 = vmatprep.mubr.f32.mxu0 %v364
    %938 = vmatmul.mubr.f32.gmra.mxu0 %v363
    %v939 = vpop.f32.mrf.mxu0
    %v940 = vadd.f32 %v800, %v939
    %v941 = vpop.f32.mrf.mxu0
    %942 = vmatprep.mubr.f32.mxu0 %v372
    %943 = vmatmul.mubr.f32.gmra.mxu0 %v371
    %v944 = vpop.f32.mrf.mxu0
    %v945 = vadd.f32 %v805, %v944
    %v946 = vpop.f32.mrf.mxu0
    %947 = vmatprep.mubr.f32.mxu0 %v380
    %948 = vmatmul.mubr.f32.gmra.mxu0 %v379
    %v949 = vpop.f32.mrf.mxu0
    %v950 = vadd.f32 %v810, %v949
    %v951 = vpop.f32.mrf.mxu0
    %952 = vmatprep.mubr.f32.mxu0 %v388
    %953 = vmatmul.mubr.f32.gmra.mxu0 %v387
    %v954 = vpop.f32.mrf.mxu0
    %v955 = vadd.f32 %v815, %v954
    %v956 = vpop.f32.mrf.mxu0
    %957 = vmatprep.mubr.f32.mxu0 %v396
    %958 = vmatmul.mubr.f32.gmra.mxu0 %v395
    %v959 = vpop.f32.mrf.mxu0
    %v960 = vadd.f32 %v820, %v959
    %v961 = vpop.f32.mrf.mxu0
    %962 = vmatprep.mubr.f32.mxu0 %v404
    %963 = vmatmul.mubr.f32.gmra.mxu0 %v403
    %v964 = vpop.f32.mrf.mxu0
    %v965 = vadd.f32 %v825, %v964
    %v966 = vpop.f32.mrf.mxu0
    %967 = vmatprep.mubr.f32.mxu0 %v412
    %968 = vmatmul.mubr.f32.gmra.mxu0 %v411
    %v969 = vpop.f32.mrf.mxu0
    %v970 = vadd.f32 %v830, %v969
    %v971 = vpop.f32.mrf.mxu0
    %972 = vmatprep.mubr.f32.mxu0 %v420
    %973 = vmatmul.mubr.f32.gmra.mxu0 %v419
    %v974 = vpop.f32.mrf.mxu0
    %v975 = vadd.f32 %v835, %v974
    %v976 = vpop.f32.mrf.mxu0
    %977 = vdwg.mxu0
    %978 = vmatprep.subr.mxu0 0.0
    %979 = vmatpush1.msra.mxu0 %v534
    %980 = vmatprep.subr.mxu0 0.0
    %981 = vmatpush1.msra.mxu0 %v533
    %982 = vmatprep.subr.mxu0 0.0
    %983 = vmatpush1.msra.mxu0 %v532
    %984 = vmatprep.subr.mxu0 0.0
    %985 = vmatpush1.msra.mxu0 %v531
    %986 = vmatprep.subr.mxu0 0.0
    %987 = vmatpush1.msra.mxu0 %v530
    %988 = vmatprep.subr.mxu0 0.0
    %989 = vmatpush1.msra.mxu0 %v529
    %990 = vmatprep.subr.mxu0 0.0
    %991 = vmatpush1.msra.mxu0 %v528
    %992 = vmatprep.subr.mxu0 0.0
    %993 = vmatpush1.msra.mxu0 %v527
    %994 = vmatprep.subr.mxu0 0.0
    %995 = vmatpush1.msra.mxu0 %v526
    %996 = vmatprep.subr.mxu0 0.0
    %997 = vmatpush1.msra.mxu0 %v525
    %998 = vmatprep.subr.mxu0 0.0
    %999 = vmatpush1.msra.mxu0 %v524
    %1000 = vmatprep.subr.mxu0 0.0
    %1001 = vmatpush1.msra.mxu0 %v523
    %1002 = vmatprep.subr.mxu0 0.0
    %1003 = vmatpush1.msra.mxu0 %v522
    %1004 = vmatprep.subr.mxu0 0.0
    %1005 = vmatpush1.msra.mxu0 %v521
    %1006 = vmatprep.subr.mxu0 0.0
    %1007 = vmatpush1.msra.mxu0 %v520
    %1008 = vmatprep.subr.mxu0 0.0
    %1009 = vmatpush1.msra.mxu0 %v519
    %1010 = vmatprep.subr.mxu0 0.0
    %1011 = vmatpush2.msra.mxu0 %v550
    %1012 = vmatprep.subr.mxu0 0.0
    %1013 = vmatpush2.msra.mxu0 %v549
    %1014 = vmatprep.subr.mxu0 0.0
    %1015 = vmatpush2.msra.mxu0 %v548
    %1016 = vmatprep.subr.mxu0 0.0
    %1017 = vmatpush2.msra.mxu0 %v547
    %1018 = vmatprep.subr.mxu0 0.0
    %1019 = vmatpush2.msra.mxu0 %v546
    %1020 = vmatprep.subr.mxu0 0.0
    %1021 = vmatpush2.msra.mxu0 %v545
    %1022 = vmatprep.subr.mxu0 0.0
    %1023 = vmatpush2.msra.mxu0 %v544
    %1024 = vmatprep.subr.mxu0 0.0
    %1025 = vmatpush2.msra.mxu0 %v543
    %1026 = vmatprep.subr.mxu0 0.0
    %1027 = vmatpush2.msra.mxu0 %v542
    %1028 = vmatprep.subr.mxu0 0.0
    %1029 = vmatpush2.msra.mxu0 %v541
    %1030 = vmatprep.subr.mxu0 0.0
    %1031 = vmatpush2.msra.mxu0 %v540
    %1032 = vmatprep.subr.mxu0 0.0
    %1033 = vmatpush2.msra.mxu0 %v539
    %1034 = vmatprep.subr.mxu0 0.0
    %1035 = vmatpush2.msra.mxu0 %v538
    %1036 = vmatprep.subr.mxu0 0.0
    %1037 = vmatpush2.msra.mxu0 %v537
    %1038 = vmatprep.subr.mxu0 0.0
    %1039 = vmatpush2.msra.mxu0 %v536
    %1040 = vmatprep.subr.mxu0 0.0
    %1041 = vmatpush2.msra.mxu0 %v535
    %1042 = vmatprep.mubr.f32.mxu0 %v310
    %1043 = vmatmul.mubr.f32.gmra.mxu0 %v309
    %v1044 = vpop.f32.mrf.mxu0
    %v1045 = vadd.f32 %v905, %v1044
    %v1046 = vpop.f32.mrf.mxu0
    %1047 = vmatprep.mubr.f32.mxu0 %v318
    %1048 = vmatmul.mubr.f32.gmra.mxu0 %v317
    %v1049 = vpop.f32.mrf.mxu0
    %v1050 = vadd.f32 %v910, %v1049
    %v1051 = vpop.f32.mrf.mxu0
    %1052 = vmatprep.mubr.f32.mxu0 %v326
    %1053 = vmatmul.mubr.f32.gmra.mxu0 %v325
    %v1054 = vpop.f32.mrf.mxu0
    %v1055 = vadd.f32 %v915, %v1054
    %v1056 = vpop.f32.mrf.mxu0
    %1057 = vmatprep.mubr.f32.mxu0 %v334
    %1058 = vmatmul.mubr.f32.gmra.mxu0 %v333
    %v1059 = vpop.f32.mrf.mxu0
    %v1060 = vadd.f32 %v920, %v1059
    %v1061 = vpop.f32.mrf.mxu0
    %1062 = vmatprep.mubr.f32.mxu0 %v342
    %1063 = vmatmul.mubr.f32.gmra.mxu0 %v341
    %v1064 = vpop.f32.mrf.mxu0
    %v1065 = vadd.f32 %v925, %v1064
    %v1066 = vpop.f32.mrf.mxu0
    %1067 = vmatprep.mubr.f32.mxu0 %v350
    %1068 = vmatmul.mubr.f32.gmra.mxu0 %v349
    %v1069 = vpop.f32.mrf.mxu0
    %v1070 = vadd.f32 %v930, %v1069
    %v1071 = vpop.f32.mrf.mxu0
    %1072 = vmatprep.mubr.f32.mxu0 %v358
    %1073 = vmatmul.mubr.f32.gmra.mxu0 %v357
    %v1074 = vpop.f32.mrf.mxu0
    %v1075 = vadd.f32 %v935, %v1074
    %v1076 = vpop.f32.mrf.mxu0
    %1077 = vmatprep.mubr.f32.mxu0 %v366
    %1078 = vmatmul.mubr.f32.gmra.mxu0 %v365
    %v1079 = vpop.f32.mrf.mxu0
    %v1080 = vadd.f32 %v940, %v1079
    %v1081 = vpop.f32.mrf.mxu0
    %1082 = vmatprep.mubr.f32.mxu0 %v374
    %1083 = vmatmul.mubr.f32.gmra.mxu0 %v373
    %v1084 = vpop.f32.mrf.mxu0
    %v1085 = vadd.f32 %v945, %v1084
    %v1086 = vpop.f32.mrf.mxu0
    %1087 = vmatprep.mubr.f32.mxu0 %v382
    %1088 = vmatmul.mubr.f32.gmra.mxu0 %v381
    %v1089 = vpop.f32.mrf.mxu0
    %v1090 = vadd.f32 %v950, %v1089
    %v1091 = vpop.f32.mrf.mxu0
    %1092 = vmatprep.mubr.f32.mxu0 %v390
    %1093 = vmatmul.mubr.f32.gmra.mxu0 %v389
    %v1094 = vpop.f32.mrf.mxu0
    %v1095 = vadd.f32 %v955, %v1094
    %v1096 = vpop.f32.mrf.mxu0
    %1097 = vmatprep.mubr.f32.mxu0 %v398
    %1098 = vmatmul.mubr.f32.gmra.mxu0 %v397
    %v1099 = vpop.f32.mrf.mxu0
    %v1100 = vadd.f32 %v960, %v1099
    %v1101 = vpop.f32.mrf.mxu0
    %1102 = vmatprep.mubr.f32.mxu0 %v406
    %1103 = vmatmul.mubr.f32.gmra.mxu0 %v405
    %v1104 = vpop.f32.mrf.mxu0
    %v1105 = vadd.f32 %v965, %v1104
    %v1106 = vpop.f32.mrf.mxu0
    %1107 = vmatprep.mubr.f32.mxu0 %v414
    %1108 = vmatmul.mubr.f32.gmra.mxu0 %v413
    %v1109 = vpop.f32.mrf.mxu0
    %v1110 = vadd.f32 %v970, %v1109
    %v1111 = vpop.f32.mrf.mxu0
    %1112 = vmatprep.mubr.f32.mxu0 %v422
    %1113 = vmatmul.mubr.f32.gmra.mxu0 %v421
    %v1114 = vpop.f32.mrf.mxu0
    %v1115 = vadd.f32 %v975, %v1114
    %v1116 = vpop.f32.mrf.mxu0
    %1117 = vdwg.mxu0
    %v1118 = vmax.f32 %v1045, 0.0
    %v1119 = vmax.f32 %v1050, 0.0
    %v1120 = vmax.f32 %v1055, 0.0
    %v1121 = vmax.f32 %v1060, 0.0
    %v1122 = vmax.f32 %v1065, 0.0
    %v1123 = vmax.f32 %v1070, 0.0
    %v1124 = vmax.f32 %v1075, 0.0
    %v1125 = vmax.f32 %v1080, 0.0
    %v1126 = vmax.f32 %v1085, 0.0
    %v1127 = vmax.f32 %v1090, 0.0
    %v1128 = vmax.f32 %v1095, 0.0
    %v1129 = vmax.f32 %v1100, 0.0
    %v1130 = vmax.f32 %v1105, 0.0
    %v1131 = vmax.f32 %v1110, 0.0
    %v1132 = vmax.f32 %v1115, 0.0
    %v1133 = vld [vmem:[%s5] sm:$0xff]
    %v1134 = vld [vmem:[%s5 + $0x8] sm:$0xff]
    %v1135 = vld [vmem:[%s5 + $0x10] sm:$0xff]
    %v1136 = vld [vmem:[%s5 + $0x18] sm:$0xff]
    %v1137 = vld [vmem:[%s5 + $0x20] sm:$0xff]
    %v1138 = vld [vmem:[%s5 + $0x28] sm:$0xff]
    %v1139 = vld [vmem:[%s5 + $0x30] sm:$0xff]
    %v1140 = vld [vmem:[%s5 + $0x38] sm:$0xff]
    %v1141 = vld [vmem:[%s5 + $0x40] sm:$0xff]
    %v1142 = vld [vmem:[%s5 + $0x48] sm:$0xff]
    %v1143 = vld [vmem:[%s5 + $0x50] sm:$0xff]
    %v1144 = vld [vmem:[%s5 + $0x58] sm:$0xff]
    %v1145 = vld [vmem:[%s6] sm:$0x1]
    %v1147 = vlaneseq
    %v1148 = vshrl.u32 %v1147, 7
    %v1149 = vsub.s32 0, %v1148
    %v1150 = vrot.slane %v1145, %v1149
    %vm1152 = vcmask 785408
    %v1154 = vsel %vm1152, %v1118, 0
    %v1157 = vsel %vm1152, %v1119, 0
    %v1160 = vsel %vm1152, %v1120, 0
    %v1163 = vsel %vm1152, %v1121, 0
    %v1166 = vsel %vm1152, %v1122, 0
    %v1169 = vsel %vm1152, %v1123, 0
    %v1172 = vsel %vm1152, %v1124, 0
    %v1175 = vsel %vm1152, %v1125, 0
    %v1178 = vsel %vm1152, %v1126, 0
    %v1181 = vsel %vm1152, %v1127, 0
    %v1184 = vsel %vm1152, %v1128, 0
    %v1187 = vsel %vm1152, %v1129, 0
    %v1190 = vsel %vm1152, %v1130, 0
    %v1193 = vsel %vm1152, %v1131, 0
    %v1196 = vsel %vm1152, %v1132, 0
    %1198 = vmatprep.subr.mxu0 0.0
    %1199 = vmatpush1.msra.mxu0 0.0
    %1200 = vmatprep.subr.mxu0 0.0
    %1201 = vmatpush1.msra.mxu0 0.0
    %1202 = vmatprep.subr.mxu0 0.0
    %1203 = vmatpush1.msra.mxu0 0.0
    %1204 = vmatprep.subr.mxu0 0.0
    %1205 = vmatpush1.msra.mxu0 0.0
    %1206 = vmatprep.subr.mxu0 0.0
    %1207 = vmatpush1.msra.mxu0 %v1144
    %1208 = vmatprep.subr.mxu0 0.0
    %1209 = vmatpush1.msra.mxu0 %v1143
    %1210 = vmatprep.subr.mxu0 0.0
    %1211 = vmatpush1.msra.mxu0 %v1142
    %1212 = vmatprep.subr.mxu0 0.0
    %1213 = vmatpush1.msra.mxu0 %v1141
    %1214 = vmatprep.subr.mxu0 0.0
    %1215 = vmatpush1.msra.mxu0 %v1140
    %1216 = vmatprep.subr.mxu0 0.0
    %1217 = vmatpush1.msra.mxu0 %v1139
    %1218 = vmatprep.subr.mxu0 0.0
    %1219 = vmatpush1.msra.mxu0 %v1138
    %1220 = vmatprep.subr.mxu0 0.0
    %1221 = vmatpush1.msra.mxu0 %v1137
    %1222 = vmatprep.subr.mxu0 0.0
    %1223 = vmatpush1.msra.mxu0 %v1136
    %1224 = vmatprep.subr.mxu0 0.0
    %1225 = vmatpush1.msra.mxu0 %v1135
    %1226 = vmatprep.subr.mxu0 0.0
    %1227 = vmatpush1.msra.mxu0 %v1134
    %1228 = vmatprep.subr.mxu0 0.0
    %1229 = vmatpush1.msra.mxu0 %v1133
    %1230 = vmatprep.subr.mxu0 0.0
    %1231 = vmatpush2.msra.mxu0 0.0
    %1232 = vmatprep.subr.mxu0 0.0
    %1233 = vmatpush2.msra.mxu0 0.0
    %1234 = vmatprep.subr.mxu0 0.0
    %1235 = vmatpush2.msra.mxu0 0.0
    %1236 = vmatprep.subr.mxu0 0.0
    %1237 = vmatpush2.msra.mxu0 0.0
    %1238 = vmatprep.subr.mxu0 0.0
    %1239 = vmatpush2.msra.mxu0 0.0
    %1240 = vmatprep.subr.mxu0 0.0
    %1241 = vmatpush2.msra.mxu0 0.0
    %1242 = vmatprep.subr.mxu0 0.0
    %1243 = vmatpush2.msra.mxu0 0.0
    %1244 = vmatprep.subr.mxu0 0.0
    %1245 = vmatpush2.msra.mxu0 0.0
    %1246 = vmatprep.subr.mxu0 0.0
    %1247 = vmatpush2.msra.mxu0 0.0
    %1248 = vmatprep.subr.mxu0 0.0
    %1249 = vmatpush2.msra.mxu0 0.0
    %1250 = vmatprep.subr.mxu0 0.0
    %1251 = vmatpush2.msra.mxu0 0.0
    %1252 = vmatprep.subr.mxu0 0.0
    %1253 = vmatpush2.msra.mxu0 0.0
    %1254 = vmatprep.subr.mxu0 0.0
    %1255 = vmatpush2.msra.mxu0 0.0
    %1256 = vmatprep.subr.mxu0 0.0
    %1257 = vmatpush2.msra.mxu0 0.0
    %1258 = vmatprep.subr.mxu0 0.0
    %1259 = vmatpush2.msra.mxu0 0.0
    %1260 = vmatprep.subr.mxu0 0.0
    %1261 = vmatpush2.msra.mxu0 0.0
    %1262 = vmatprep.mubr.f32.mxu0 0.0
    %1263 = vmatmul.mubr.f32.gmra.mxu0 %v1154
    %v1264 = vpop.f32.mrf.mxu0
    %v1265 = vadd.f32 %v1150, %v1264
    %v1266 = vpop.f32.mrf.mxu0
    %1267 = vmatprep.mubr.f32.mxu0 0.0
    %1268 = vmatmul.mubr.f32.gmra.mxu0 %v1157
    %v1269 = vpop.f32.mrf.mxu0
    %v1270 = vadd.f32 %v1150, %v1269
    %v1271 = vpop.f32.mrf.mxu0
    %1272 = vmatprep.mubr.f32.mxu0 0.0
    %1273 = vmatmul.mubr.f32.gmra.mxu0 %v1160
    %v1274 = vpop.f32.mrf.mxu0
    %v1275 = vadd.f32 %v1150, %v1274
    %v1276 = vpop.f32.mrf.mxu0
    %1277 = vmatprep.mubr.f32.mxu0 0.0
    %1278 = vmatmul.mubr.f32.gmra.mxu0 %v1163
    %v1279 = vpop.f32.mrf.mxu0
    %v1280 = vadd.f32 %v1150, %v1279
    %v1281 = vpop.f32.mrf.mxu0
    %1282 = vmatprep.mubr.f32.mxu0 0.0
    %1283 = vmatmul.mubr.f32.gmra.mxu0 %v1166
    %v1284 = vpop.f32.mrf.mxu0
    %v1285 = vadd.f32 %v1150, %v1284
    %v1286 = vpop.f32.mrf.mxu0
    %1287 = vmatprep.mubr.f32.mxu0 0.0
    %1288 = vmatmul.mubr.f32.gmra.mxu0 %v1169
    %v1289 = vpop.f32.mrf.mxu0
    %v1290 = vadd.f32 %v1150, %v1289
    %v1291 = vpop.f32.mrf.mxu0
    %1292 = vmatprep.mubr.f32.mxu0 0.0
    %1293 = vmatmul.mubr.f32.gmra.mxu0 %v1172
    %v1294 = vpop.f32.mrf.mxu0
    %v1295 = vadd.f32 %v1150, %v1294
    %v1296 = vpop.f32.mrf.mxu0
    %1297 = vmatprep.mubr.f32.mxu0 0.0
    %1298 = vmatmul.mubr.f32.gmra.mxu0 %v1175
    %v1299 = vpop.f32.mrf.mxu0
    %v1300 = vadd.f32 %v1150, %v1299
    %v1301 = vpop.f32.mrf.mxu0
    %1302 = vmatprep.mubr.f32.mxu0 0.0
    %1303 = vmatmul.mubr.f32.gmra.mxu0 %v1178
    %v1304 = vpop.f32.mrf.mxu0
    %v1305 = vadd.f32 %v1150, %v1304
    %v1306 = vpop.f32.mrf.mxu0
    %1307 = vmatprep.mubr.f32.mxu0 0.0
    %1308 = vmatmul.mubr.f32.gmra.mxu0 %v1181
    %v1309 = vpop.f32.mrf.mxu0
    %v1310 = vadd.f32 %v1150, %v1309
    %v1311 = vpop.f32.mrf.mxu0
    %1312 = vmatprep.mubr.f32.mxu0 0.0
    %1313 = vmatmul.mubr.f32.gmra.mxu0 %v1184
    %v1314 = vpop.f32.mrf.mxu0
    %v1315 = vadd.f32 %v1150, %v1314
    %v1316 = vpop.f32.mrf.mxu0
    %1317 = vmatprep.mubr.f32.mxu0 0.0
    %1318 = vmatmul.mubr.f32.gmra.mxu0 %v1187
    %v1319 = vpop.f32.mrf.mxu0
    %v1320 = vadd.f32 %v1150, %v1319
    %v1321 = vpop.f32.mrf.mxu0
    %1322 = vmatprep.mubr.f32.mxu0 0.0
    %1323 = vmatmul.mubr.f32.gmra.mxu0 %v1190
    %v1324 = vpop.f32.mrf.mxu0
    %v1325 = vadd.f32 %v1150, %v1324
    %v1326 = vpop.f32.mrf.mxu0
    %1327 = vmatprep.mubr.f32.mxu0 0.0
    %1328 = vmatmul.mubr.f32.gmra.mxu0 %v1193
    %v1329 = vpop.f32.mrf.mxu0
    %v1330 = vadd.f32 %v1150, %v1329
    %v1331 = vpop.f32.mrf.mxu0
    %1332 = vmatprep.mubr.f32.mxu0 0.0
    %1333 = vmatmul.mubr.f32.gmra.mxu0 %v1196
    %v1334 = vpop.f32.mrf.mxu0
    %v1335 = vadd.f32 %v1150, %v1334
    %v1336 = vpop.f32.mrf.mxu0
    %1337 = vdwg.mxu0
    %v1338 = vmax.f32 %v1265, 0.0
    %v1339 = vmax.f32 %v1270, 0.0
    %v1340 = vmax.f32 %v1275, 0.0
    %v1341 = vmax.f32 %v1280, 0.0
    %v1342 = vmax.f32 %v1285, 0.0
    %v1343 = vmax.f32 %v1290, 0.0
    %v1344 = vmax.f32 %v1295, 0.0
    %v1345 = vmax.f32 %v1300, 0.0
    %v1346 = vmax.f32 %v1305, 0.0
    %v1347 = vmax.f32 %v1310, 0.0
    %v1348 = vmax.f32 %v1315, 0.0
    %v1349 = vmax.f32 %v1320, 0.0
    %v1350 = vmax.f32 %v1325, 0.0
    %v1351 = vmax.f32 %v1330, 0.0
    %v1352 = vmax.f32 %v1335, 0.0
    %v1353 = vld [vmem:[%s11] sm:$0xff]
    %v1354 = vld [vmem:[%s11 + $0x8] sm:$0xff]
    %v1355 = vld [vmem:[%s11 + $0x10] sm:$0xff]
    %v1356 = vld [vmem:[%s11 + $0x18] sm:$0xff]
    %v1357 = vld [vmem:[#allocation2] sm:$0x1]
    %v1359 = vlaneseq
    %v1360 = vshrl.u32 %v1359, 7
    %v1361 = vsub.s32 0, %v1360
    %v1362 = vrot.slane %v1357, %v1361
    %vm1364 = vcmask 261120
    %v1366 = vsel %vm1364, %v1338, 0
    %v1369 = vsel %vm1364, %v1339, 0
    %v1372 = vsel %vm1364, %v1340, 0
    %v1375 = vsel %vm1364, %v1341, 0
    %v1378 = vsel %vm1364, %v1342, 0
    %v1381 = vsel %vm1364, %v1343, 0
    %v1384 = vsel %vm1364, %v1344, 0
    %v1387 = vsel %vm1364, %v1345, 0
    %v1390 = vsel %vm1364, %v1346, 0
    %v1393 = vsel %vm1364, %v1347, 0
    %v1396 = vsel %vm1364, %v1348, 0
    %v1399 = vsel %vm1364, %v1349, 0
    %v1402 = vsel %vm1364, %v1350, 0
    %v1405 = vsel %vm1364, %v1351, 0
    %v1408 = vsel %vm1364, %v1352, 0
    %1410 = vmatprep.subr.mxu0 0.0
    %1411 = vmatpush1.msra.mxu0 0.0
    %1412 = vmatprep.subr.mxu0 0.0
    %1413 = vmatpush1.msra.mxu0 0.0
    %1414 = vmatprep.subr.mxu0 0.0
    %1415 = vmatpush1.msra.mxu0 0.0
    %1416 = vmatprep.subr.mxu0 0.0
    %1417 = vmatpush1.msra.mxu0 0.0
    %1418 = vmatprep.subr.mxu0 0.0
    %1419 = vmatpush1.msra.mxu0 0.0
    %1420 = vmatprep.subr.mxu0 0.0
    %1421 = vmatpush1.msra.mxu0 0.0
    %1422 = vmatprep.subr.mxu0 0.0
    %1423 = vmatpush1.msra.mxu0 0.0
    %1424 = vmatprep.subr.mxu0 0.0
    %1425 = vmatpush1.msra.mxu0 0.0
    %1426 = vmatprep.subr.mxu0 0.0
    %1427 = vmatpush1.msra.mxu0 0.0
    %1428 = vmatprep.subr.mxu0 0.0
    %1429 = vmatpush1.msra.mxu0 0.0
    %1430 = vmatprep.subr.mxu0 0.0
    %1431 = vmatpush1.msra.mxu0 0.0
    %1432 = vmatprep.subr.mxu0 0.0
    %1433 = vmatpush1.msra.mxu0 0.0
    %1434 = vmatprep.subr.mxu0 0.0
    %1435 = vmatpush1.msra.mxu0 %v1356
    %1436 = vmatprep.subr.mxu0 0.0
    %1437 = vmatpush1.msra.mxu0 %v1355
    %1438 = vmatprep.subr.mxu0 0.0
    %1439 = vmatpush1.msra.mxu0 %v1354
    %1440 = vmatprep.subr.mxu0 0.0
    %1441 = vmatpush1.msra.mxu0 %v1353
    %1442 = vmatprep.subr.mxu0 0.0
    %1443 = vmatpush2.msra.mxu0 0.0
    %1444 = vmatprep.subr.mxu0 0.0
    %1445 = vmatpush2.msra.mxu0 0.0
    %1446 = vmatprep.subr.mxu0 0.0
    %1447 = vmatpush2.msra.mxu0 0.0
    %1448 = vmatprep.subr.mxu0 0.0
    %1449 = vmatpush2.msra.mxu0 0.0
    %1450 = vmatprep.subr.mxu0 0.0
    %1451 = vmatpush2.msra.mxu0 0.0
    %1452 = vmatprep.subr.mxu0 0.0
    %1453 = vmatpush2.msra.mxu0 0.0
    %1454 = vmatprep.subr.mxu0 0.0
    %1455 = vmatpush2.msra.mxu0 0.0
    %1456 = vmatprep.subr.mxu0 0.0
    %1457 = vmatpush2.msra.mxu0 0.0
    %1458 = vmatprep.subr.mxu0 0.0
    %1459 = vmatpush2.msra.mxu0 0.0
    %1460 = vmatprep.subr.mxu0 0.0
    %1461 = vmatpush2.msra.mxu0 0.0
    %1462 = vmatprep.subr.mxu0 0.0
    %1463 = vmatpush2.msra.mxu0 0.0
    %1464 = vmatprep.subr.mxu0 0.0
    %1465 = vmatpush2.msra.mxu0 0.0
    %1466 = vmatprep.subr.mxu0 0.0
    %1467 = vmatpush2.msra.mxu0 0.0
    %1468 = vmatprep.subr.mxu0 0.0
    %1469 = vmatpush2.msra.mxu0 0.0
    %1470 = vmatprep.subr.mxu0 0.0
    %1471 = vmatpush2.msra.mxu0 0.0
    %1472 = vmatprep.subr.mxu0 0.0
    %1473 = vmatpush2.msra.mxu0 0.0
    %1474 = vmatprep.mubr.f32.mxu0 0.0
    %1475 = vmatmul.mubr.f32.gmra.mxu0 %v1366
    %v1476 = vpop.f32.mrf.mxu0
    %v1477 = vadd.f32 %v1362, %v1476
    %v1478 = vpop.f32.mrf.mxu0
    %1479 = vmatprep.mubr.f32.mxu0 0.0
    %1480 = vmatmul.mubr.f32.gmra.mxu0 %v1369
    %v1481 = vpop.f32.mrf.mxu0
    %v1482 = vadd.f32 %v1362, %v1481
    %v1483 = vpop.f32.mrf.mxu0
    %1484 = vmatprep.mubr.f32.mxu0 0.0
    %1485 = vmatmul.mubr.f32.gmra.mxu0 %v1372
    %v1486 = vpop.f32.mrf.mxu0
    %v1487 = vadd.f32 %v1362, %v1486
    %v1488 = vpop.f32.mrf.mxu0
    %1489 = vmatprep.mubr.f32.mxu0 0.0
    %1490 = vmatmul.mubr.f32.gmra.mxu0 %v1375
    %v1491 = vpop.f32.mrf.mxu0
    %v1492 = vadd.f32 %v1362, %v1491
    %v1493 = vpop.f32.mrf.mxu0
    %1494 = vmatprep.mubr.f32.mxu0 0.0
    %1495 = vmatmul.mubr.f32.gmra.mxu0 %v1378
    %v1496 = vpop.f32.mrf.mxu0
    %v1497 = vadd.f32 %v1362, %v1496
    %v1498 = vpop.f32.mrf.mxu0
    %1499 = vmatprep.mubr.f32.mxu0 0.0
    %1500 = vmatmul.mubr.f32.gmra.mxu0 %v1381
    %v1501 = vpop.f32.mrf.mxu0
    %v1502 = vadd.f32 %v1362, %v1501
    %v1503 = vpop.f32.mrf.mxu0
    %1504 = vmatprep.mubr.f32.mxu0 0.0
    %1505 = vmatmul.mubr.f32.gmra.mxu0 %v1384
    %v1506 = vpop.f32.mrf.mxu0
    %v1507 = vadd.f32 %v1362, %v1506
    %v1508 = vpop.f32.mrf.mxu0
    %1509 = vmatprep.mubr.f32.mxu0 0.0
    %1510 = vmatmul.mubr.f32.gmra.mxu0 %v1387
    %v1511 = vpop.f32.mrf.mxu0
    %v1512 = vadd.f32 %v1362, %v1511
    %v1513 = vpop.f32.mrf.mxu0
    %1514 = vmatprep.mubr.f32.mxu0 0.0
    %1515 = vmatmul.mubr.f32.gmra.mxu0 %v1390
    %v1516 = vpop.f32.mrf.mxu0
    %v1517 = vadd.f32 %v1362, %v1516
    %v1518 = vpop.f32.mrf.mxu0
    %1519 = vmatprep.mubr.f32.mxu0 0.0
    %1520 = vmatmul.mubr.f32.gmra.mxu0 %v1393
    %v1521 = vpop.f32.mrf.mxu0
    %v1522 = vadd.f32 %v1362, %v1521
    %v1523 = vpop.f32.mrf.mxu0
    %1524 = vmatprep.mubr.f32.mxu0 0.0
    %1525 = vmatmul.mubr.f32.gmra.mxu0 %v1396
    %v1526 = vpop.f32.mrf.mxu0
    %v1527 = vadd.f32 %v1362, %v1526
    %v1528 = vpop.f32.mrf.mxu0
    %1529 = vmatprep.mubr.f32.mxu0 0.0
    %1530 = vmatmul.mubr.f32.gmra.mxu0 %v1399
    %v1531 = vpop.f32.mrf.mxu0
    %v1532 = vadd.f32 %v1362, %v1531
    %v1533 = vpop.f32.mrf.mxu0
    %1534 = vmatprep.mubr.f32.mxu0 0.0
    %1535 = vmatmul.mubr.f32.gmra.mxu0 %v1402
    %v1536 = vpop.f32.mrf.mxu0
    %v1537 = vadd.f32 %v1362, %v1536
    %v1538 = vpop.f32.mrf.mxu0
    %1539 = vmatprep.mubr.f32.mxu0 0.0
    %1540 = vmatmul.mubr.f32.gmra.mxu0 %v1405
    %v1541 = vpop.f32.mrf.mxu0
    %v1542 = vadd.f32 %v1362, %v1541
    %v1543 = vpop.f32.mrf.mxu0
    %1544 = vmatprep.mubr.f32.mxu0 0.0
    %1545 = vmatmul.mubr.f32.gmra.mxu0 %v1408
    %v1546 = vpop.f32.mrf.mxu0
    %v1547 = vadd.f32 %v1362, %v1546
    %v1548 = vpop.f32.mrf.mxu0
    %1549 = vdwg.mxu0
    %vm1550 = vcmask 7168
    %1551 = vst.msk [vmem:[%s13] sm:$0xff] %vm1550, %v1477
    %1552 = vst.msk [vmem:[%s13 + $0x8] sm:$0xff] %vm1550, %v1482
    %1553 = vst.msk [vmem:[%s13 + $0x10] sm:$0xff] %vm1550, %v1487
    %1554 = vst.msk [vmem:[%s13 + $0x18] sm:$0xff] %vm1550, %v1492
    %1555 = vst.msk [vmem:[%s13 + $0x20] sm:$0xff] %vm1550, %v1497
    %1556 = vst.msk [vmem:[%s13 + $0x28] sm:$0xff] %vm1550, %v1502
    %1557 = vst.msk [vmem:[%s13 + $0x30] sm:$0xff] %vm1550, %v1507
    %1558 = vst.msk [vmem:[%s13 + $0x38] sm:$0xff] %vm1550, %v1512
    %1559 = vst.msk [vmem:[%s13 + $0x40] sm:$0xff] %vm1550, %v1517
    %1560 = vst.msk [vmem:[%s13 + $0x48] sm:$0xff] %vm1550, %v1522
    %1561 = vst.msk [vmem:[%s13 + $0x50] sm:$0xff] %vm1550, %v1527
    %1562 = vst.msk [vmem:[%s13 + $0x58] sm:$0xff] %vm1550, %v1532
    %1563 = vst.msk [vmem:[%s13 + $0x60] sm:$0xff] %vm1550, %v1537
    %1564 = vst.msk [vmem:[%s13 + $0x68] sm:$0xff] %vm1550, %v1542
    %1565 = vst.msk [vmem:[%s13 + $0x70] sm:$0xff] %vm1550, %v1547
    %v1566 = vld [vmem:[%s1] sm:$0xff]
    %v1567 = vld [vmem:[%s1 + $0x10] sm:$0xff]
    %v1568 = vld [vmem:[%s1 + $0x20] sm:$0xff]
    %v1569 = vld [vmem:[%s1 + $0x30] sm:$0xff]
    %v1570 = vld [vmem:[%s1 + $0x40] sm:$0xff]
    %v1571 = vld [vmem:[%s1 + $0x50] sm:$0xff]
    %v1572 = vld [vmem:[%s1 + $0x60] sm:$0xff]
    %v1573 = vld [vmem:[%s1 + $0x70] sm:$0xff]
    %v1574 = vld [vmem:[%s1 + $0x80] sm:$0xff]
    %v1575 = vld [vmem:[%s1 + $0x90] sm:$0xff]
    %v1576 = vld [vmem:[%s1 + $0xa0] sm:$0xff]
    %v1577 = vld [vmem:[%s1 + $0xb0] sm:$0xff]
    %v1578 = vld [vmem:[%s1 + $0xc0] sm:$0xff]
    %v1579 = vld [vmem:[%s1 + $0xd0] sm:$0xff]
    %v1580 = vld [vmem:[%s1 + $0xe0] sm:$0xff]
    %v1581 = vld [vmem:[%s1 + $0x8] sm:$0xff]
    %v1582 = vld [vmem:[%s1 + $0x18] sm:$0xff]
    %v1583 = vld [vmem:[%s1 + $0x28] sm:$0xff]
    %v1584 = vld [vmem:[%s1 + $0x38] sm:$0xff]
    %v1585 = vld [vmem:[%s1 + $0x48] sm:$0xff]
    %v1586 = vld [vmem:[%s1 + $0x58] sm:$0xff]
    %v1587 = vld [vmem:[%s1 + $0x68] sm:$0xff]
    %v1588 = vld [vmem:[%s1 + $0x78] sm:$0xff]
    %v1589 = vld [vmem:[%s1 + $0x88] sm:$0xff]
    %v1590 = vld [vmem:[%s1 + $0x98] sm:$0xff]
    %v1591 = vld [vmem:[%s1 + $0xa8] sm:$0xff]
    %v1592 = vld [vmem:[%s1 + $0xb8] sm:$0xff]
    %v1593 = vld [vmem:[%s1 + $0xc8] sm:$0xff]
    %v1594 = vld [vmem:[%s1 + $0xd8] sm:$0xff]
    %v1595 = vld [vmem:[%s1 + $0xe8] sm:$0xff]
    %v1596 = vadd.f32 %v1566, %v1581
    %v1597 = vadd.f32 %v1567, %v1582
    %v1598 = vadd.f32 %v1568, %v1583
    %v1599 = vadd.f32 %v1569, %v1584
    %v1600 = vadd.f32 %v1570, %v1585
    %v1601 = vadd.f32 %v1571, %v1586
    %v1602 = vadd.f32 %v1572, %v1587
    %v1603 = vadd.f32 %v1573, %v1588
    %v1604 = vadd.f32 %v1574, %v1589
    %v1605 = vadd.f32 %v1575, %v1590
    %v1606 = vadd.f32 %v1576, %v1591
    %v1607 = vadd.f32 %v1577, %v1592
    %v1608 = vadd.f32 %v1578, %v1593
    %v1609 = vadd.f32 %v1579, %v1594
    %v1610 = vadd.f32 %v1580, %v1595
    %v1611 = vld [vmem:[%s7] sm:$0xff]
    %v1612 = vld [vmem:[%s7 + $0x8] sm:$0xff]
    %v1613 = vld [vmem:[%s7 + $0x10] sm:$0xff]
    %v1614 = vld [vmem:[%s7 + $0x18] sm:$0xff]
    %v1615 = vld [vmem:[%s7 + $0x20] sm:$0xff]
    %v1616 = vld [vmem:[%s7 + $0x28] sm:$0xff]
    %v1617 = vld [vmem:[%s7 + $0x30] sm:$0xff]
    %v1618 = vld [vmem:[%s7 + $0x38] sm:$0xff]
    %v1619 = vld [vmem:[%s7 + $0x40] sm:$0xff]
    %v1620 = vld [vmem:[%s7 + $0x48] sm:$0xff]
    %v1621 = vld [vmem:[%s7 + $0x50] sm:$0xff]
    %v1622 = vld [vmem:[%s7 + $0x58] sm:$0xff]
    %v1623 = vld [vmem:[%s7 + $0x60] sm:$0xff]
    %v1624 = vld [vmem:[%s7 + $0x68] sm:$0xff]
    %v1625 = vld [vmem:[%s7 + $0x70] sm:$0xff]
    %v1626 = vld [vmem:[%s7 + $0x78] sm:$0xff]
    %v1627 = vld [vmem:[%s8] sm:$0x1]
    %v1629 = vlaneseq
    %v1630 = vshrl.u32 %v1629, 7
    %v1631 = vsub.s32 0, %v1630
    %v1632 = vrot.slane %v1627, %v1631
    %1634 = vmatprep.subr.mxu0 0.0
    %1635 = vmatpush1.msra.mxu0 %v1626
    %1636 = vmatprep.subr.mxu0 0.0
    %1637 = vmatpush1.msra.mxu0 %v1625
    %1638 = vmatprep.subr.mxu0 0.0
    %1639 = vmatpush1.msra.mxu0 %v1624
    %1640 = vmatprep.subr.mxu0 0.0
    %1641 = vmatpush1.msra.mxu0 %v1623
    %1642 = vmatprep.subr.mxu0 0.0
    %1643 = vmatpush1.msra.mxu0 %v1622
    %1644 = vmatprep.subr.mxu0 0.0
    %1645 = vmatpush1.msra.mxu0 %v1621
    %1646 = vmatprep.subr.mxu0 0.0
    %1647 = vmatpush1.msra.mxu0 %v1620
    %1648 = vmatprep.subr.mxu0 0.0
    %1649 = vmatpush1.msra.mxu0 %v1619
    %1650 = vmatprep.subr.mxu0 0.0
    %1651 = vmatpush1.msra.mxu0 %v1618
    %1652 = vmatprep.subr.mxu0 0.0
    %1653 = vmatpush1.msra.mxu0 %v1617
    %1654 = vmatprep.subr.mxu0 0.0
    %1655 = vmatpush1.msra.mxu0 %v1616
    %1656 = vmatprep.subr.mxu0 0.0
    %1657 = vmatpush1.msra.mxu0 %v1615
    %1658 = vmatprep.subr.mxu0 0.0
    %1659 = vmatpush1.msra.mxu0 %v1614
    %1660 = vmatprep.subr.mxu0 0.0
    %1661 = vmatpush1.msra.mxu0 %v1613
    %1662 = vmatprep.subr.mxu0 0.0
    %1663 = vmatpush1.msra.mxu0 %v1612
    %1664 = vmatprep.subr.mxu0 0.0
    %1665 = vmatpush1.msra.mxu0 %v1611
    %1666 = vmatprep.subr.mxu0 0.0
    %1667 = vmatpush2.msra.mxu0 0.0
    %1668 = vmatprep.subr.mxu0 0.0
    %1669 = vmatpush2.msra.mxu0 0.0
    %1670 = vmatprep.subr.mxu0 0.0
    %1671 = vmatpush2.msra.mxu0 0.0
    %1672 = vmatprep.subr.mxu0 0.0
    %1673 = vmatpush2.msra.mxu0 0.0
    %1674 = vmatprep.subr.mxu0 0.0
    %1675 = vmatpush2.msra.mxu0 0.0
    %1676 = vmatprep.subr.mxu0 0.0
    %1677 = vmatpush2.msra.mxu0 0.0
    %1678 = vmatprep.subr.mxu0 0.0
    %1679 = vmatpush2.msra.mxu0 0.0
    %1680 = vmatprep.subr.mxu0 0.0
    %1681 = vmatpush2.msra.mxu0 0.0
    %1682 = vmatprep.subr.mxu0 0.0
    %1683 = vmatpush2.msra.mxu0 0.0
    %1684 = vmatprep.subr.mxu0 0.0
    %1685 = vmatpush2.msra.mxu0 0.0
    %1686 = vmatprep.subr.mxu0 0.0
    %1687 = vmatpush2.msra.mxu0 0.0
    %1688 = vmatprep.subr.mxu0 0.0
    %1689 = vmatpush2.msra.mxu0 0.0
    %1690 = vmatprep.subr.mxu0 0.0
    %1691 = vmatpush2.msra.mxu0 0.0
    %1692 = vmatprep.subr.mxu0 0.0
    %1693 = vmatpush2.msra.mxu0 0.0
    %1694 = vmatprep.subr.mxu0 0.0
    %1695 = vmatpush2.msra.mxu0 0.0
    %1696 = vmatprep.subr.mxu0 0.0
    %1697 = vmatpush2.msra.mxu0 0.0
    %1698 = vmatprep.mubr.f32.mxu0 0.0
    %1699 = vmatmul.mubr.f32.gmra.mxu0 %v1596
    %v1700 = vpop.f32.mrf.mxu0
    %v1701 = vadd.f32 %v1632, %v1700
    %v1702 = vpop.f32.mrf.mxu0
    %1703 = vmatprep.mubr.f32.mxu0 0.0
    %1704 = vmatmul.mubr.f32.gmra.mxu0 %v1597
    %v1705 = vpop.f32.mrf.mxu0
    %v1706 = vadd.f32 %v1632, %v1705
    %v1707 = vpop.f32.mrf.mxu0
    %1708 = vmatprep.mubr.f32.mxu0 0.0
    %1709 = vmatmul.mubr.f32.gmra.mxu0 %v1598
    %v1710 = vpop.f32.mrf.mxu0
    %v1711 = vadd.f32 %v1632, %v1710
    %v1712 = vpop.f32.mrf.mxu0
    %1713 = vmatprep.mubr.f32.mxu0 0.0
    %1714 = vmatmul.mubr.f32.gmra.mxu0 %v1599
    %v1715 = vpop.f32.mrf.mxu0
    %v1716 = vadd.f32 %v1632, %v1715
    %v1717 = vpop.f32.mrf.mxu0
    %1718 = vmatprep.mubr.f32.mxu0 0.0
    %1719 = vmatmul.mubr.f32.gmra.mxu0 %v1600
    %v1720 = vpop.f32.mrf.mxu0
    %v1721 = vadd.f32 %v1632, %v1720
    %v1722 = vpop.f32.mrf.mxu0
    %1723 = vmatprep.mubr.f32.mxu0 0.0
    %1724 = vmatmul.mubr.f32.gmra.mxu0 %v1601
    %v1725 = vpop.f32.mrf.mxu0
    %v1726 = vadd.f32 %v1632, %v1725
    %v1727 = vpop.f32.mrf.mxu0
    %1728 = vmatprep.mubr.f32.mxu0 0.0
    %1729 = vmatmul.mubr.f32.gmra.mxu0 %v1602
    %v1730 = vpop.f32.mrf.mxu0
    %v1731 = vadd.f32 %v1632, %v1730
    %v1732 = vpop.f32.mrf.mxu0
    %1733 = vmatprep.mubr.f32.mxu0 0.0
    %1734 = vmatmul.mubr.f32.gmra.mxu0 %v1603
    %v1735 = vpop.f32.mrf.mxu0
    %v1736 = vadd.f32 %v1632, %v1735
    %v1737 = vpop.f32.mrf.mxu0
    %1738 = vmatprep.mubr.f32.mxu0 0.0
    %1739 = vmatmul.mubr.f32.gmra.mxu0 %v1604
    %v1740 = vpop.f32.mrf.mxu0
    %v1741 = vadd.f32 %v1632, %v1740
    %v1742 = vpop.f32.mrf.mxu0
    %1743 = vmatprep.mubr.f32.mxu0 0.0
    %1744 = vmatmul.mubr.f32.gmra.mxu0 %v1605
    %v1745 = vpop.f32.mrf.mxu0
    %v1746 = vadd.f32 %v1632, %v1745
    %v1747 = vpop.f32.mrf.mxu0
    %1748 = vmatprep.mubr.f32.mxu0 0.0
    %1749 = vmatmul.mubr.f32.gmra.mxu0 %v1606
    %v1750 = vpop.f32.mrf.mxu0
    %v1751 = vadd.f32 %v1632, %v1750
    %v1752 = vpop.f32.mrf.mxu0
    %1753 = vmatprep.mubr.f32.mxu0 0.0
    %1754 = vmatmul.mubr.f32.gmra.mxu0 %v1607
    %v1755 = vpop.f32.mrf.mxu0
    %v1756 = vadd.f32 %v1632, %v1755
    %v1757 = vpop.f32.mrf.mxu0
    %1758 = vmatprep.mubr.f32.mxu0 0.0
    %1759 = vmatmul.mubr.f32.gmra.mxu0 %v1608
    %v1760 = vpop.f32.mrf.mxu0
    %v1761 = vadd.f32 %v1632, %v1760
    %v1762 = vpop.f32.mrf.mxu0
    %1763 = vmatprep.mubr.f32.mxu0 0.0
    %1764 = vmatmul.mubr.f32.gmra.mxu0 %v1609
    %v1765 = vpop.f32.mrf.mxu0
    %v1766 = vadd.f32 %v1632, %v1765
    %v1767 = vpop.f32.mrf.mxu0
    %1768 = vmatprep.mubr.f32.mxu0 0.0
    %1769 = vmatmul.mubr.f32.gmra.mxu0 %v1610
    %v1770 = vpop.f32.mrf.mxu0
    %v1771 = vadd.f32 %v1632, %v1770
    %v1772 = vpop.f32.mrf.mxu0
    %1773 = vdwg.mxu0
    %v1774 = vmax.f32 %v1701, 0.0
    %v1775 = vmax.f32 %v1706, 0.0
    %v1776 = vmax.f32 %v1711, 0.0
    %v1777 = vmax.f32 %v1716, 0.0
    %v1778 = vmax.f32 %v1721, 0.0
    %v1779 = vmax.f32 %v1726, 0.0
    %v1780 = vmax.f32 %v1731, 0.0
    %v1781 = vmax.f32 %v1736, 0.0
    %v1782 = vmax.f32 %v1741, 0.0
    %v1783 = vmax.f32 %v1746, 0.0
    %v1784 = vmax.f32 %v1751, 0.0
    %v1785 = vmax.f32 %v1756, 0.0
    %v1786 = vmax.f32 %v1761, 0.0
    %v1787 = vmax.f32 %v1766, 0.0
    %v1788 = vmax.f32 %v1771, 0.0
    %v1789 = vld [vmem:[%s9] sm:$0xff]
    %v1790 = vld [vmem:[%s9 + $0x8] sm:$0xff]
    %v1791 = vld [vmem:[%s9 + $0x10] sm:$0xff]
    %v1792 = vld [vmem:[%s9 + $0x18] sm:$0xff]
    %v1793 = vld [vmem:[%s9 + $0x20] sm:$0xff]
    %v1794 = vld [vmem:[%s9 + $0x28] sm:$0xff]
    %v1795 = vld [vmem:[%s9 + $0x30] sm:$0xff]
    %v1796 = vld [vmem:[%s9 + $0x38] sm:$0xff]
    %v1797 = vld [vmem:[%s9 + $0x40] sm:$0xff]
    %v1798 = vld [vmem:[%s9 + $0x48] sm:$0xff]
    %v1799 = vld [vmem:[%s9 + $0x50] sm:$0xff]
    %v1800 = vld [vmem:[%s9 + $0x58] sm:$0xff]
    %v1801 = vld [vmem:[%s10] sm:$0x1]
    %v1803 = vlaneseq
    %v1804 = vshrl.u32 %v1803, 7
    %v1805 = vsub.s32 0, %v1804
    %v1806 = vrot.slane %v1801, %v1805
    %v1809 = vsel %vm1152, %v1774, 0
    %v1812 = vsel %vm1152, %v1775, 0
    %v1815 = vsel %vm1152, %v1776, 0
    %v1818 = vsel %vm1152, %v1777, 0
    %v1821 = vsel %vm1152, %v1778, 0
    %v1824 = vsel %vm1152, %v1779, 0
    %v1827 = vsel %vm1152, %v1780, 0
    %v1830 = vsel %vm1152, %v1781, 0
    %v1833 = vsel %vm1152, %v1782, 0
    %v1836 = vsel %vm1152, %v1783, 0
    %v1839 = vsel %vm1152, %v1784, 0
    %v1842 = vsel %vm1152, %v1785, 0
    %v1845 = vsel %vm1152, %v1786, 0
    %v1848 = vsel %vm1152, %v1787, 0
    %v1851 = vsel %vm1152, %v1788, 0
    %1853 = vmatprep.subr.mxu0 0.0
    %1854 = vmatpush1.msra.mxu0 0.0
    %1855 = vmatprep.subr.mxu0 0.0
    %1856 = vmatpush1.msra.mxu0 0.0
    %1857 = vmatprep.subr.mxu0 0.0
    %1858 = vmatpush1.msra.mxu0 0.0
    %1859 = vmatprep.subr.mxu0 0.0
    %1860 = vmatpush1.msra.mxu0 0.0
    %1861 = vmatprep.subr.mxu0 0.0
    %1862 = vmatpush1.msra.mxu0 %v1800
    %1863 = vmatprep.subr.mxu0 0.0
    %1864 = vmatpush1.msra.mxu0 %v1799
    %1865 = vmatprep.subr.mxu0 0.0
    %1866 = vmatpush1.msra.mxu0 %v1798
    %1867 = vmatprep.subr.mxu0 0.0
    %1868 = vmatpush1.msra.mxu0 %v1797
    %1869 = vmatprep.subr.mxu0 0.0
    %1870 = vmatpush1.msra.mxu0 %v1796
    %1871 = vmatprep.subr.mxu0 0.0
    %1872 = vmatpush1.msra.mxu0 %v1795
    %1873 = vmatprep.subr.mxu0 0.0
    %1874 = vmatpush1.msra.mxu0 %v1794
    %1875 = vmatprep.subr.mxu0 0.0
    %1876 = vmatpush1.msra.mxu0 %v1793
    %1877 = vmatprep.subr.mxu0 0.0
    %1878 = vmatpush1.msra.mxu0 %v1792
    %1879 = vmatprep.subr.mxu0 0.0
    %1880 = vmatpush1.msra.mxu0 %v1791
    %1881 = vmatprep.subr.mxu0 0.0
    %1882 = vmatpush1.msra.mxu0 %v1790
    %1883 = vmatprep.subr.mxu0 0.0
    %1884 = vmatpush1.msra.mxu0 %v1789
    %1885 = vmatprep.subr.mxu0 0.0
    %1886 = vmatpush2.msra.mxu0 0.0
    %1887 = vmatprep.subr.mxu0 0.0
    %1888 = vmatpush2.msra.mxu0 0.0
    %1889 = vmatprep.subr.mxu0 0.0
    %1890 = vmatpush2.msra.mxu0 0.0
    %1891 = vmatprep.subr.mxu0 0.0
    %1892 = vmatpush2.msra.mxu0 0.0
    %1893 = vmatprep.subr.mxu0 0.0
    %1894 = vmatpush2.msra.mxu0 0.0
    %1895 = vmatprep.subr.mxu0 0.0
    %1896 = vmatpush2.msra.mxu0 0.0
    %1897 = vmatprep.subr.mxu0 0.0
    %1898 = vmatpush2.msra.mxu0 0.0
    %1899 = vmatprep.subr.mxu0 0.0
    %1900 = vmatpush2.msra.mxu0 0.0
    %1901 = vmatprep.subr.mxu0 0.0
    %1902 = vmatpush2.msra.mxu0 0.0
    %1903 = vmatprep.subr.mxu0 0.0
    %1904 = vmatpush2.msra.mxu0 0.0
    %1905 = vmatprep.subr.mxu0 0.0
    %1906 = vmatpush2.msra.mxu0 0.0
    %1907 = vmatprep.subr.mxu0 0.0
    %1908 = vmatpush2.msra.mxu0 0.0
    %1909 = vmatprep.subr.mxu0 0.0
    %1910 = vmatpush2.msra.mxu0 0.0
    %1911 = vmatprep.subr.mxu0 0.0
    %1912 = vmatpush2.msra.mxu0 0.0
    %1913 = vmatprep.subr.mxu0 0.0
    %1914 = vmatpush2.msra.mxu0 0.0
    %1915 = vmatprep.subr.mxu0 0.0
    %1916 = vmatpush2.msra.mxu0 0.0
    %1917 = vmatprep.mubr.f32.mxu0 0.0
    %1918 = vmatmul.mubr.f32.gmra.mxu0 %v1809
    %v1919 = vpop.f32.mrf.mxu0
    %v1920 = vadd.f32 %v1806, %v1919
    %v1921 = vpop.f32.mrf.mxu0
    %1922 = vmatprep.mubr.f32.mxu0 0.0
    %1923 = vmatmul.mubr.f32.gmra.mxu0 %v1812
    %v1924 = vpop.f32.mrf.mxu0
    %v1925 = vadd.f32 %v1806, %v1924
    %v1926 = vpop.f32.mrf.mxu0
    %1927 = vmatprep.mubr.f32.mxu0 0.0
    %1928 = vmatmul.mubr.f32.gmra.mxu0 %v1815
    %v1929 = vpop.f32.mrf.mxu0
    %v1930 = vadd.f32 %v1806, %v1929
    %v1931 = vpop.f32.mrf.mxu0
    %1932 = vmatprep.mubr.f32.mxu0 0.0
    %1933 = vmatmul.mubr.f32.gmra.mxu0 %v1818
    %v1934 = vpop.f32.mrf.mxu0
    %v1935 = vadd.f32 %v1806, %v1934
    %v1936 = vpop.f32.mrf.mxu0
    %1937 = vmatprep.mubr.f32.mxu0 0.0
    %1938 = vmatmul.mubr.f32.gmra.mxu0 %v1821
    %v1939 = vpop.f32.mrf.mxu0
    %v1940 = vadd.f32 %v1806, %v1939
    %v1941 = vpop.f32.mrf.mxu0
    %1942 = vmatprep.mubr.f32.mxu0 0.0
    %1943 = vmatmul.mubr.f32.gmra.mxu0 %v1824
    %v1944 = vpop.f32.mrf.mxu0
    %v1945 = vadd.f32 %v1806, %v1944
    %v1946 = vpop.f32.mrf.mxu0
    %1947 = vmatprep.mubr.f32.mxu0 0.0
    %1948 = vmatmul.mubr.f32.gmra.mxu0 %v1827
    %v1949 = vpop.f32.mrf.mxu0
    %v1950 = vadd.f32 %v1806, %v1949
    %v1951 = vpop.f32.mrf.mxu0
    %1952 = vmatprep.mubr.f32.mxu0 0.0
    %1953 = vmatmul.mubr.f32.gmra.mxu0 %v1830
    %v1954 = vpop.f32.mrf.mxu0
    %v1955 = vadd.f32 %v1806, %v1954
    %v1956 = vpop.f32.mrf.mxu0
    %1957 = vmatprep.mubr.f32.mxu0 0.0
    %1958 = vmatmul.mubr.f32.gmra.mxu0 %v1833
    %v1959 = vpop.f32.mrf.mxu0
    %v1960 = vadd.f32 %v1806, %v1959
    %v1961 = vpop.f32.mrf.mxu0
    %1962 = vmatprep.mubr.f32.mxu0 0.0
    %1963 = vmatmul.mubr.f32.gmra.mxu0 %v1836
    %v1964 = vpop.f32.mrf.mxu0
    %v1965 = vadd.f32 %v1806, %v1964
    %v1966 = vpop.f32.mrf.mxu0
    %1967 = vmatprep.mubr.f32.mxu0 0.0
    %1968 = vmatmul.mubr.f32.gmra.mxu0 %v1839
    %v1969 = vpop.f32.mrf.mxu0
    %v1970 = vadd.f32 %v1806, %v1969
    %v1971 = vpop.f32.mrf.mxu0
    %1972 = vmatprep.mubr.f32.mxu0 0.0
    %1973 = vmatmul.mubr.f32.gmra.mxu0 %v1842
    %v1974 = vpop.f32.mrf.mxu0
    %v1975 = vadd.f32 %v1806, %v1974
    %v1976 = vpop.f32.mrf.mxu0
    %1977 = vmatprep.mubr.f32.mxu0 0.0
    %1978 = vmatmul.mubr.f32.gmra.mxu0 %v1845
    %v1979 = vpop.f32.mrf.mxu0
    %v1980 = vadd.f32 %v1806, %v1979
    %v1981 = vpop.f32.mrf.mxu0
    %1982 = vmatprep.mubr.f32.mxu0 0.0
    %1983 = vmatmul.mubr.f32.gmra.mxu0 %v1848
    %v1984 = vpop.f32.mrf.mxu0
    %v1985 = vadd.f32 %v1806, %v1984
    %v1986 = vpop.f32.mrf.mxu0
    %1987 = vmatprep.mubr.f32.mxu0 0.0
    %1988 = vmatmul.mubr.f32.gmra.mxu0 %v1851
    %v1989 = vpop.f32.mrf.mxu0
    %v1990 = vadd.f32 %v1806, %v1989
    %v1991 = vpop.f32.mrf.mxu0
    %1992 = vdwg.mxu0
    %v1993 = vmax.f32 %v1920, 0.0
    %v1994 = vmax.f32 %v1925, 0.0
    %v1995 = vmax.f32 %v1930, 0.0
    %v1996 = vmax.f32 %v1935, 0.0
    %v1997 = vmax.f32 %v1940, 0.0
    %v1998 = vmax.f32 %v1945, 0.0
    %v1999 = vmax.f32 %v1950, 0.0
    %v2000 = vmax.f32 %v1955, 0.0
    %v2001 = vmax.f32 %v1960, 0.0
    %v2002 = vmax.f32 %v1965, 0.0
    %v2003 = vmax.f32 %v1970, 0.0
    %v2004 = vmax.f32 %v1975, 0.0
    %v2005 = vmax.f32 %v1980, 0.0
    %v2006 = vmax.f32 %v1985, 0.0
    %v2007 = vmax.f32 %v1990, 0.0
    %v2008 = vld [vmem:[%s11] sm:$0xff]
    %v2009 = vld [vmem:[%s11 + $0x8] sm:$0xff]
    %v2010 = vld [vmem:[%s11 + $0x10] sm:$0xff]
    %v2011 = vld [vmem:[%s11 + $0x18] sm:$0xff]
    %v2012 = vld [vmem:[#allocation2] sm:$0x1]
    %v2014 = vlaneseq
    %v2015 = vshrl.u32 %v2014, 7
    %v2016 = vsub.s32 0, %v2015
    %v2017 = vrot.slane %v2012, %v2016
    %v2020 = vsel %vm1364, %v1993, 0
    %v2023 = vsel %vm1364, %v1994, 0
    %v2026 = vsel %vm1364, %v1995, 0
    %v2029 = vsel %vm1364, %v1996, 0
    %v2032 = vsel %vm1364, %v1997, 0
    %v2035 = vsel %vm1364, %v1998, 0
    %v2038 = vsel %vm1364, %v1999, 0
    %v2041 = vsel %vm1364, %v2000, 0
    %v2044 = vsel %vm1364, %v2001, 0
    %v2047 = vsel %vm1364, %v2002, 0
    %v2050 = vsel %vm1364, %v2003, 0
    %v2053 = vsel %vm1364, %v2004, 0
    %v2056 = vsel %vm1364, %v2005, 0
    %v2059 = vsel %vm1364, %v2006, 0
    %v2062 = vsel %vm1364, %v2007, 0
    %2064 = vmatprep.subr.mxu0 0.0
    %2065 = vmatpush1.msra.mxu0 0.0
    %2066 = vmatprep.subr.mxu0 0.0
    %2067 = vmatpush1.msra.mxu0 0.0
    %2068 = vmatprep.subr.mxu0 0.0
    %2069 = vmatpush1.msra.mxu0 0.0
    %2070 = vmatprep.subr.mxu0 0.0
    %2071 = vmatpush1.msra.mxu0 0.0
    %2072 = vmatprep.subr.mxu0 0.0
    %2073 = vmatpush1.msra.mxu0 0.0
    %2074 = vmatprep.subr.mxu0 0.0
    %2075 = vmatpush1.msra.mxu0 0.0
    %2076 = vmatprep.subr.mxu0 0.0
    %2077 = vmatpush1.msra.mxu0 0.0
    %2078 = vmatprep.subr.mxu0 0.0
    %2079 = vmatpush1.msra.mxu0 0.0
    %2080 = vmatprep.subr.mxu0 0.0
    %2081 = vmatpush1.msra.mxu0 0.0
    %2082 = vmatprep.subr.mxu0 0.0
    %2083 = vmatpush1.msra.mxu0 0.0
    %2084 = vmatprep.subr.mxu0 0.0
    %2085 = vmatpush1.msra.mxu0 0.0
    %2086 = vmatprep.subr.mxu0 0.0
    %2087 = vmatpush1.msra.mxu0 0.0
    %2088 = vmatprep.subr.mxu0 0.0
    %2089 = vmatpush1.msra.mxu0 %v2011
    %2090 = vmatprep.subr.mxu0 0.0
    %2091 = vmatpush1.msra.mxu0 %v2010
    %2092 = vmatprep.subr.mxu0 0.0
    %2093 = vmatpush1.msra.mxu0 %v2009
    %2094 = vmatprep.subr.mxu0 0.0
    %2095 = vmatpush1.msra.mxu0 %v2008
    %2096 = vmatprep.subr.mxu0 0.0
    %2097 = vmatpush2.msra.mxu0 0.0
    %2098 = vmatprep.subr.mxu0 0.0
    %2099 = vmatpush2.msra.mxu0 0.0
    %2100 = vmatprep.subr.mxu0 0.0
    %2101 = vmatpush2.msra.mxu0 0.0
    %2102 = vmatprep.subr.mxu0 0.0
    %2103 = vmatpush2.msra.mxu0 0.0
    %2104 = vmatprep.subr.mxu0 0.0
    %2105 = vmatpush2.msra.mxu0 0.0
    %2106 = vmatprep.subr.mxu0 0.0
    %2107 = vmatpush2.msra.mxu0 0.0
    %2108 = vmatprep.subr.mxu0 0.0
    %2109 = vmatpush2.msra.mxu0 0.0
    %2110 = vmatprep.subr.mxu0 0.0
    %2111 = vmatpush2.msra.mxu0 0.0
    %2112 = vmatprep.subr.mxu0 0.0
    %2113 = vmatpush2.msra.mxu0 0.0
    %2114 = vmatprep.subr.mxu0 0.0
    %2115 = vmatpush2.msra.mxu0 0.0
    %2116 = vmatprep.subr.mxu0 0.0
    %2117 = vmatpush2.msra.mxu0 0.0
    %2118 = vmatprep.subr.mxu0 0.0
    %2119 = vmatpush2.msra.mxu0 0.0
    %2120 = vmatprep.subr.mxu0 0.0
    %2121 = vmatpush2.msra.mxu0 0.0
    %2122 = vmatprep.subr.mxu0 0.0
    %2123 = vmatpush2.msra.mxu0 0.0
    %2124 = vmatprep.subr.mxu0 0.0
    %2125 = vmatpush2.msra.mxu0 0.0
    %2126 = vmatprep.subr.mxu0 0.0
    %2127 = vmatpush2.msra.mxu0 0.0
    %2128 = vmatprep.mubr.f32.mxu0 0.0
    %2129 = vmatmul.mubr.f32.gmra.mxu0 %v2020
    %v2130 = vpop.f32.mrf.mxu0
    %v2131 = vadd.f32 %v2017, %v2130
    %v2132 = vpop.f32.mrf.mxu0
    %2133 = vmatprep.mubr.f32.mxu0 0.0
    %2134 = vmatmul.mubr.f32.gmra.mxu0 %v2023
    %v2135 = vpop.f32.mrf.mxu0
    %v2136 = vadd.f32 %v2017, %v2135
    %v2137 = vpop.f32.mrf.mxu0
    %2138 = vmatprep.mubr.f32.mxu0 0.0
    %2139 = vmatmul.mubr.f32.gmra.mxu0 %v2026
    %v2140 = vpop.f32.mrf.mxu0
    %v2141 = vadd.f32 %v2017, %v2140
    %v2142 = vpop.f32.mrf.mxu0
    %2143 = vmatprep.mubr.f32.mxu0 0.0
    %2144 = vmatmul.mubr.f32.gmra.mxu0 %v2029
    %v2145 = vpop.f32.mrf.mxu0
    %v2146 = vadd.f32 %v2017, %v2145
    %v2147 = vpop.f32.mrf.mxu0
    %2148 = vmatprep.mubr.f32.mxu0 0.0
    %2149 = vmatmul.mubr.f32.gmra.mxu0 %v2032
    %v2150 = vpop.f32.mrf.mxu0
    %v2151 = vadd.f32 %v2017, %v2150
    %v2152 = vpop.f32.mrf.mxu0
    %2153 = vmatprep.mubr.f32.mxu0 0.0
    %2154 = vmatmul.mubr.f32.gmra.mxu0 %v2035
    %v2155 = vpop.f32.mrf.mxu0
    %v2156 = vadd.f32 %v2017, %v2155
    %v2157 = vpop.f32.mrf.mxu0
    %2158 = vmatprep.mubr.f32.mxu0 0.0
    %2159 = vmatmul.mubr.f32.gmra.mxu0 %v2038
    %v2160 = vpop.f32.mrf.mxu0
    %v2161 = vadd.f32 %v2017, %v2160
    %v2162 = vpop.f32.mrf.mxu0
    %2163 = vmatprep.mubr.f32.mxu0 0.0
    %2164 = vmatmul.mubr.f32.gmra.mxu0 %v2041
    %v2165 = vpop.f32.mrf.mxu0
    %v2166 = vadd.f32 %v2017, %v2165
    %v2167 = vpop.f32.mrf.mxu0
    %2168 = vmatprep.mubr.f32.mxu0 0.0
    %2169 = vmatmul.mubr.f32.gmra.mxu0 %v2044
    %v2170 = vpop.f32.mrf.mxu0
    %v2171 = vadd.f32 %v2017, %v2170
    %v2172 = vpop.f32.mrf.mxu0
    %2173 = vmatprep.mubr.f32.mxu0 0.0
    %2174 = vmatmul.mubr.f32.gmra.mxu0 %v2047
    %v2175 = vpop.f32.mrf.mxu0
    %v2176 = vadd.f32 %v2017, %v2175
    %v2177 = vpop.f32.mrf.mxu0
    %2178 = vmatprep.mubr.f32.mxu0 0.0
    %2179 = vmatmul.mubr.f32.gmra.mxu0 %v2050
    %v2180 = vpop.f32.mrf.mxu0
    %v2181 = vadd.f32 %v2017, %v2180
    %v2182 = vpop.f32.mrf.mxu0
    %2183 = vmatprep.mubr.f32.mxu0 0.0
    %2184 = vmatmul.mubr.f32.gmra.mxu0 %v2053
    %v2185 = vpop.f32.mrf.mxu0
    %v2186 = vadd.f32 %v2017, %v2185
    %v2187 = vpop.f32.mrf.mxu0
    %2188 = vmatprep.mubr.f32.mxu0 0.0
    %2189 = vmatmul.mubr.f32.gmra.mxu0 %v2056
    %v2190 = vpop.f32.mrf.mxu0
    %v2191 = vadd.f32 %v2017, %v2190
    %v2192 = vpop.f32.mrf.mxu0
    %2193 = vmatprep.mubr.f32.mxu0 0.0
    %2194 = vmatmul.mubr.f32.gmra.mxu0 %v2059
    %v2195 = vpop.f32.mrf.mxu0
    %v2196 = vadd.f32 %v2017, %v2195
    %v2197 = vpop.f32.mrf.mxu0
    %2198 = vmatprep.mubr.f32.mxu0 0.0
    %2199 = vmatmul.mubr.f32.gmra.mxu0 %v2062
    %v2200 = vpop.f32.mrf.mxu0
    %v2201 = vadd.f32 %v2017, %v2200
    %v2202 = vpop.f32.mrf.mxu0
    %2203 = vdwg.mxu0
    %2204 = vst.msk [vmem:[%s14] sm:$0xff] %vm1550, %v2131
    %2205 = vst.msk [vmem:[%s14 + $0x8] sm:$0xff] %vm1550, %v2136
    %2206 = vst.msk [vmem:[%s14 + $0x10] sm:$0xff] %vm1550, %v2141
    %2207 = vst.msk [vmem:[%s14 + $0x18] sm:$0xff] %vm1550, %v2146
    %2208 = vst.msk [vmem:[%s14 + $0x20] sm:$0xff] %vm1550, %v2151
    %2209 = vst.msk [vmem:[%s14 + $0x28] sm:$0xff] %vm1550, %v2156
    %2210 = vst.msk [vmem:[%s14 + $0x30] sm:$0xff] %vm1550, %v2161
    %2211 = vst.msk [vmem:[%s14 + $0x38] sm:$0xff] %vm1550, %v2166
    %2212 = vst.msk [vmem:[%s14 + $0x40] sm:$0xff] %vm1550, %v2171
    %2213 = vst.msk [vmem:[%s14 + $0x48] sm:$0xff] %vm1550, %v2176
    %2214 = vst.msk [vmem:[%s14 + $0x50] sm:$0xff] %vm1550, %v2181
    %2215 = vst.msk [vmem:[%s14 + $0x58] sm:$0xff] %vm1550, %v2186
    %2216 = vst.msk [vmem:[%s14 + $0x60] sm:$0xff] %vm1550, %v2191
    %2217 = vst.msk [vmem:[%s14 + $0x68] sm:$0xff] %vm1550, %v2196
    %2218 = vst.msk [vmem:[%s14 + $0x70] sm:$0xff] %vm1550, %v2201
    %v2219 = vld [vmem:[#allocation3] sm:$0xff]
    %v2220 = vld [vmem:[#allocation3 + $0x10] sm:$0xff]
    %v2221 = vld [vmem:[#allocation3 + $0x20] sm:$0xff]
    %v2222 = vld [vmem:[#allocation3 + $0x30] sm:$0xff]
    %v2223 = vld [vmem:[#allocation3 + $0x40] sm:$0xff]
    %v2224 = vld [vmem:[#allocation3 + $0x50] sm:$0xff]
    %v2225 = vld [vmem:[#allocation3 + $0x60] sm:$0xff]
    %v2226 = vld [vmem:[#allocation3 + $0x70] sm:$0xff]
    %v2227 = vld [vmem:[#allocation3 + $0x80] sm:$0xff]
    %v2228 = vld [vmem:[#allocation3 + $0x90] sm:$0xff]
    %v2229 = vld [vmem:[#allocation3 + $0xa0] sm:$0xff]
    %v2230 = vld [vmem:[#allocation3 + $0xb0] sm:$0xff]
    %v2231 = vld [vmem:[#allocation3 + $0xc0] sm:$0xff]
    %v2232 = vld [vmem:[#allocation3 + $0xd0] sm:$0xff]
    %v2233 = vld [vmem:[#allocation3 + $0xe0] sm:$0xff]
    %v2234 = vld [vmem:[#allocation3 + $0x8] sm:$0xff]
    %v2235 = vld [vmem:[#allocation3 + $0x18] sm:$0xff]
    %v2236 = vld [vmem:[#allocation3 + $0x28] sm:$0xff]
    %v2237 = vld [vmem:[#allocation3 + $0x38] sm:$0xff]
    %v2238 = vld [vmem:[#allocation3 + $0x48] sm:$0xff]
    %v2239 = vld [vmem:[#allocation3 + $0x58] sm:$0xff]
    %v2240 = vld [vmem:[#allocation3 + $0x68] sm:$0xff]
    %v2241 = vld [vmem:[#allocation3 + $0x78] sm:$0xff]
    %v2242 = vld [vmem:[#allocation3 + $0x88] sm:$0xff]
    %v2243 = vld [vmem:[#allocation3 + $0x98] sm:$0xff]
    %v2244 = vld [vmem:[#allocation3 + $0xa8] sm:$0xff]
    %v2245 = vld [vmem:[#allocation3 + $0xb8] sm:$0xff]
    %v2246 = vld [vmem:[#allocation3 + $0xc8] sm:$0xff]
    %v2247 = vld [vmem:[#allocation3 + $0xd8] sm:$0xff]
    %v2248 = vld [vmem:[#allocation3 + $0xe8] sm:$0xff]
    %v2249 = vadd.f32 %v2219, %v2234
    %v2250 = vadd.f32 %v2220, %v2235
    %v2251 = vadd.f32 %v2221, %v2236
    %v2252 = vadd.f32 %v2222, %v2237
    %v2253 = vadd.f32 %v2223, %v2238
    %v2254 = vadd.f32 %v2224, %v2239
    %v2255 = vadd.f32 %v2225, %v2240
    %v2256 = vadd.f32 %v2226, %v2241
    %v2257 = vadd.f32 %v2227, %v2242
    %v2258 = vadd.f32 %v2228, %v2243
    %v2259 = vadd.f32 %v2229, %v2244
    %v2260 = vadd.f32 %v2230, %v2245
    %v2261 = vadd.f32 %v2231, %v2246
    %v2262 = vadd.f32 %v2232, %v2247
    %v2263 = vadd.f32 %v2233, %v2248
    %v2264 = vld [vmem:[%s7] sm:$0xff]
    %v2265 = vld [vmem:[%s7 + $0x8] sm:$0xff]
    %v2266 = vld [vmem:[%s7 + $0x10] sm:$0xff]
    %v2267 = vld [vmem:[%s7 + $0x18] sm:$0xff]
    %v2268 = vld [vmem:[%s7 + $0x20] sm:$0xff]
    %v2269 = vld [vmem:[%s7 + $0x28] sm:$0xff]
    %v2270 = vld [vmem:[%s7 + $0x30] sm:$0xff]
    %v2271 = vld [vmem:[%s7 + $0x38] sm:$0xff]
    %v2272 = vld [vmem:[%s7 + $0x40] sm:$0xff]
    %v2273 = vld [vmem:[%s7 + $0x48] sm:$0xff]
    %v2274 = vld [vmem:[%s7 + $0x50] sm:$0xff]
    %v2275 = vld [vmem:[%s7 + $0x58] sm:$0xff]
    %v2276 = vld [vmem:[%s7 + $0x60] sm:$0xff]
    %v2277 = vld [vmem:[%s7 + $0x68] sm:$0xff]
    %v2278 = vld [vmem:[%s7 + $0x70] sm:$0xff]
    %v2279 = vld [vmem:[%s7 + $0x78] sm:$0xff]
    %v2280 = vld [vmem:[%s8] sm:$0x1]
    %v2282 = vlaneseq
    %v2283 = vshrl.u32 %v2282, 7
    %v2284 = vsub.s32 0, %v2283
    %v2285 = vrot.slane %v2280, %v2284
    %2287 = vmatprep.subr.mxu0 0.0
    %2288 = vmatpush1.msra.mxu0 %v2279
    %2289 = vmatprep.subr.mxu0 0.0
    %2290 = vmatpush1.msra.mxu0 %v2278
    %2291 = vmatprep.subr.mxu0 0.0
    %2292 = vmatpush1.msra.mxu0 %v2277
    %2293 = vmatprep.subr.mxu0 0.0
    %2294 = vmatpush1.msra.mxu0 %v2276
    %2295 = vmatprep.subr.mxu0 0.0
    %2296 = vmatpush1.msra.mxu0 %v2275
    %2297 = vmatprep.subr.mxu0 0.0
    %2298 = vmatpush1.msra.mxu0 %v2274
    %2299 = vmatprep.subr.mxu0 0.0
    %2300 = vmatpush1.msra.mxu0 %v2273
    %2301 = vmatprep.subr.mxu0 0.0
    %2302 = vmatpush1.msra.mxu0 %v2272
    %2303 = vmatprep.subr.mxu0 0.0
    %2304 = vmatpush1.msra.mxu0 %v2271
    %2305 = vmatprep.subr.mxu0 0.0
    %2306 = vmatpush1.msra.mxu0 %v2270
    %2307 = vmatprep.subr.mxu0 0.0
    %2308 = vmatpush1.msra.mxu0 %v2269
    %2309 = vmatprep.subr.mxu0 0.0
    %2310 = vmatpush1.msra.mxu0 %v2268
    %2311 = vmatprep.subr.mxu0 0.0
    %2312 = vmatpush1.msra.mxu0 %v2267
    %2313 = vmatprep.subr.mxu0 0.0
    %2314 = vmatpush1.msra.mxu0 %v2266
    %2315 = vmatprep.subr.mxu0 0.0
    %2316 = vmatpush1.msra.mxu0 %v2265
    %2317 = vmatprep.subr.mxu0 0.0
    %2318 = vmatpush1.msra.mxu0 %v2264
    %2319 = vmatprep.subr.mxu0 0.0
    %2320 = vmatpush2.msra.mxu0 0.0
    %2321 = vmatprep.subr.mxu0 0.0
    %2322 = vmatpush2.msra.mxu0 0.0
    %2323 = vmatprep.subr.mxu0 0.0
    %2324 = vmatpush2.msra.mxu0 0.0
    %2325 = vmatprep.subr.mxu0 0.0
    %2326 = vmatpush2.msra.mxu0 0.0
    %2327 = vmatprep.subr.mxu0 0.0
    %2328 = vmatpush2.msra.mxu0 0.0
    %2329 = vmatprep.subr.mxu0 0.0
    %2330 = vmatpush2.msra.mxu0 0.0
    %2331 = vmatprep.subr.mxu0 0.0
    %2332 = vmatpush2.msra.mxu0 0.0
    %2333 = vmatprep.subr.mxu0 0.0
    %2334 = vmatpush2.msra.mxu0 0.0
    %2335 = vmatprep.subr.mxu0 0.0
    %2336 = vmatpush2.msra.mxu0 0.0
    %2337 = vmatprep.subr.mxu0 0.0
    %2338 = vmatpush2.msra.mxu0 0.0
    %2339 = vmatprep.subr.mxu0 0.0
    %2340 = vmatpush2.msra.mxu0 0.0
    %2341 = vmatprep.subr.mxu0 0.0
    %2342 = vmatpush2.msra.mxu0 0.0
    %2343 = vmatprep.subr.mxu0 0.0
    %2344 = vmatpush2.msra.mxu0 0.0
    %2345 = vmatprep.subr.mxu0 0.0
    %2346 = vmatpush2.msra.mxu0 0.0
    %2347 = vmatprep.subr.mxu0 0.0
    %2348 = vmatpush2.msra.mxu0 0.0
    %2349 = vmatprep.subr.mxu0 0.0
    %2350 = vmatpush2.msra.mxu0 0.0
    %2351 = vmatprep.mubr.f32.mxu0 0.0
    %2352 = vmatmul.mubr.f32.gmra.mxu0 %v2249
    %v2353 = vpop.f32.mrf.mxu0
    %v2354 = vadd.f32 %v2285, %v2353
    %v2355 = vpop.f32.mrf.mxu0
    %2356 = vmatprep.mubr.f32.mxu0 0.0
    %2357 = vmatmul.mubr.f32.gmra.mxu0 %v2250
    %v2358 = vpop.f32.mrf.mxu0
    %v2359 = vadd.f32 %v2285, %v2358
    %v2360 = vpop.f32.mrf.mxu0
    %2361 = vmatprep.mubr.f32.mxu0 0.0
    %2362 = vmatmul.mubr.f32.gmra.mxu0 %v2251
    %v2363 = vpop.f32.mrf.mxu0
    %v2364 = vadd.f32 %v2285, %v2363
    %v2365 = vpop.f32.mrf.mxu0
    %2366 = vmatprep.mubr.f32.mxu0 0.0
    %2367 = vmatmul.mubr.f32.gmra.mxu0 %v2252
    %v2368 = vpop.f32.mrf.mxu0
    %v2369 = vadd.f32 %v2285, %v2368
    %v2370 = vpop.f32.mrf.mxu0
    %2371 = vmatprep.mubr.f32.mxu0 0.0
    %2372 = vmatmul.mubr.f32.gmra.mxu0 %v2253
    %v2373 = vpop.f32.mrf.mxu0
    %v2374 = vadd.f32 %v2285, %v2373
    %v2375 = vpop.f32.mrf.mxu0
    %2376 = vmatprep.mubr.f32.mxu0 0.0
    %2377 = vmatmul.mubr.f32.gmra.mxu0 %v2254
    %v2378 = vpop.f32.mrf.mxu0
    %v2379 = vadd.f32 %v2285, %v2378
    %v2380 = vpop.f32.mrf.mxu0
    %2381 = vmatprep.mubr.f32.mxu0 0.0
    %2382 = vmatmul.mubr.f32.gmra.mxu0 %v2255
    %v2383 = vpop.f32.mrf.mxu0
    %v2384 = vadd.f32 %v2285, %v2383
    %v2385 = vpop.f32.mrf.mxu0
    %2386 = vmatprep.mubr.f32.mxu0 0.0
    %2387 = vmatmul.mubr.f32.gmra.mxu0 %v2256
    %v2388 = vpop.f32.mrf.mxu0
    %v2389 = vadd.f32 %v2285, %v2388
    %v2390 = vpop.f32.mrf.mxu0
    %2391 = vmatprep.mubr.f32.mxu0 0.0
    %2392 = vmatmul.mubr.f32.gmra.mxu0 %v2257
    %v2393 = vpop.f32.mrf.mxu0
    %v2394 = vadd.f32 %v2285, %v2393
    %v2395 = vpop.f32.mrf.mxu0
    %2396 = vmatprep.mubr.f32.mxu0 0.0
    %2397 = vmatmul.mubr.f32.gmra.mxu0 %v2258
    %v2398 = vpop.f32.mrf.mxu0
    %v2399 = vadd.f32 %v2285, %v2398
    %v2400 = vpop.f32.mrf.mxu0
    %2401 = vmatprep.mubr.f32.mxu0 0.0
    %2402 = vmatmul.mubr.f32.gmra.mxu0 %v2259
    %v2403 = vpop.f32.mrf.mxu0
    %v2404 = vadd.f32 %v2285, %v2403
    %v2405 = vpop.f32.mrf.mxu0
    %2406 = vmatprep.mubr.f32.mxu0 0.0
    %2407 = vmatmul.mubr.f32.gmra.mxu0 %v2260
    %v2408 = vpop.f32.mrf.mxu0
    %v2409 = vadd.f32 %v2285, %v2408
    %v2410 = vpop.f32.mrf.mxu0
    %2411 = vmatprep.mubr.f32.mxu0 0.0
    %2412 = vmatmul.mubr.f32.gmra.mxu0 %v2261
    %v2413 = vpop.f32.mrf.mxu0
    %v2414 = vadd.f32 %v2285, %v2413
    %v2415 = vpop.f32.mrf.mxu0
    %2416 = vmatprep.mubr.f32.mxu0 0.0
    %2417 = vmatmul.mubr.f32.gmra.mxu0 %v2262
    %v2418 = vpop.f32.mrf.mxu0
    %v2419 = vadd.f32 %v2285, %v2418
    %v2420 = vpop.f32.mrf.mxu0
    %2421 = vmatprep.mubr.f32.mxu0 0.0
    %2422 = vmatmul.mubr.f32.gmra.mxu0 %v2263
    %v2423 = vpop.f32.mrf.mxu0
    %v2424 = vadd.f32 %v2285, %v2423
    %v2425 = vpop.f32.mrf.mxu0
    %2426 = vdwg.mxu0
    %v2427 = vmax.f32 %v2354, 0.0
    %v2428 = vmax.f32 %v2359, 0.0
    %v2429 = vmax.f32 %v2364, 0.0
    %v2430 = vmax.f32 %v2369, 0.0
    %v2431 = vmax.f32 %v2374, 0.0
    %v2432 = vmax.f32 %v2379, 0.0
    %v2433 = vmax.f32 %v2384, 0.0
    %v2434 = vmax.f32 %v2389, 0.0
    %v2435 = vmax.f32 %v2394, 0.0
    %v2436 = vmax.f32 %v2399, 0.0
    %v2437 = vmax.f32 %v2404, 0.0
    %v2438 = vmax.f32 %v2409, 0.0
    %v2439 = vmax.f32 %v2414, 0.0
    %v2440 = vmax.f32 %v2419, 0.0
    %v2441 = vmax.f32 %v2424, 0.0
    %v2442 = vld [vmem:[%s9] sm:$0xff]
    %v2443 = vld [vmem:[%s9 + $0x8] sm:$0xff]
    %v2444 = vld [vmem:[%s9 + $0x10] sm:$0xff]
    %v2445 = vld [vmem:[%s9 + $0x18] sm:$0xff]
    %v2446 = vld [vmem:[%s9 + $0x20] sm:$0xff]
    %v2447 = vld [vmem:[%s9 + $0x28] sm:$0xff]
    %v2448 = vld [vmem:[%s9 + $0x30] sm:$0xff]
    %v2449 = vld [vmem:[%s9 + $0x38] sm:$0xff]
    %v2450 = vld [vmem:[%s9 + $0x40] sm:$0xff]
    %v2451 = vld [vmem:[%s9 + $0x48] sm:$0xff]
    %v2452 = vld [vmem:[%s9 + $0x50] sm:$0xff]
    %v2453 = vld [vmem:[%s9 + $0x58] sm:$0xff]
    %v2454 = vld [vmem:[%s10] sm:$0x1]
    %v2456 = vlaneseq
    %v2457 = vshrl.u32 %v2456, 7
    %v2458 = vsub.s32 0, %v2457
    %v2459 = vrot.slane %v2454, %v2458
    %v2462 = vsel %vm1152, %v2427, 0
    %v2465 = vsel %vm1152, %v2428, 0
    %v2468 = vsel %vm1152, %v2429, 0
    %v2471 = vsel %vm1152, %v2430, 0
    %v2474 = vsel %vm1152, %v2431, 0
    %v2477 = vsel %vm1152, %v2432, 0
    %v2480 = vsel %vm1152, %v2433, 0
    %v2483 = vsel %vm1152, %v2434, 0
    %v2486 = vsel %vm1152, %v2435, 0
    %v2489 = vsel %vm1152, %v2436, 0
    %v2492 = vsel %vm1152, %v2437, 0
    %v2495 = vsel %vm1152, %v2438, 0
    %v2498 = vsel %vm1152, %v2439, 0
    %v2501 = vsel %vm1152, %v2440, 0
    %v2504 = vsel %vm1152, %v2441, 0
    %2506 = vmatprep.subr.mxu0 0.0
    %2507 = vmatpush1.msra.mxu0 0.0
    %2508 = vmatprep.subr.mxu0 0.0
    %2509 = vmatpush1.msra.mxu0 0.0
    %2510 = vmatprep.subr.mxu0 0.0
    %2511 = vmatpush1.msra.mxu0 0.0
    %2512 = vmatprep.subr.mxu0 0.0
    %2513 = vmatpush1.msra.mxu0 0.0
    %2514 = vmatprep.subr.mxu0 0.0
    %2515 = vmatpush1.msra.mxu0 %v2453
    %2516 = vmatprep.subr.mxu0 0.0
    %2517 = vmatpush1.msra.mxu0 %v2452
    %2518 = vmatprep.subr.mxu0 0.0
    %2519 = vmatpush1.msra.mxu0 %v2451
    %2520 = vmatprep.subr.mxu0 0.0
    %2521 = vmatpush1.msra.mxu0 %v2450
    %2522 = vmatprep.subr.mxu0 0.0
    %2523 = vmatpush1.msra.mxu0 %v2449
    %2524 = vmatprep.subr.mxu0 0.0
    %2525 = vmatpush1.msra.mxu0 %v2448
    %2526 = vmatprep.subr.mxu0 0.0
    %2527 = vmatpush1.msra.mxu0 %v2447
    %2528 = vmatprep.subr.mxu0 0.0
    %2529 = vmatpush1.msra.mxu0 %v2446
    %2530 = vmatprep.subr.mxu0 0.0
    %2531 = vmatpush1.msra.mxu0 %v2445
    %2532 = vmatprep.subr.mxu0 0.0
    %2533 = vmatpush1.msra.mxu0 %v2444
    %2534 = vmatprep.subr.mxu0 0.0
    %2535 = vmatpush1.msra.mxu0 %v2443
    %2536 = vmatprep.subr.mxu0 0.0
    %2537 = vmatpush1.msra.mxu0 %v2442
    %2538 = vmatprep.subr.mxu0 0.0
    %2539 = vmatpush2.msra.mxu0 0.0
    %2540 = vmatprep.subr.mxu0 0.0
    %2541 = vmatpush2.msra.mxu0 0.0
    %2542 = vmatprep.subr.mxu0 0.0
    %2543 = vmatpush2.msra.mxu0 0.0
    %2544 = vmatprep.subr.mxu0 0.0
    %2545 = vmatpush2.msra.mxu0 0.0
    %2546 = vmatprep.subr.mxu0 0.0
    %2547 = vmatpush2.msra.mxu0 0.0
    %2548 = vmatprep.subr.mxu0 0.0
    %2549 = vmatpush2.msra.mxu0 0.0
    %2550 = vmatprep.subr.mxu0 0.0
    %2551 = vmatpush2.msra.mxu0 0.0
    %2552 = vmatprep.subr.mxu0 0.0
    %2553 = vmatpush2.msra.mxu0 0.0
    %2554 = vmatprep.subr.mxu0 0.0
    %2555 = vmatpush2.msra.mxu0 0.0
    %2556 = vmatprep.subr.mxu0 0.0
    %2557 = vmatpush2.msra.mxu0 0.0
    %2558 = vmatprep.subr.mxu0 0.0
    %2559 = vmatpush2.msra.mxu0 0.0
    %2560 = vmatprep.subr.mxu0 0.0
    %2561 = vmatpush2.msra.mxu0 0.0
    %2562 = vmatprep.subr.mxu0 0.0
    %2563 = vmatpush2.msra.mxu0 0.0
    %2564 = vmatprep.subr.mxu0 0.0
    %2565 = vmatpush2.msra.mxu0 0.0
    %2566 = vmatprep.subr.mxu0 0.0
    %2567 = vmatpush2.msra.mxu0 0.0
    %2568 = vmatprep.subr.mxu0 0.0
    %2569 = vmatpush2.msra.mxu0 0.0
    %2570 = vmatprep.mubr.f32.mxu0 0.0
    %2571 = vmatmul.mubr.f32.gmra.mxu0 %v2462
    %v2572 = vpop.f32.mrf.mxu0
    %v2573 = vadd.f32 %v2459, %v2572
    %v2574 = vpop.f32.mrf.mxu0
    %2575 = vmatprep.mubr.f32.mxu0 0.0
    %2576 = vmatmul.mubr.f32.gmra.mxu0 %v2465
    %v2577 = vpop.f32.mrf.mxu0
    %v2578 = vadd.f32 %v2459, %v2577
    %v2579 = vpop.f32.mrf.mxu0
    %2580 = vmatprep.mubr.f32.mxu0 0.0
    %2581 = vmatmul.mubr.f32.gmra.mxu0 %v2468
    %v2582 = vpop.f32.mrf.mxu0
    %v2583 = vadd.f32 %v2459, %v2582
    %v2584 = vpop.f32.mrf.mxu0
    %2585 = vmatprep.mubr.f32.mxu0 0.0
    %2586 = vmatmul.mubr.f32.gmra.mxu0 %v2471
    %v2587 = vpop.f32.mrf.mxu0
    %v2588 = vadd.f32 %v2459, %v2587
    %v2589 = vpop.f32.mrf.mxu0
    %2590 = vmatprep.mubr.f32.mxu0 0.0
    %2591 = vmatmul.mubr.f32.gmra.mxu0 %v2474
    %v2592 = vpop.f32.mrf.mxu0
    %v2593 = vadd.f32 %v2459, %v2592
    %v2594 = vpop.f32.mrf.mxu0
    %2595 = vmatprep.mubr.f32.mxu0 0.0
    %2596 = vmatmul.mubr.f32.gmra.mxu0 %v2477
    %v2597 = vpop.f32.mrf.mxu0
    %v2598 = vadd.f32 %v2459, %v2597
    %v2599 = vpop.f32.mrf.mxu0
    %2600 = vmatprep.mubr.f32.mxu0 0.0
    %2601 = vmatmul.mubr.f32.gmra.mxu0 %v2480
    %v2602 = vpop.f32.mrf.mxu0
    %v2603 = vadd.f32 %v2459, %v2602
    %v2604 = vpop.f32.mrf.mxu0
    %2605 = vmatprep.mubr.f32.mxu0 0.0
    %2606 = vmatmul.mubr.f32.gmra.mxu0 %v2483
    %v2607 = vpop.f32.mrf.mxu0
    %v2608 = vadd.f32 %v2459, %v2607
    %v2609 = vpop.f32.mrf.mxu0
    %2610 = vmatprep.mubr.f32.mxu0 0.0
    %2611 = vmatmul.mubr.f32.gmra.mxu0 %v2486
    %v2612 = vpop.f32.mrf.mxu0
    %v2613 = vadd.f32 %v2459, %v2612
    %v2614 = vpop.f32.mrf.mxu0
    %2615 = vmatprep.mubr.f32.mxu0 0.0
    %2616 = vmatmul.mubr.f32.gmra.mxu0 %v2489
    %v2617 = vpop.f32.mrf.mxu0
    %v2618 = vadd.f32 %v2459, %v2617
    %v2619 = vpop.f32.mrf.mxu0
    %2620 = vmatprep.mubr.f32.mxu0 0.0
    %2621 = vmatmul.mubr.f32.gmra.mxu0 %v2492
    %v2622 = vpop.f32.mrf.mxu0
    %v2623 = vadd.f32 %v2459, %v2622
    %v2624 = vpop.f32.mrf.mxu0
    %2625 = vmatprep.mubr.f32.mxu0 0.0
    %2626 = vmatmul.mubr.f32.gmra.mxu0 %v2495
    %v2627 = vpop.f32.mrf.mxu0
    %v2628 = vadd.f32 %v2459, %v2627
    %v2629 = vpop.f32.mrf.mxu0
    %2630 = vmatprep.mubr.f32.mxu0 0.0
    %2631 = vmatmul.mubr.f32.gmra.mxu0 %v2498
    %v2632 = vpop.f32.mrf.mxu0
    %v2633 = vadd.f32 %v2459, %v2632
    %v2634 = vpop.f32.mrf.mxu0
    %2635 = vmatprep.mubr.f32.mxu0 0.0
    %2636 = vmatmul.mubr.f32.gmra.mxu0 %v2501
    %v2637 = vpop.f32.mrf.mxu0
    %v2638 = vadd.f32 %v2459, %v2637
    %v2639 = vpop.f32.mrf.mxu0
    %2640 = vmatprep.mubr.f32.mxu0 0.0
    %2641 = vmatmul.mubr.f32.gmra.mxu0 %v2504
    %v2642 = vpop.f32.mrf.mxu0
    %v2643 = vadd.f32 %v2459, %v2642
    %v2644 = vpop.f32.mrf.mxu0
    %2645 = vdwg.mxu0
    %v2646 = vmax.f32 %v2573, 0.0
    %v2647 = vmax.f32 %v2578, 0.0
    %v2648 = vmax.f32 %v2583, 0.0
    %v2649 = vmax.f32 %v2588, 0.0
    %v2650 = vmax.f32 %v2593, 0.0
    %v2651 = vmax.f32 %v2598, 0.0
    %v2652 = vmax.f32 %v2603, 0.0
    %v2653 = vmax.f32 %v2608, 0.0
    %v2654 = vmax.f32 %v2613, 0.0
    %v2655 = vmax.f32 %v2618, 0.0
    %v2656 = vmax.f32 %v2623, 0.0
    %v2657 = vmax.f32 %v2628, 0.0
    %v2658 = vmax.f32 %v2633, 0.0
    %v2659 = vmax.f32 %v2638, 0.0
    %v2660 = vmax.f32 %v2643, 0.0
    %v2661 = vld [vmem:[%s11] sm:$0xff]
    %v2662 = vld [vmem:[%s11 + $0x8] sm:$0xff]
    %v2663 = vld [vmem:[%s11 + $0x10] sm:$0xff]
    %v2664 = vld [vmem:[%s11 + $0x18] sm:$0xff]
    %v2665 = vld [vmem:[#allocation2] sm:$0x1]
    %v2667 = vlaneseq
    %v2668 = vshrl.u32 %v2667, 7
    %v2669 = vsub.s32 0, %v2668
    %v2670 = vrot.slane %v2665, %v2669
    %v2673 = vsel %vm1364, %v2646, 0
    %v2676 = vsel %vm1364, %v2647, 0
    %v2679 = vsel %vm1364, %v2648, 0
    %v2682 = vsel %vm1364, %v2649, 0
    %v2685 = vsel %vm1364, %v2650, 0
    %v2688 = vsel %vm1364, %v2651, 0
    %v2691 = vsel %vm1364, %v2652, 0
    %v2694 = vsel %vm1364, %v2653, 0
    %v2697 = vsel %vm1364, %v2654, 0
    %v2700 = vsel %vm1364, %v2655, 0
    %v2703 = vsel %vm1364, %v2656, 0
    %v2706 = vsel %vm1364, %v2657, 0
    %v2709 = vsel %vm1364, %v2658, 0
    %v2712 = vsel %vm1364, %v2659, 0
    %v2715 = vsel %vm1364, %v2660, 0
    %2717 = vmatprep.subr.mxu0 0.0
    %2718 = vmatpush1.msra.mxu0 0.0
    %2719 = vmatprep.subr.mxu0 0.0
    %2720 = vmatpush1.msra.mxu0 0.0
    %2721 = vmatprep.subr.mxu0 0.0
    %2722 = vmatpush1.msra.mxu0 0.0
    %2723 = vmatprep.subr.mxu0 0.0
    %2724 = vmatpush1.msra.mxu0 0.0
    %2725 = vmatprep.subr.mxu0 0.0
    %2726 = vmatpush1.msra.mxu0 0.0
    %2727 = vmatprep.subr.mxu0 0.0
    %2728 = vmatpush1.msra.mxu0 0.0
    %2729 = vmatprep.subr.mxu0 0.0
    %2730 = vmatpush1.msra.mxu0 0.0
    %2731 = vmatprep.subr.mxu0 0.0
    %2732 = vmatpush1.msra.mxu0 0.0
    %2733 = vmatprep.subr.mxu0 0.0
    %2734 = vmatpush1.msra.mxu0 0.0
    %2735 = vmatprep.subr.mxu0 0.0
    %2736 = vmatpush1.msra.mxu0 0.0
    %2737 = vmatprep.subr.mxu0 0.0
    %2738 = vmatpush1.msra.mxu0 0.0
    %2739 = vmatprep.subr.mxu0 0.0
    %2740 = vmatpush1.msra.mxu0 0.0
    %2741 = vmatprep.subr.mxu0 0.0
    %2742 = vmatpush1.msra.mxu0 %v2664
    %2743 = vmatprep.subr.mxu0 0.0
    %2744 = vmatpush1.msra.mxu0 %v2663
    %2745 = vmatprep.subr.mxu0 0.0
    %2746 = vmatpush1.msra.mxu0 %v2662
    %2747 = vmatprep.subr.mxu0 0.0
    %2748 = vmatpush1.msra.mxu0 %v2661
    %2749 = vmatprep.subr.mxu0 0.0
    %2750 = vmatpush2.msra.mxu0 0.0
    %2751 = vmatprep.subr.mxu0 0.0
    %2752 = vmatpush2.msra.mxu0 0.0
    %2753 = vmatprep.subr.mxu0 0.0
    %2754 = vmatpush2.msra.mxu0 0.0
    %2755 = vmatprep.subr.mxu0 0.0
    %2756 = vmatpush2.msra.mxu0 0.0
    %2757 = vmatprep.subr.mxu0 0.0
    %2758 = vmatpush2.msra.mxu0 0.0
    %2759 = vmatprep.subr.mxu0 0.0
    %2760 = vmatpush2.msra.mxu0 0.0
    %2761 = vmatprep.subr.mxu0 0.0
    %2762 = vmatpush2.msra.mxu0 0.0
    %2763 = vmatprep.subr.mxu0 0.0
    %2764 = vmatpush2.msra.mxu0 0.0
    %2765 = vmatprep.subr.mxu0 0.0
    %2766 = vmatpush2.msra.mxu0 0.0
    %2767 = vmatprep.subr.mxu0 0.0
    %2768 = vmatpush2.msra.mxu0 0.0
    %2769 = vmatprep.subr.mxu0 0.0
    %2770 = vmatpush2.msra.mxu0 0.0
    %2771 = vmatprep.subr.mxu0 0.0
    %2772 = vmatpush2.msra.mxu0 0.0
    %2773 = vmatprep.subr.mxu0 0.0
    %2774 = vmatpush2.msra.mxu0 0.0
    %2775 = vmatprep.subr.mxu0 0.0
    %2776 = vmatpush2.msra.mxu0 0.0
    %2777 = vmatprep.subr.mxu0 0.0
    %2778 = vmatpush2.msra.mxu0 0.0
    %2779 = vmatprep.subr.mxu0 0.0
    %2780 = vmatpush2.msra.mxu0 0.0
    %2781 = vmatprep.mubr.f32.mxu0 0.0
    %2782 = vmatmul.mubr.f32.gmra.mxu0 %v2673
    %v2783 = vpop.f32.mrf.mxu0
    %v2784 = vadd.f32 %v2670, %v2783
    %v2785 = vpop.f32.mrf.mxu0
    %2786 = vmatprep.mubr.f32.mxu0 0.0
    %2787 = vmatmul.mubr.f32.gmra.mxu0 %v2676
    %v2788 = vpop.f32.mrf.mxu0
    %v2789 = vadd.f32 %v2670, %v2788
    %v2790 = vpop.f32.mrf.mxu0
    %2791 = vmatprep.mubr.f32.mxu0 0.0
    %2792 = vmatmul.mubr.f32.gmra.mxu0 %v2679
    %v2793 = vpop.f32.mrf.mxu0
    %v2794 = vadd.f32 %v2670, %v2793
    %v2795 = vpop.f32.mrf.mxu0
    %2796 = vmatprep.mubr.f32.mxu0 0.0
    %2797 = vmatmul.mubr.f32.gmra.mxu0 %v2682
    %v2798 = vpop.f32.mrf.mxu0
    %v2799 = vadd.f32 %v2670, %v2798
    %v2800 = vpop.f32.mrf.mxu0
    %2801 = vmatprep.mubr.f32.mxu0 0.0
    %2802 = vmatmul.mubr.f32.gmra.mxu0 %v2685
    %v2803 = vpop.f32.mrf.mxu0
    %v2804 = vadd.f32 %v2670, %v2803
    %v2805 = vpop.f32.mrf.mxu0
    %2806 = vmatprep.mubr.f32.mxu0 0.0
    %2807 = vmatmul.mubr.f32.gmra.mxu0 %v2688
    %v2808 = vpop.f32.mrf.mxu0
    %v2809 = vadd.f32 %v2670, %v2808
    %v2810 = vpop.f32.mrf.mxu0
    %2811 = vmatprep.mubr.f32.mxu0 0.0
    %2812 = vmatmul.mubr.f32.gmra.mxu0 %v2691
    %v2813 = vpop.f32.mrf.mxu0
    %v2814 = vadd.f32 %v2670, %v2813
    %v2815 = vpop.f32.mrf.mxu0
    %2816 = vmatprep.mubr.f32.mxu0 0.0
    %2817 = vmatmul.mubr.f32.gmra.mxu0 %v2694
    %v2818 = vpop.f32.mrf.mxu0
    %v2819 = vadd.f32 %v2670, %v2818
    %v2820 = vpop.f32.mrf.mxu0
    %2821 = vmatprep.mubr.f32.mxu0 0.0
    %2822 = vmatmul.mubr.f32.gmra.mxu0 %v2697
    %v2823 = vpop.f32.mrf.mxu0
    %v2824 = vadd.f32 %v2670, %v2823
    %v2825 = vpop.f32.mrf.mxu0
    %2826 = vmatprep.mubr.f32.mxu0 0.0
    %2827 = vmatmul.mubr.f32.gmra.mxu0 %v2700
    %v2828 = vpop.f32.mrf.mxu0
    %v2829 = vadd.f32 %v2670, %v2828
    %v2830 = vpop.f32.mrf.mxu0
    %2831 = vmatprep.mubr.f32.mxu0 0.0
    %2832 = vmatmul.mubr.f32.gmra.mxu0 %v2703
    %v2833 = vpop.f32.mrf.mxu0
    %v2834 = vadd.f32 %v2670, %v2833
    %v2835 = vpop.f32.mrf.mxu0
    %2836 = vmatprep.mubr.f32.mxu0 0.0
    %2837 = vmatmul.mubr.f32.gmra.mxu0 %v2706
    %v2838 = vpop.f32.mrf.mxu0
    %v2839 = vadd.f32 %v2670, %v2838
    %v2840 = vpop.f32.mrf.mxu0
    %2841 = vmatprep.mubr.f32.mxu0 0.0
    %2842 = vmatmul.mubr.f32.gmra.mxu0 %v2709
    %v2843 = vpop.f32.mrf.mxu0
    %v2844 = vadd.f32 %v2670, %v2843
    %v2845 = vpop.f32.mrf.mxu0
    %2846 = vmatprep.mubr.f32.mxu0 0.0
    %2847 = vmatmul.mubr.f32.gmra.mxu0 %v2712
    %v2848 = vpop.f32.mrf.mxu0
    %v2849 = vadd.f32 %v2670, %v2848
    %v2850 = vpop.f32.mrf.mxu0
    %2851 = vmatprep.mubr.f32.mxu0 0.0
    %2852 = vmatmul.mubr.f32.gmra.mxu0 %v2715
    %v2853 = vpop.f32.mrf.mxu0
    %v2854 = vadd.f32 %v2670, %v2853
    %v2855 = vpop.f32.mrf.mxu0
    %2856 = vdwg.mxu0
    %2857 = vst.msk [vmem:[%s15] sm:$0xff] %vm1550, %v2784
    %2858 = vst.msk [vmem:[%s15 + $0x8] sm:$0xff] %vm1550, %v2789
    %2859 = vst.msk [vmem:[%s15 + $0x10] sm:$0xff] %vm1550, %v2794
    %2860 = vst.msk [vmem:[%s15 + $0x18] sm:$0xff] %vm1550, %v2799
    %2861 = vst.msk [vmem:[%s15 + $0x20] sm:$0xff] %vm1550, %v2804
    %2862 = vst.msk [vmem:[%s15 + $0x28] sm:$0xff] %vm1550, %v2809
    %2863 = vst.msk [vmem:[%s15 + $0x30] sm:$0xff] %vm1550, %v2814
    %2864 = vst.msk [vmem:[%s15 + $0x38] sm:$0xff] %vm1550, %v2819
    %2865 = vst.msk [vmem:[%s15 + $0x40] sm:$0xff] %vm1550, %v2824
    %2866 = vst.msk [vmem:[%s15 + $0x48] sm:$0xff] %vm1550, %v2829
    %2867 = vst.msk [vmem:[%s15 + $0x50] sm:$0xff] %vm1550, %v2834
    %2868 = vst.msk [vmem:[%s15 + $0x58] sm:$0xff] %vm1550, %v2839
    %2869 = vst.msk [vmem:[%s15 + $0x60] sm:$0xff] %vm1550, %v2844
    %2870 = vst.msk [vmem:[%s15 + $0x68] sm:$0xff] %vm1550, %v2849
    %2871 = vst.msk [vmem:[%s15 + $0x70] sm:$0xff] %vm1550, %v2854
    // Predicated region
    $region58: #{tpu_custom_call.1} parent=1 // pred_check
      _
    $region59: #{tpu_custom_call.1} parent=1 // pred_check_branch
      %2873 = sbr.rel (0) target = $region61
    $region60: #{tpu_custom_call.1} parent=1 // pred_region
      _
    $region61: #{tpu_custom_call.1} parent=1 // pred_fallthru
      _
    // Predicated region
    $region62: #{tpu_custom_call.1} parent=1 // pred_check
      _
    $region63: #{tpu_custom_call.1} parent=1 // pred_check_branch
      %2875 = sbr.rel (0) target = $region65
    $region64: #{tpu_custom_call.1} parent=1 // pred_region
      _
    $region65: #{tpu_custom_call.1} parent=1 // pred_fallthru
      _
    // Predicated region
    $region66: #{tpu_custom_call.1} parent=1 // pred_check
      _
    $region67: #{tpu_custom_call.1} parent=1 // pred_check_branch
      %2877 = sbr.rel (0) target = $region69
    $region68: #{tpu_custom_call.1} parent=1 // pred_region
      _
    $region69: #{tpu_custom_call.1} parent=1 // pred_fallthru
      _
    // Predicated region
    $region70: #{tpu_custom_call.1} parent=1 // pred_check
      _
    $region71: #{tpu_custom_call.1} parent=1 // pred_check_branch
      %2879 = sbr.rel (0) target = $region73
    $region72: #{tpu_custom_call.1} parent=1 // pred_region
      _
    $region73: #{tpu_custom_call.1} parent=1 // pred_fallthru
      _
    // Predicated region
    $region74: #{tpu_custom_call.1} parent=1 // pred_check
      _
    $region75: #{tpu_custom_call.1} parent=1 // pred_check_branch
      %2881 = sbr.rel (0) target = $region77
    $region76: #{tpu_custom_call.1} parent=1 // pred_region
      _
    $region77: #{tpu_custom_call.1} parent=1 // pred_fallthru
      _
    // Predicated region
    $region78: #{tpu_custom_call.1} parent=1 // pred_check
      _
    $region79: #{tpu_custom_call.1} parent=1 // pred_check_branch
      %2883 = sbr.rel (0) target = $region81
    $region80: #{tpu_custom_call.1} parent=1 // pred_region
      _
    $region81: #{tpu_custom_call.1} parent=1 // pred_fallthru
      _
    %2884 = vsyncpa [#allocation4], 1

</llo_original>
